<compile_context>
chip_gen: v7x
topology: tpu7x:2x2x1
jax: 0.10.0
libtpu: 0.0.40
codegen_flags: <defaults>
</compile_context>

<pallas_src>
import jax
import jax.numpy as jnp
from jax.experimental import pallas as pl
from jax.experimental.pallas import tpu as pltpu


# ----------------------------- kernel helpers ------------------------------

def _softmax(x, axis):
    m = jnp.max(x, axis=axis, keepdims=True)
    e = jnp.exp(x - m)
    return e / jnp.sum(e, axis=axis, keepdims=True)


# --------------------------------- kernel ----------------------------------

def smc_tc_kernel(xc_ref, xt_ref, xw_ref,
                  w_in1, b_in1, w_in2, b_in2, w_in3, b_in3,
                  whh_ref, bhn_ref, mask_ref, pmat_ref,
                  wqkv, bqkv, wo, bo,
                  fc_w, fc_b,
                  out_ref,
                  hid_scr):
    B, S, D = xc_ref.shape
    H = whh_ref.shape[0] // 8        # hidden size per direction
    H2 = 2 * H                        # bidirectional width per RNN (= MHA embed dim)
    NG = 20 * H                       # total fused gate columns
    NS = 14 * H                       # sigmoid-slab width

    # ---- hoisted input-gate projections: one matmul per RNN over all steps --
    def in_proj(x_ref, w_ref, b_ref):
        x = jnp.maximum(x_ref[...], 0.0)                     # F.relu(BERT out)
        g = jnp.dot(x.reshape(B * S, D), w_ref[...],
                    preferred_element_type=jnp.float32) + b_ref[...]
        return g.reshape(B, S, w_ref.shape[1])

    gi1 = in_proj(xc_ref, w_in1, b_in1)   # (B,S,6H) [r | z | n], each [fwd|bwd]
    gi2 = in_proj(xt_ref, w_in2, b_in2)   # (B,S,6H)
    gi3 = in_proj(xw_ref, w_in3, b_in3)   # (B,S,8H) [i | f | o | g], each [fwd|bwd]

    # merge into the unified gate-column layout: sigmoid slab first, tanh last
    # [g1_r g2_r g1_z g2_z l_i l_f l_o | g1_n g2_n l_g], each gate = [fwd|bwd]
    gi = jnp.concatenate(
        [gi1[:, :, 0:H2], gi2[:, :, 0:H2],                      # r1, r2
         gi1[:, :, H2:2 * H2], gi2[:, :, H2:2 * H2],            # z1, z2
         gi3[:, :, 0:3 * H2],                                   # i, f, o
         gi1[:, :, 2 * H2:3 * H2], gi2[:, :, 2 * H2:3 * H2],    # n1, n2
         gi3[:, :, 3 * H2:4 * H2]], axis=-1)                    # g -> (B,S,20H)

    # Backward-direction gate columns must consume the time-reversed input:
    # reverse gi along S once (batched matmul with the reversal matrix) and
    # select the bwd columns via a precomputed 0/1 mask — one-time work.
    pb = jnp.broadcast_to(pmat_ref[...], (B, S, S))
    gi_rev = jnp.einsum('bst,btf->bsf', pb, gi,
                        preferred_element_type=jnp.float32)
    m = mask_ref[...].reshape(1, 1, NG)
    gi = gi + m * (gi_rev - gi)

    # ---- fused recurrence: ONE (B,128)x(128,320) matmul per step ------------
    whh = whh_ref[...]
    bhn = jnp.broadcast_to(bhn_ref[...], (B, 6 * H))   # GRU n-gate hidden bias
    ones2h = jnp.ones((B, H2), jnp.float32)

    hp = jnp.zeros((B, 8 * H), jnp.float32)            # [h1 | h2 | h3 | c3]
    # TODO(synk): for large S switch to lax.fori_loop(unroll>1) with gi staged
    # in VMEM scratch; the static unroll is right-sized for S=8.
    for k in range(S):
        gh = jnp.dot(hp, whh, preferred_element_type=jnp.float32)   # (B, 20H)
        gik = gi[:, k, :]
        s = jax.nn.sigmoid(gik[:, 0:NS] + gh[:, 0:NS])              # 1 EUP slab
        z1 = s[:, 2 * H2:3 * H2]
        z2 = s[:, 3 * H2:4 * H2]
        i3 = s[:, 4 * H2:5 * H2]
        f3 = s[:, 5 * H2:6 * H2]
        o3 = s[:, 6 * H2:7 * H2]
        mult = jnp.concatenate([s[:, 0:2 * H2], ones2h], axis=1)    # [r1|r2|1]
        t = jnp.tanh(gik[:, NS:NG] + mult * (gh[:, NS:NG] + bhn))   # 1 EUP slab
        n1 = t[:, 0:H2]
        n2 = t[:, H2:2 * H2]
        g3 = t[:, 2 * H2:3 * H2]
        h1 = n1 + z1 * (hp[:, 0:H2] - n1)           # GRU: (1-z)n + z h
        h2 = n2 + z2 * (hp[:, H2:2 * H2] - n2)
        c3 = f3 * hp[:, 3 * H2:4 * H2] + i3 * g3    # LSTM cell
        h3 = o3 * jnp.tanh(c3)
        hp = jnp.concatenate([h1, h2, h3, c3], axis=1)   # (B, 8H) lane-dense
        hid_scr[:, k, :] = hp                            # single 128-lane store

    # ---- undo the backward-direction time reversal ONCE, post-loop ----------
    full = hid_scr[...]                                   # (B, S, 8H)
    rev = jnp.einsum('bst,btf->bsf', pb, full,
                     preferred_element_type=jnp.float32)
    hc = jnp.concatenate([full[:, :, 0:H], rev[:, :, H:2 * H]], axis=-1)
    ht = jnp.concatenate([full[:, :, 2 * H:3 * H], rev[:, :, 3 * H:4 * H]], axis=-1)
    hw = jnp.concatenate([full[:, :, 4 * H:5 * H], rev[:, :, 5 * H:6 * H]], axis=-1)

    inv_s = 1.0 / S
    # avg_pool1d over the sequence is order-independent -> take it from `full`
    hc_ = jnp.sum(full[:, :, 0:H2], axis=1) * inv_s
    ht_ = jnp.sum(full[:, :, H2:2 * H2], axis=1) * inv_s

    # ---- AoA attention: SMC_TC.aoa_attention(hc, ht)[:, :, 0] -> (B, E) -----
    I = jnp.einsum('bse,bte->bst', hc, ht, preferred_element_type=jnp.float32)
    A = _softmax(I, axis=2)
    Bm = _softmax(I, axis=1)
    B_ = jnp.mean(Bm, axis=2)                       # avg_pool1d over last dim
    C = jnp.sum(A * B_[:, :, None], axis=1)         # A^T @ B_      -> (B, S)
    S_ = jnp.sum(C[:, :, None] * ht, axis=1)        # C^T @ ht      -> (B, E)

    # ---- single-head nn.MultiheadAttention on hw (fused QKV projection) -----
    E = H2
    x2 = hw.reshape(B * S, E)
    qkv = jnp.dot(x2, wqkv[...], preferred_element_type=jnp.float32) + bqkv[...]
    qkv = qkv.reshape(B, S, 3 * E)
    q = qkv[:, :, 0:E]
    kk = qkv[:, :, E:2 * E]
    v = qkv[:, :, 2 * E:3 * E]
    scores = jnp.einsum('bqe,bke->bqk', q, kk,
                        preferred_element_type=jnp.float32) * (E ** -0.5)
    attn = _softmax(scores, axis=-1)
    ctx = jnp.einsum('bqk,bke->bqe', attn, v, preferred_element_type=jnp.float32)
    proj = jnp.dot(ctx.reshape(B * S, E), wo[...],
                   preferred_element_type=jnp.float32) + bo[...]
    hw_ = jnp.sum(proj.reshape(B, S, E), axis=1) * inv_s

    # ---- classifier head -----------------------------------------------------
    feat = jnp.concatenate([S_, hw_, hc_, ht_], axis=1)      # (B, 8H)
    feat = jnp.maximum(feat, 0.0)                            # F.relu
    logits = jnp.dot(feat, fc_w[...],
                     preferred_element_type=jnp.float32) + fc_b[...]
    out_ref[...] = jax.nn.sigmoid(logits)                    # F.sigmoid


# ------------------------- wrapper / parameter glue --------------------------

def _gru_in_fused(p, H):
    """Dense (D, 6H) input weight, columns [r_f r_b z_f z_b n_f n_b].
    b_hh folded into the bias for r,z; the n-gate's b_hn (kept inside r*(...)
    by PyTorch) is returned separately."""
    w_ih_f, _, b_ih_f, b_hh_f, w_ih_b, _, b_ih_b, b_hh_b = p

    def wg(w, g):
        return w[g * H:(g + 1) * H, :].T

    def bg(b, g):
        return b[g * H:(g + 1) * H]

    W = jnp.concatenate([wg(w_ih_f, 0), wg(w_ih_b, 0),
                         wg(w_ih_f, 1), wg(w_ih_b, 1),
                         wg(w_ih_f, 2), wg(w_ih_b, 2)], axis=1)
    b = jnp.concatenate([bg(b_ih_f, 0) + bg(b_hh_f, 0), bg(b_ih_b, 0) + bg(b_hh_b, 0),
                         bg(b_ih_f, 1) + bg(b_hh_f, 1), bg(b_ih_b, 1) + bg(b_hh_b, 1),
                         bg(b_ih_f, 2), bg(b_ih_b, 2)])
    b_hn = jnp.concatenate([bg(b_hh_f, 2), bg(b_hh_b, 2)])
    return (W.astype(jnp.float32), b.reshape(1, -1).astype(jnp.float32),
            b_hn.astype(jnp.float32))


def _lstm_in_fused(p, H):
    """Dense (D, 8H) input weight, columns [i_f i_b f_f f_b o_f o_b g_f g_b]
    (PyTorch gate rows i=0, f=1, g=2, o=3); all b_hh folded into the bias."""
    w_ih_f, _, b_ih_f, b_hh_f, w_ih_b, _, b_ih_b, b_hh_b = p

    def wg(w, g):
        return w[g * H:(g + 1) * H, :].T

    def bg(b, g):
        return b[g * H:(g + 1) * H]

    W = jnp.concatenate([wg(w_ih_f, 0), wg(w_ih_b, 0),
                         wg(w_ih_f, 1), wg(w_ih_b, 1),
                         wg(w_ih_f, 3), wg(w_ih_b, 3),
                         wg(w_ih_f, 2), wg(w_ih_b, 2)], axis=1)
    b = jnp.concatenate([bg(b_ih_f, 0) + bg(b_hh_f, 0), bg(b_ih_b, 0) + bg(b_hh_b, 0),
                         bg(b_ih_f, 1) + bg(b_hh_f, 1), bg(b_ih_b, 1) + bg(b_hh_b, 1),
                         bg(b_ih_f, 3) + bg(b_hh_f, 3), bg(b_ih_b, 3) + bg(b_hh_b, 3),
                         bg(b_ih_f, 2) + bg(b_hh_f, 2), bg(b_ih_b, 2) + bg(b_hh_b, 2)])
    return W.astype(jnp.float32), b.reshape(1, -1).astype(jnp.float32)


def _fused_whh(g1, g2, ls, H):
    """Block-diagonal recurrent weight (8H, 20H).
    Rows = packed state [h1_f h1_b h2_f h2_b h3_f h3_b | c3 (zeros)].
    Columns (H-blocks) = [g1_r g2_r g1_z g2_z l_i l_f l_o | g1_n g2_n l_g],
    each gate [fwd|bwd]."""
    W = jnp.zeros((8 * H, 20 * H), jnp.float32)

    def hh(w, g):
        return w[g * H:(g + 1) * H, :].T     # (H, H): rows = h, cols = gate out

    def put(W, rb, cb, blk):
        return W.at[rb * H:(rb + 1) * H, cb * H:(cb + 1) * H].set(blk)

    w1f, w1b = g1[1], g1[5]
    w2f, w2b = g2[1], g2[5]
    w3f, w3b = ls[1], ls[5]
    # GRU1 (state rows 0 fwd / 1 bwd); torch gate rows r=0, z=1, n=2
    W = put(W, 0, 0, hh(w1f, 0)); W = put(W, 1, 1, hh(w1b, 0))     # r
    W = put(W, 0, 4, hh(w1f, 1)); W = put(W, 1, 5, hh(w1b, 1))     # z
    W = put(W, 0, 14, hh(w1f, 2)); W = put(W, 1, 15, hh(w1b, 2))   # n
    # GRU2 (rows 2 / 3)
    W = put(W, 2, 2, hh(w2f, 0)); W = put(W, 3, 3, hh(w2b, 0))     # r
    W = put(W, 2, 6, hh(w2f, 1)); W = put(W, 3, 7, hh(w2b, 1))     # z
    W = put(W, 2, 16, hh(w2f, 2)); W = put(W, 3, 17, hh(w2b, 2))   # n
    # LSTM (rows 4 / 5); torch gate rows i=0, f=1, g=2, o=3
    W = put(W, 4, 8, hh(w3f, 0)); W = put(W, 5, 9, hh(w3b, 0))     # i
    W = put(W, 4, 10, hh(w3f, 1)); W = put(W, 5, 11, hh(w3b, 1))   # f
    W = put(W, 4, 12, hh(w3f, 3)); W = put(W, 5, 13, hh(w3b, 3))   # o
    W = put(W, 4, 18, hh(w3f, 2)); W = put(W, 5, 19, hh(w3b, 2))   # g
    # rows 6H:8H (the packed cell-state lanes) stay zero.
    return W


def smc_tc_forward(tc, tt, tw, p):
    B, S, _ = tc.shape
    H = p['gru1'][1].shape[1]
    L = p['fc'][0].shape[0]
    E = 2 * H

    w_in1, b_in1, bhn1 = _gru_in_fused(p['gru1'], H)
    w_in2, b_in2, bhn2 = _gru_in_fused(p['gru2'], H)
    w_in3, b_in3 = _lstm_in_fused(p['lstm'], H)
    w_hh = _fused_whh(p['gru1'], p['gru2'], p['lstm'], H)
    b_hn = jnp.concatenate([bhn1, bhn2,
                            jnp.zeros((E,), jnp.float32)]).reshape(1, 6 * H)
    # 0/1 mask over the 20H fused gate columns: every odd H-block is a bwd gate
    bwd_mask = ((jnp.arange(20 * H) // H) % 2).astype(jnp.float32).reshape(1, 20 * H)
    # time-reversal matrix: pmat[s, t] = 1 iff t == S-1-s
    pmat = jnp.flip(jnp.eye(S, dtype=jnp.float32), axis=0)

    wqkv = p['mha'][0].T                      # (E, 3E)
    bqkv = p['mha'][1].reshape(1, 3 * E)
    wo = p['mha'][2].T                        # (E, E)
    bo = p['mha'][3].reshape(1, E)
    fc_w = p['fc'][0].T                       # (8H, num_labels)
    fc_b = p['fc'][1].reshape(1, L)

    args = [tc, tt, tw,
            w_in1, b_in1, w_in2, b_in2, w_in3, b_in3,
            w_hh, b_hn, bwd_mask, pmat,
            wqkv, bqkv, wo, bo, fc_w, fc_b]

    # Everything is KiB-scale -> whole arrays resident in VMEM, single program.
    # TODO(synk): at production B/S add a batch grid + BlockSpec pipelining and
    # bf16 weight casts (v7x 64 MiB VMEM / v6e MXU throughput).
    return pl.pallas_call(
        smc_tc_kernel,
        out_shape=jax.ShapeDtypeStruct((B, L), jnp.float32),
        in_specs=[pl.BlockSpec(memory_space=pltpu.MemorySpace.VMEM)] * len(args),
        out_specs=pl.BlockSpec(memory_space=pltpu.MemorySpace.VMEM),
        scratch_shapes=[pltpu.VMEM((B, S, 8 * H), jnp.float32)],
    )(*args)


def make_pytorch_params(key, bert_h, hidden, num_labels):
    """Deterministic synthetic parameters in PyTorch layouts."""
    E = 2 * hidden
    keys = iter(jax.random.split(key, 64))

    def w(shape, scale=0.1):
        return (scale * jax.random.normal(next(keys), shape)).astype(jnp.float32)

    def rnn(gates):
        G = gates * hidden
        # fwd: (w_ih, w_hh, b_ih, b_hh), then bwd: same
        return [w((G, bert_h)), w((G, hidden)), w((G,)), w((G,)),
                w((G, bert_h)), w((G, hidden)), w((G,)), w((G,))]

    return {
        'gru1': rnn(3),
        'gru2': rnn(3),
        'lstm': rnn(4),
        # MultiheadAttention (num_heads=1): in_proj_weight (3E,E), in_proj_bias,
        # out_proj.weight (E,E), out_proj.bias
        'mha': [w((3 * E, E)), w((3 * E,)), w((E, E)), w((E,))],
        # fc: weight (num_labels, 8H), bias (num_labels,)
        'fc': [w((num_labels, 8 * hidden)), w((num_labels,))],
    }


if __name__ == "__main__":
    B, S, bert_h, hidden, num_labels = 2, 8, 32, 16, 3
    key = jax.random.PRNGKey(0)
    k_tc, k_tt, k_tw, k_p = jax.random.split(key, 4)

    # tc/tt/tw stand in for the frozen pretrained BERT's last_hidden_state.
    tc = jax.random.normal(k_tc, (B, S, bert_h), jnp.float32)
    tt = jax.random.normal(k_tt, (B, S, bert_h), jnp.float32)
    tw = jax.random.normal(k_tw, (B, S, bert_h), jnp.float32)
    params = make_pytorch_params(k_p, bert_h, hidden, num_labels)

    out = smc_tc_forward(tc, tt, tw, params)
    jax.block_until_ready(out)
    assert out.shape == (B, num_labels)
    assert bool(jnp.all(jnp.isfinite(out)))
    print("KERNEL_OK")
</pallas_src>

<mosaic_0001>
module attributes {stable_mosaic.version = 11 : i64} {
  func.func @smc_tc_kernel(%arg0: memref<2x8x32xf32, #tpu.memory_space<vmem>>, %arg1: memref<2x8x32xf32, #tpu.memory_space<vmem>>, %arg2: memref<2x8x32xf32, #tpu.memory_space<vmem>>, %arg3: memref<32x96xf32, #tpu.memory_space<vmem>>, %arg4: memref<1x96xf32, #tpu.memory_space<vmem>>, %arg5: memref<32x96xf32, #tpu.memory_space<vmem>>, %arg6: memref<1x96xf32, #tpu.memory_space<vmem>>, %arg7: memref<32x128xf32, #tpu.memory_space<vmem>>, %arg8: memref<1x128xf32, #tpu.memory_space<vmem>>, %arg9: memref<128x320xf32, #tpu.memory_space<vmem>>, %arg10: memref<1x96xf32, #tpu.memory_space<vmem>>, %arg11: memref<1x320xf32, #tpu.memory_space<vmem>>, %arg12: memref<8x8xf32, #tpu.memory_space<vmem>>, %arg13: memref<32x96xf32, #tpu.memory_space<vmem>>, %arg14: memref<1x96xf32, #tpu.memory_space<vmem>>, %arg15: memref<32x32xf32, #tpu.memory_space<vmem>>, %arg16: memref<1x32xf32, #tpu.memory_space<vmem>>, %arg17: memref<128x3xf32, #tpu.memory_space<vmem>>, %arg18: memref<1x3xf32, #tpu.memory_space<vmem>>, %arg19: memref<2x3xf32, #tpu.memory_space<vmem>>, %arg20: memref<2x8x128xf32, #tpu.memory_space<vmem>>) attributes {dimension_semantics = [], scalar_prefetch = 0 : i64, scratch_operands = 1 : i64, tpu.core_type = #tpu.core_type<tc>} {
    %c0 = arith.constant 0 : index
    %c0_0 = arith.constant 0 : index
    %c0_1 = arith.constant 0 : index
    %0 = vector.load %arg0[%c0, %c0_0, %c0_1] : memref<2x8x32xf32, #tpu.memory_space<vmem>>, vector<2x8x32xf32>
    %cst = arith.constant 0.000000e+00 : f32
    %1 = vector.broadcast %cst : f32 to vector<2x8x32xf32>
    %2 = arith.maximumf %0, %1 : vector<2x8x32xf32>
    %3 = vector.shape_cast %2 : vector<2x8x32xf32> to vector<16x32xf32>
    %c0_2 = arith.constant 0 : index
    %c0_3 = arith.constant 0 : index
    %4 = vector.load %arg3[%c0_2, %c0_3] : memref<32x96xf32, #tpu.memory_space<vmem>>, vector<32x96xf32>
    %cst_4 = arith.constant dense<0.000000e+00> : vector<16x96xf32>
    %5 = tpu.matmul %3, %4, %cst_4 {dimension_numbers = #tpu.dot_dimension_numbers<[1], [0], [0], [1], [0, 0, 1, 1], [], []>} : vector<16x32xf32>, vector<32x96xf32>, vector<16x96xf32> -> vector<16x96xf32>
    %c0_5 = arith.constant 0 : index
    %c0_6 = arith.constant 0 : index
    %6 = vector.load %arg4[%c0_5, %c0_6] : memref<1x96xf32, #tpu.memory_space<vmem>>, vector<1x96xf32>
    %7 = vector.broadcast %6 : vector<1x96xf32> to vector<16x96xf32>
    %8 = arith.addf %5, %7 : vector<16x96xf32>
    %9 = vector.shape_cast %8 : vector<16x96xf32> to vector<2x8x96xf32>
    %c0_7 = arith.constant 0 : index
    %c0_8 = arith.constant 0 : index
    %c0_9 = arith.constant 0 : index
    %10 = vector.load %arg1[%c0_7, %c0_8, %c0_9] : memref<2x8x32xf32, #tpu.memory_space<vmem>>, vector<2x8x32xf32>
    %cst_10 = arith.constant 0.000000e+00 : f32
    %11 = vector.broadcast %cst_10 : f32 to vector<2x8x32xf32>
    %12 = arith.maximumf %10, %11 : vector<2x8x32xf32>
    %13 = vector.shape_cast %12 : vector<2x8x32xf32> to vector<16x32xf32>
    %c0_11 = arith.constant 0 : index
    %c0_12 = arith.constant 0 : index
    %14 = vector.load %arg5[%c0_11, %c0_12] : memref<32x96xf32, #tpu.memory_space<vmem>>, vector<32x96xf32>
    %cst_13 = arith.constant dense<0.000000e+00> : vector<16x96xf32>
    %15 = tpu.matmul %13, %14, %cst_13 {dimension_numbers = #tpu.dot_dimension_numbers<[1], [0], [0], [1], [0, 0, 1, 1], [], []>} : vector<16x32xf32>, vector<32x96xf32>, vector<16x96xf32> -> vector<16x96xf32>
    %c0_14 = arith.constant 0 : index
    %c0_15 = arith.constant 0 : index
    %16 = vector.load %arg6[%c0_14, %c0_15] : memref<1x96xf32, #tpu.memory_space<vmem>>, vector<1x96xf32>
    %17 = vector.broadcast %16 : vector<1x96xf32> to vector<16x96xf32>
    %18 = arith.addf %15, %17 : vector<16x96xf32>
    %19 = vector.shape_cast %18 : vector<16x96xf32> to vector<2x8x96xf32>
    %c0_16 = arith.constant 0 : index
    %c0_17 = arith.constant 0 : index
    %c0_18 = arith.constant 0 : index
    %20 = vector.load %arg2[%c0_16, %c0_17, %c0_18] : memref<2x8x32xf32, #tpu.memory_space<vmem>>, vector<2x8x32xf32>
    %cst_19 = arith.constant 0.000000e+00 : f32
    %21 = vector.broadcast %cst_19 : f32 to vector<2x8x32xf32>
    %22 = arith.maximumf %20, %21 : vector<2x8x32xf32>
    %23 = vector.shape_cast %22 : vector<2x8x32xf32> to vector<16x32xf32>
    %c0_20 = arith.constant 0 : index
    %c0_21 = arith.constant 0 : index
    %24 = vector.load %arg7[%c0_20, %c0_21] : memref<32x128xf32, #tpu.memory_space<vmem>>, vector<32x128xf32>
    %cst_22 = arith.constant dense<0.000000e+00> : vector<16x128xf32>
    %25 = tpu.matmul %23, %24, %cst_22 {dimension_numbers = #tpu.dot_dimension_numbers<[1], [0], [0], [1], [0, 0, 1, 1], [], []>} : vector<16x32xf32>, vector<32x128xf32>, vector<16x128xf32> -> vector<16x128xf32>
    %c0_23 = arith.constant 0 : index
    %c0_24 = arith.constant 0 : index
    %26 = vector.load %arg8[%c0_23, %c0_24] : memref<1x128xf32, #tpu.memory_space<vmem>>, vector<1x128xf32>
    %27 = vector.broadcast %26 : vector<1x128xf32> to vector<16x128xf32>
    %28 = arith.addf %25, %27 : vector<16x128xf32>
    %29 = vector.shape_cast %28 : vector<16x128xf32> to vector<2x8x128xf32>
    %30 = vector.extract_strided_slice %9 {offsets = [0, 0, 0], sizes = [2, 8, 32], strides = [1, 1, 1]} : vector<2x8x96xf32> to vector<2x8x32xf32>
    %31 = vector.extract_strided_slice %19 {offsets = [0, 0, 0], sizes = [2, 8, 32], strides = [1, 1, 1]} : vector<2x8x96xf32> to vector<2x8x32xf32>
    %32 = vector.extract_strided_slice %9 {offsets = [0, 0, 32], sizes = [2, 8, 32], strides = [1, 1, 1]} : vector<2x8x96xf32> to vector<2x8x32xf32>
    %33 = vector.extract_strided_slice %19 {offsets = [0, 0, 32], sizes = [2, 8, 32], strides = [1, 1, 1]} : vector<2x8x96xf32> to vector<2x8x32xf32>
    %34 = vector.extract_strided_slice %29 {offsets = [0, 0, 0], sizes = [2, 8, 96], strides = [1, 1, 1]} : vector<2x8x128xf32> to vector<2x8x96xf32>
    %35 = vector.extract_strided_slice %9 {offsets = [0, 0, 64], sizes = [2, 8, 32], strides = [1, 1, 1]} : vector<2x8x96xf32> to vector<2x8x32xf32>
    %36 = vector.extract_strided_slice %19 {offsets = [0, 0, 64], sizes = [2, 8, 32], strides = [1, 1, 1]} : vector<2x8x96xf32> to vector<2x8x32xf32>
    %37 = vector.extract_strided_slice %29 {offsets = [0, 0, 96], sizes = [2, 8, 32], strides = [1, 1, 1]} : vector<2x8x128xf32> to vector<2x8x32xf32>
    %38 = tpu.concatenate %30, %31, %32, %33, %34, %35, %36, %37 in 2 : vector<2x8x32xf32>, vector<2x8x32xf32>, vector<2x8x32xf32>, vector<2x8x32xf32>, vector<2x8x96xf32>, vector<2x8x32xf32>, vector<2x8x32xf32>, vector<2x8x32xf32> -> vector<2x8x320xf32>
    %c0_25 = arith.constant 0 : index
    %c0_26 = arith.constant 0 : index
    %39 = vector.load %arg12[%c0_25, %c0_26] : memref<8x8xf32, #tpu.memory_space<vmem>>, vector<8x8xf32>
    %40 = vector.shape_cast %39 : vector<8x8xf32> to vector<1x8x8xf32>
    %41 = vector.broadcast %40 : vector<1x8x8xf32> to vector<2x8x8xf32>
    "tpu.trace_start"() <{level = 10 : i32, message = "bst,btf->bsf"}> : () -> ()
    %cst_27 = arith.constant dense<0.000000e+00> : vector<2x8x320xf32>
    %42 = tpu.matmul %41, %38, %cst_27 {dimension_numbers = #tpu.dot_dimension_numbers<[2], [1], [1], [2], [0, 0, 0, 1, 1, 2], [0], [0]>} : vector<2x8x8xf32>, vector<2x8x320xf32>, vector<2x8x320xf32> -> vector<2x8x320xf32>
    "tpu.trace_stop"() : () -> ()
    %c0_28 = arith.constant 0 : index
    %c0_29 = arith.constant 0 : index
    %43 = vector.load %arg11[%c0_28, %c0_29] : memref<1x320xf32, #tpu.memory_space<vmem>>, vector<1x320xf32>
    %44 = vector.shape_cast %43 : vector<1x320xf32> to vector<1x1x320xf32>
    %45 = arith.subf %42, %38 : vector<2x8x320xf32>
    %46 = vector.broadcast %44 : vector<1x1x320xf32> to vector<2x8x320xf32>
    %47 = arith.mulf %46, %45 : vector<2x8x320xf32>
    %48 = arith.addf %38, %47 : vector<2x8x320xf32>
    %c0_30 = arith.constant 0 : index
    %c0_31 = arith.constant 0 : index
    %49 = vector.load %arg9[%c0_30, %c0_31] : memref<128x320xf32, #tpu.memory_space<vmem>>, vector<128x320xf32>
    %c0_32 = arith.constant 0 : index
    %c0_33 = arith.constant 0 : index
    %50 = vector.load %arg10[%c0_32, %c0_33] : memref<1x96xf32, #tpu.memory_space<vmem>>, vector<1x96xf32>
    %51 = vector.shape_cast %50 : vector<1x96xf32> to vector<1x96xf32>
    %52 = vector.broadcast %51 : vector<1x96xf32> to vector<2x96xf32>
    %cst_34 = arith.constant 1.000000e+00 : f32
    %53 = vector.broadcast %cst_34 : f32 to vector<2x32xf32>
    %cst_35 = arith.constant 0.000000e+00 : f32
    %54 = vector.broadcast %cst_35 : f32 to vector<2x128xf32>
    %cst_36 = arith.constant dense<0.000000e+00> : vector<2x320xf32>
    %55 = tpu.matmul %54, %49, %cst_36 {dimension_numbers = #tpu.dot_dimension_numbers<[1], [0], [0], [1], [0, 0, 1, 1], [], []>} : vector<2x128xf32>, vector<128x320xf32>, vector<2x320xf32> -> vector<2x320xf32>
    %56 = vector.extract_strided_slice %48 {offsets = [0, 0, 0], sizes = [2, 1, 320], strides = [1, 1, 1]} : vector<2x8x320xf32> to vector<2x1x320xf32>
    %57 = vector.shape_cast %56 : vector<2x1x320xf32> to vector<2x320xf32>
    %58 = vector.extract_strided_slice %57 {offsets = [0, 0], sizes = [2, 224], strides = [1, 1]} : vector<2x320xf32> to vector<2x224xf32>
    %59 = vector.extract_strided_slice %55 {offsets = [0, 0], sizes = [2, 224], strides = [1, 1]} : vector<2x320xf32> to vector<2x224xf32>
    %60 = arith.addf %58, %59 : vector<2x224xf32>
    %61 = arith.negf %60 : vector<2x224xf32>
    %62 = math.exp %61 : vector<2x224xf32>
    %cst_37 = arith.constant 1.000000e+00 : f32
    %63 = vector.broadcast %cst_37 : f32 to vector<2x224xf32>
    %64 = arith.addf %63, %62 : vector<2x224xf32>
    %65 = arith.divf %63, %64 : vector<2x224xf32>
    %66 = vector.extract_strided_slice %65 {offsets = [0, 64], sizes = [2, 32], strides = [1, 1]} : vector<2x224xf32> to vector<2x32xf32>
    %67 = vector.extract_strided_slice %65 {offsets = [0, 96], sizes = [2, 32], strides = [1, 1]} : vector<2x224xf32> to vector<2x32xf32>
    %68 = vector.extract_strided_slice %65 {offsets = [0, 128], sizes = [2, 32], strides = [1, 1]} : vector<2x224xf32> to vector<2x32xf32>
    %69 = vector.extract_strided_slice %65 {offsets = [0, 160], sizes = [2, 32], strides = [1, 1]} : vector<2x224xf32> to vector<2x32xf32>
    %70 = vector.extract_strided_slice %65 {offsets = [0, 192], sizes = [2, 32], strides = [1, 1]} : vector<2x224xf32> to vector<2x32xf32>
    %71 = vector.extract_strided_slice %65 {offsets = [0, 0], sizes = [2, 64], strides = [1, 1]} : vector<2x224xf32> to vector<2x64xf32>
    %72 = tpu.concatenate %71, %53 in 1 : vector<2x64xf32>, vector<2x32xf32> -> vector<2x96xf32>
    %73 = vector.extract_strided_slice %57 {offsets = [0, 224], sizes = [2, 96], strides = [1, 1]} : vector<2x320xf32> to vector<2x96xf32>
    %74 = vector.extract_strided_slice %55 {offsets = [0, 224], sizes = [2, 96], strides = [1, 1]} : vector<2x320xf32> to vector<2x96xf32>
    %75 = arith.addf %74, %52 : vector<2x96xf32>
    %76 = arith.mulf %72, %75 : vector<2x96xf32>
    %77 = arith.addf %73, %76 : vector<2x96xf32>
    %78 = math.tanh %77 : vector<2x96xf32>
    %79 = vector.extract_strided_slice %78 {offsets = [0, 0], sizes = [2, 32], strides = [1, 1]} : vector<2x96xf32> to vector<2x32xf32>
    %80 = vector.extract_strided_slice %78 {offsets = [0, 32], sizes = [2, 32], strides = [1, 1]} : vector<2x96xf32> to vector<2x32xf32>
    %81 = vector.extract_strided_slice %78 {offsets = [0, 64], sizes = [2, 32], strides = [1, 1]} : vector<2x96xf32> to vector<2x32xf32>
    %82 = vector.extract_strided_slice %54 {offsets = [0, 0], sizes = [2, 32], strides = [1, 1]} : vector<2x128xf32> to vector<2x32xf32>
    %83 = arith.subf %82, %79 : vector<2x32xf32>
    %84 = arith.mulf %66, %83 : vector<2x32xf32>
    %85 = arith.addf %79, %84 : vector<2x32xf32>
    %86 = vector.extract_strided_slice %54 {offsets = [0, 32], sizes = [2, 32], strides = [1, 1]} : vector<2x128xf32> to vector<2x32xf32>
    %87 = arith.subf %86, %80 : vector<2x32xf32>
    %88 = arith.mulf %67, %87 : vector<2x32xf32>
    %89 = arith.addf %80, %88 : vector<2x32xf32>
    %90 = vector.extract_strided_slice %54 {offsets = [0, 96], sizes = [2, 32], strides = [1, 1]} : vector<2x128xf32> to vector<2x32xf32>
    %91 = arith.mulf %69, %90 : vector<2x32xf32>
    %92 = arith.mulf %68, %81 : vector<2x32xf32>
    %93 = arith.addf %91, %92 : vector<2x32xf32>
    %94 = math.tanh %93 : vector<2x32xf32>
    %95 = arith.mulf %70, %94 : vector<2x32xf32>
    %96 = tpu.concatenate %85, %89, %95, %93 in 1 : vector<2x32xf32>, vector<2x32xf32>, vector<2x32xf32>, vector<2x32xf32> -> vector<2x128xf32>
    %c0_38 = arith.constant 0 : index
    %c0_39 = arith.constant 0 : index
    %c0_40 = arith.constant 0 : index
    %97 = vector.load %arg20[%c0_38, %c0_39, %c0_40] : memref<2x8x128xf32, #tpu.memory_space<vmem>>, vector<2x1x128xf32>
    %98 = vector.shape_cast %97 : vector<2x1x128xf32> to vector<2x128xf32>
    %99 = vector.shape_cast %96 : vector<2x128xf32> to vector<2x1x128xf32>
    tpu.vector_store %arg20[%c0_38, %c0_39, %c0_40], %99 {strides = array<i32>} : memref<2x8x128xf32, #tpu.memory_space<vmem>>, vector<2x1x128xf32>,
    %cst_41 = arith.constant dense<0.000000e+00> : vector<2x320xf32>
    %100 = tpu.matmul %96, %49, %cst_41 {dimension_numbers = #tpu.dot_dimension_numbers<[1], [0], [0], [1], [0, 0, 1, 1], [], []>} : vector<2x128xf32>, vector<128x320xf32>, vector<2x320xf32> -> vector<2x320xf32>
    %101 = vector.extract_strided_slice %48 {offsets = [0, 1, 0], sizes = [2, 1, 320], strides = [1, 1, 1]} : vector<2x8x320xf32> to vector<2x1x320xf32>
    %102 = vector.shape_cast %101 : vector<2x1x320xf32> to vector<2x320xf32>
    %103 = vector.extract_strided_slice %102 {offsets = [0, 0], sizes = [2, 224], strides = [1, 1]} : vector<2x320xf32> to vector<2x224xf32>
    %104 = vector.extract_strided_slice %100 {offsets = [0, 0], sizes = [2, 224], strides = [1, 1]} : vector<2x320xf32> to vector<2x224xf32>
    %105 = arith.addf %103, %104 : vector<2x224xf32>
    %106 = arith.negf %105 : vector<2x224xf32>
    %107 = math.exp %106 : vector<2x224xf32>
    %cst_42 = arith.constant 1.000000e+00 : f32
    %108 = vector.broadcast %cst_42 : f32 to vector<2x224xf32>
    %109 = arith.addf %108, %107 : vector<2x224xf32>
    %110 = arith.divf %108, %109 : vector<2x224xf32>
    %111 = vector.extract_strided_slice %110 {offsets = [0, 64], sizes = [2, 32], strides = [1, 1]} : vector<2x224xf32> to vector<2x32xf32>
    %112 = vector.extract_strided_slice %110 {offsets = [0, 96], sizes = [2, 32], strides = [1, 1]} : vector<2x224xf32> to vector<2x32xf32>
    %113 = vector.extract_strided_slice %110 {offsets = [0, 128], sizes = [2, 32], strides = [1, 1]} : vector<2x224xf32> to vector<2x32xf32>
    %114 = vector.extract_strided_slice %110 {offsets = [0, 160], sizes = [2, 32], strides = [1, 1]} : vector<2x224xf32> to vector<2x32xf32>
    %115 = vector.extract_strided_slice %110 {offsets = [0, 192], sizes = [2, 32], strides = [1, 1]} : vector<2x224xf32> to vector<2x32xf32>
    %116 = vector.extract_strided_slice %110 {offsets = [0, 0], sizes = [2, 64], strides = [1, 1]} : vector<2x224xf32> to vector<2x64xf32>
    %117 = tpu.concatenate %116, %53 in 1 : vector<2x64xf32>, vector<2x32xf32> -> vector<2x96xf32>
    %118 = vector.extract_strided_slice %102 {offsets = [0, 224], sizes = [2, 96], strides = [1, 1]} : vector<2x320xf32> to vector<2x96xf32>
    %119 = vector.extract_strided_slice %100 {offsets = [0, 224], sizes = [2, 96], strides = [1, 1]} : vector<2x320xf32> to vector<2x96xf32>
    %120 = arith.addf %119, %52 : vector<2x96xf32>
    %121 = arith.mulf %117, %120 : vector<2x96xf32>
    %122 = arith.addf %118, %121 : vector<2x96xf32>
    %123 = math.tanh %122 : vector<2x96xf32>
    %124 = vector.extract_strided_slice %123 {offsets = [0, 0], sizes = [2, 32], strides = [1, 1]} : vector<2x96xf32> to vector<2x32xf32>
    %125 = vector.extract_strided_slice %123 {offsets = [0, 32], sizes = [2, 32], strides = [1, 1]} : vector<2x96xf32> to vector<2x32xf32>
    %126 = vector.extract_strided_slice %123 {offsets = [0, 64], sizes = [2, 32], strides = [1, 1]} : vector<2x96xf32> to vector<2x32xf32>
    %127 = vector.extract_strided_slice %96 {offsets = [0, 0], sizes = [2, 32], strides = [1, 1]} : vector<2x128xf32> to vector<2x32xf32>
    %128 = arith.subf %127, %124 : vector<2x32xf32>
    %129 = arith.mulf %111, %128 : vector<2x32xf32>
    %130 = arith.addf %124, %129 : vector<2x32xf32>
    %131 = vector.extract_strided_slice %96 {offsets = [0, 32], sizes = [2, 32], strides = [1, 1]} : vector<2x128xf32> to vector<2x32xf32>
    %132 = arith.subf %131, %125 : vector<2x32xf32>
    %133 = arith.mulf %112, %132 : vector<2x32xf32>
    %134 = arith.addf %125, %133 : vector<2x32xf32>
    %135 = vector.extract_strided_slice %96 {offsets = [0, 96], sizes = [2, 32], strides = [1, 1]} : vector<2x128xf32> to vector<2x32xf32>
    %136 = arith.mulf %114, %135 : vector<2x32xf32>
    %137 = arith.mulf %113, %126 : vector<2x32xf32>
    %138 = arith.addf %136, %137 : vector<2x32xf32>
    %139 = math.tanh %138 : vector<2x32xf32>
    %140 = arith.mulf %115, %139 : vector<2x32xf32>
    %141 = tpu.concatenate %130, %134, %140, %138 in 1 : vector<2x32xf32>, vector<2x32xf32>, vector<2x32xf32>, vector<2x32xf32> -> vector<2x128xf32>
    %c0_43 = arith.constant 0 : index
    %c1 = arith.constant 1 : index
    %c0_44 = arith.constant 0 : index
    %142 = vector.load %arg20[%c0_43, %c1, %c0_44] : memref<2x8x128xf32, #tpu.memory_space<vmem>>, vector<2x1x128xf32>
    %143 = vector.shape_cast %142 : vector<2x1x128xf32> to vector<2x128xf32>
    %144 = vector.shape_cast %141 : vector<2x128xf32> to vector<2x1x128xf32>
    tpu.vector_store %arg20[%c0_43, %c1, %c0_44], %144 {strides = array<i32>} : memref<2x8x128xf32, #tpu.memory_space<vmem>>, vector<2x1x128xf32>,
    %cst_45 = arith.constant dense<0.000000e+00> : vector<2x320xf32>
    %145 = tpu.matmul %141, %49, %cst_45 {dimension_numbers = #tpu.dot_dimension_numbers<[1], [0], [0], [1], [0, 0, 1, 1], [], []>} : vector<2x128xf32>, vector<128x320xf32>, vector<2x320xf32> -> vector<2x320xf32>
    %146 = vector.extract_strided_slice %48 {offsets = [0, 2, 0], sizes = [2, 1, 320], strides = [1, 1, 1]} : vector<2x8x320xf32> to vector<2x1x320xf32>
    %147 = vector.shape_cast %146 : vector<2x1x320xf32> to vector<2x320xf32>
    %148 = vector.extract_strided_slice %147 {offsets = [0, 0], sizes = [2, 224], strides = [1, 1]} : vector<2x320xf32> to vector<2x224xf32>
    %149 = vector.extract_strided_slice %145 {offsets = [0, 0], sizes = [2, 224], strides = [1, 1]} : vector<2x320xf32> to vector<2x224xf32>
    %150 = arith.addf %148, %149 : vector<2x224xf32>
    %151 = arith.negf %150 : vector<2x224xf32>
    %152 = math.exp %151 : vector<2x224xf32>
    %cst_46 = arith.constant 1.000000e+00 : f32
    %153 = vector.broadcast %cst_46 : f32 to vector<2x224xf32>
    %154 = arith.addf %153, %152 : vector<2x224xf32>
    %155 = arith.divf %153, %154 : vector<2x224xf32>
    %156 = vector.extract_strided_slice %155 {offsets = [0, 64], sizes = [2, 32], strides = [1, 1]} : vector<2x224xf32> to vector<2x32xf32>
    %157 = vector.extract_strided_slice %155 {offsets = [0, 96], sizes = [2, 32], strides = [1, 1]} : vector<2x224xf32> to vector<2x32xf32>
    %158 = vector.extract_strided_slice %155 {offsets = [0, 128], sizes = [2, 32], strides = [1, 1]} : vector<2x224xf32> to vector<2x32xf32>
    %159 = vector.extract_strided_slice %155 {offsets = [0, 160], sizes = [2, 32], strides = [1, 1]} : vector<2x224xf32> to vector<2x32xf32>
    %160 = vector.extract_strided_slice %155 {offsets = [0, 192], sizes = [2, 32], strides = [1, 1]} : vector<2x224xf32> to vector<2x32xf32>
    %161 = vector.extract_strided_slice %155 {offsets = [0, 0], sizes = [2, 64], strides = [1, 1]} : vector<2x224xf32> to vector<2x64xf32>
    %162 = tpu.concatenate %161, %53 in 1 : vector<2x64xf32>, vector<2x32xf32> -> vector<2x96xf32>
    %163 = vector.extract_strided_slice %147 {offsets = [0, 224], sizes = [2, 96], strides = [1, 1]} : vector<2x320xf32> to vector<2x96xf32>
    %164 = vector.extract_strided_slice %145 {offsets = [0, 224], sizes = [2, 96], strides = [1, 1]} : vector<2x320xf32> to vector<2x96xf32>
    %165 = arith.addf %164, %52 : vector<2x96xf32>
    %166 = arith.mulf %162, %165 : vector<2x96xf32>
    %167 = arith.addf %163, %166 : vector<2x96xf32>
    %168 = math.tanh %167 : vector<2x96xf32>
    %169 = vector.extract_strided_slice %168 {offsets = [0, 0], sizes = [2, 32], strides = [1, 1]} : vector<2x96xf32> to vector<2x32xf32>
    %170 = vector.extract_strided_slice %168 {offsets = [0, 32], sizes = [2, 32], strides = [1, 1]} : vector<2x96xf32> to vector<2x32xf32>
    %171 = vector.extract_strided_slice %168 {offsets = [0, 64], sizes = [2, 32], strides = [1, 1]} : vector<2x96xf32> to vector<2x32xf32>
    %172 = vector.extract_strided_slice %141 {offsets = [0, 0], sizes = [2, 32], strides = [1, 1]} : vector<2x128xf32> to vector<2x32xf32>
    %173 = arith.subf %172, %169 : vector<2x32xf32>
    %174 = arith.mulf %156, %173 : vector<2x32xf32>
    %175 = arith.addf %169, %174 : vector<2x32xf32>
    %176 = vector.extract_strided_slice %141 {offsets = [0, 32], sizes = [2, 32], strides = [1, 1]} : vector<2x128xf32> to vector<2x32xf32>
    %177 = arith.subf %176, %170 : vector<2x32xf32>
    %178 = arith.mulf %157, %177 : vector<2x32xf32>
    %179 = arith.addf %170, %178 : vector<2x32xf32>
    %180 = vector.extract_strided_slice %141 {offsets = [0, 96], sizes = [2, 32], strides = [1, 1]} : vector<2x128xf32> to vector<2x32xf32>
    %181 = arith.mulf %159, %180 : vector<2x32xf32>
    %182 = arith.mulf %158, %171 : vector<2x32xf32>
    %183 = arith.addf %181, %182 : vector<2x32xf32>
    %184 = math.tanh %183 : vector<2x32xf32>
    %185 = arith.mulf %160, %184 : vector<2x32xf32>
    %186 = tpu.concatenate %175, %179, %185, %183 in 1 : vector<2x32xf32>, vector<2x32xf32>, vector<2x32xf32>, vector<2x32xf32> -> vector<2x128xf32>
    %c0_47 = arith.constant 0 : index
    %c2 = arith.constant 2 : index
    %c0_48 = arith.constant 0 : index
    %187 = vector.load %arg20[%c0_47, %c2, %c0_48] : memref<2x8x128xf32, #tpu.memory_space<vmem>>, vector<2x1x128xf32>
    %188 = vector.shape_cast %187 : vector<2x1x128xf32> to vector<2x128xf32>
    %189 = vector.shape_cast %186 : vector<2x128xf32> to vector<2x1x128xf32>
    tpu.vector_store %arg20[%c0_47, %c2, %c0_48], %189 {strides = array<i32>} : memref<2x8x128xf32, #tpu.memory_space<vmem>>, vector<2x1x128xf32>,
    %cst_49 = arith.constant dense<0.000000e+00> : vector<2x320xf32>
    %190 = tpu.matmul %186, %49, %cst_49 {dimension_numbers = #tpu.dot_dimension_numbers<[1], [0], [0], [1], [0, 0, 1, 1], [], []>} : vector<2x128xf32>, vector<128x320xf32>, vector<2x320xf32> -> vector<2x320xf32>
    %191 = vector.extract_strided_slice %48 {offsets = [0, 3, 0], sizes = [2, 1, 320], strides = [1, 1, 1]} : vector<2x8x320xf32> to vector<2x1x320xf32>
    %192 = vector.shape_cast %191 : vector<2x1x320xf32> to vector<2x320xf32>
    %193 = vector.extract_strided_slice %192 {offsets = [0, 0], sizes = [2, 224], strides = [1, 1]} : vector<2x320xf32> to vector<2x224xf32>
    %194 = vector.extract_strided_slice %190 {offsets = [0, 0], sizes = [2, 224], strides = [1, 1]} : vector<2x320xf32> to vector<2x224xf32>
    %195 = arith.addf %193, %194 : vector<2x224xf32>
    %196 = arith.negf %195 : vector<2x224xf32>
    %197 = math.exp %196 : vector<2x224xf32>
    %cst_50 = arith.constant 1.000000e+00 : f32
    %198 = vector.broadcast %cst_50 : f32 to vector<2x224xf32>
    %199 = arith.addf %198, %197 : vector<2x224xf32>
    %200 = arith.divf %198, %199 : vector<2x224xf32>
    %201 = vector.extract_strided_slice %200 {offsets = [0, 64], sizes = [2, 32], strides = [1, 1]} : vector<2x224xf32> to vector<2x32xf32>
    %202 = vector.extract_strided_slice %200 {offsets = [0, 96], sizes = [2, 32], strides = [1, 1]} : vector<2x224xf32> to vector<2x32xf32>
    %203 = vector.extract_strided_slice %200 {offsets = [0, 128], sizes = [2, 32], strides = [1, 1]} : vector<2x224xf32> to vector<2x32xf32>
    %204 = vector.extract_strided_slice %200 {offsets = [0, 160], sizes = [2, 32], strides = [1, 1]} : vector<2x224xf32> to vector<2x32xf32>
    %205 = vector.extract_strided_slice %200 {offsets = [0, 192], sizes = [2, 32], strides = [1, 1]} : vector<2x224xf32> to vector<2x32xf32>
    %206 = vector.extract_strided_slice %200 {offsets = [0, 0], sizes = [2, 64], strides = [1, 1]} : vector<2x224xf32> to vector<2x64xf32>
    %207 = tpu.concatenate %206, %53 in 1 : vector<2x64xf32>, vector<2x32xf32> -> vector<2x96xf32>
    %208 = vector.extract_strided_slice %192 {offsets = [0, 224], sizes = [2, 96], strides = [1, 1]} : vector<2x320xf32> to vector<2x96xf32>
    %209 = vector.extract_strided_slice %190 {offsets = [0, 224], sizes = [2, 96], strides = [1, 1]} : vector<2x320xf32> to vector<2x96xf32>
    %210 = arith.addf %209, %52 : vector<2x96xf32>
    %211 = arith.mulf %207, %210 : vector<2x96xf32>
    %212 = arith.addf %208, %211 : vector<2x96xf32>
    %213 = math.tanh %212 : vector<2x96xf32>
    %214 = vector.extract_strided_slice %213 {offsets = [0, 0], sizes = [2, 32], strides = [1, 1]} : vector<2x96xf32> to vector<2x32xf32>
    %215 = vector.extract_strided_slice %213 {offsets = [0, 32], sizes = [2, 32], strides = [1, 1]} : vector<2x96xf32> to vector<2x32xf32>
    %216 = vector.extract_strided_slice %213 {offsets = [0, 64], sizes = [2, 32], strides = [1, 1]} : vector<2x96xf32> to vector<2x32xf32>
    %217 = vector.extract_strided_slice %186 {offsets = [0, 0], sizes = [2, 32], strides = [1, 1]} : vector<2x128xf32> to vector<2x32xf32>
    %218 = arith.subf %217, %214 : vector<2x32xf32>
    %219 = arith.mulf %201, %218 : vector<2x32xf32>
    %220 = arith.addf %214, %219 : vector<2x32xf32>
    %221 = vector.extract_strided_slice %186 {offsets = [0, 32], sizes = [2, 32], strides = [1, 1]} : vector<2x128xf32> to vector<2x32xf32>
    %222 = arith.subf %221, %215 : vector<2x32xf32>
    %223 = arith.mulf %202, %222 : vector<2x32xf32>
    %224 = arith.addf %215, %223 : vector<2x32xf32>
    %225 = vector.extract_strided_slice %186 {offsets = [0, 96], sizes = [2, 32], strides = [1, 1]} : vector<2x128xf32> to vector<2x32xf32>
    %226 = arith.mulf %204, %225 : vector<2x32xf32>
    %227 = arith.mulf %203, %216 : vector<2x32xf32>
    %228 = arith.addf %226, %227 : vector<2x32xf32>
    %229 = math.tanh %228 : vector<2x32xf32>
    %230 = arith.mulf %205, %229 : vector<2x32xf32>
    %231 = tpu.concatenate %220, %224, %230, %228 in 1 : vector<2x32xf32>, vector<2x32xf32>, vector<2x32xf32>, vector<2x32xf32> -> vector<2x128xf32>
    %c0_51 = arith.constant 0 : index
    %c3 = arith.constant 3 : index
    %c0_52 = arith.constant 0 : index
    %232 = vector.load %arg20[%c0_51, %c3, %c0_52] : memref<2x8x128xf32, #tpu.memory_space<vmem>>, vector<2x1x128xf32>
    %233 = vector.shape_cast %232 : vector<2x1x128xf32> to vector<2x128xf32>
    %234 = vector.shape_cast %231 : vector<2x128xf32> to vector<2x1x128xf32>
    tpu.vector_store %arg20[%c0_51, %c3, %c0_52], %234 {strides = array<i32>} : memref<2x8x128xf32, #tpu.memory_space<vmem>>, vector<2x1x128xf32>,
    %cst_53 = arith.constant dense<0.000000e+00> : vector<2x320xf32>
    %235 = tpu.matmul %231, %49, %cst_53 {dimension_numbers = #tpu.dot_dimension_numbers<[1], [0], [0], [1], [0, 0, 1, 1], [], []>} : vector<2x128xf32>, vector<128x320xf32>, vector<2x320xf32> -> vector<2x320xf32>
    %236 = vector.extract_strided_slice %48 {offsets = [0, 4, 0], sizes = [2, 1, 320], strides = [1, 1, 1]} : vector<2x8x320xf32> to vector<2x1x320xf32>
    %237 = vector.shape_cast %236 : vector<2x1x320xf32> to vector<2x320xf32>
    %238 = vector.extract_strided_slice %237 {offsets = [0, 0], sizes = [2, 224], strides = [1, 1]} : vector<2x320xf32> to vector<2x224xf32>
    %239 = vector.extract_strided_slice %235 {offsets = [0, 0], sizes = [2, 224], strides = [1, 1]} : vector<2x320xf32> to vector<2x224xf32>
    %240 = arith.addf %238, %239 : vector<2x224xf32>
    %241 = arith.negf %240 : vector<2x224xf32>
    %242 = math.exp %241 : vector<2x224xf32>
    %cst_54 = arith.constant 1.000000e+00 : f32
    %243 = vector.broadcast %cst_54 : f32 to vector<2x224xf32>
    %244 = arith.addf %243, %242 : vector<2x224xf32>
    %245 = arith.divf %243, %244 : vector<2x224xf32>
    %246 = vector.extract_strided_slice %245 {offsets = [0, 64], sizes = [2, 32], strides = [1, 1]} : vector<2x224xf32> to vector<2x32xf32>
    %247 = vector.extract_strided_slice %245 {offsets = [0, 96], sizes = [2, 32], strides = [1, 1]} : vector<2x224xf32> to vector<2x32xf32>
    %248 = vector.extract_strided_slice %245 {offsets = [0, 128], sizes = [2, 32], strides = [1, 1]} : vector<2x224xf32> to vector<2x32xf32>
    %249 = vector.extract_strided_slice %245 {offsets = [0, 160], sizes = [2, 32], strides = [1, 1]} : vector<2x224xf32> to vector<2x32xf32>
    %250 = vector.extract_strided_slice %245 {offsets = [0, 192], sizes = [2, 32], strides = [1, 1]} : vector<2x224xf32> to vector<2x32xf32>
    %251 = vector.extract_strided_slice %245 {offsets = [0, 0], sizes = [2, 64], strides = [1, 1]} : vector<2x224xf32> to vector<2x64xf32>
    %252 = tpu.concatenate %251, %53 in 1 : vector<2x64xf32>, vector<2x32xf32> -> vector<2x96xf32>
    %253 = vector.extract_strided_slice %237 {offsets = [0, 224], sizes = [2, 96], strides = [1, 1]} : vector<2x320xf32> to vector<2x96xf32>
    %254 = vector.extract_strided_slice %235 {offsets = [0, 224], sizes = [2, 96], strides = [1, 1]} : vector<2x320xf32> to vector<2x96xf32>
    %255 = arith.addf %254, %52 : vector<2x96xf32>
    %256 = arith.mulf %252, %255 : vector<2x96xf32>
    %257 = arith.addf %253, %256 : vector<2x96xf32>
    %258 = math.tanh %257 : vector<2x96xf32>
    %259 = vector.extract_strided_slice %258 {offsets = [0, 0], sizes = [2, 32], strides = [1, 1]} : vector<2x96xf32> to vector<2x32xf32>
    %260 = vector.extract_strided_slice %258 {offsets = [0, 32], sizes = [2, 32], strides = [1, 1]} : vector<2x96xf32> to vector<2x32xf32>
    %261 = vector.extract_strided_slice %258 {offsets = [0, 64], sizes = [2, 32], strides = [1, 1]} : vector<2x96xf32> to vector<2x32xf32>
    %262 = vector.extract_strided_slice %231 {offsets = [0, 0], sizes = [2, 32], strides = [1, 1]} : vector<2x128xf32> to vector<2x32xf32>
    %263 = arith.subf %262, %259 : vector<2x32xf32>
    %264 = arith.mulf %246, %263 : vector<2x32xf32>
    %265 = arith.addf %259, %264 : vector<2x32xf32>
    %266 = vector.extract_strided_slice %231 {offsets = [0, 32], sizes = [2, 32], strides = [1, 1]} : vector<2x128xf32> to vector<2x32xf32>
    %267 = arith.subf %266, %260 : vector<2x32xf32>
    %268 = arith.mulf %247, %267 : vector<2x32xf32>
    %269 = arith.addf %260, %268 : vector<2x32xf32>
    %270 = vector.extract_strided_slice %231 {offsets = [0, 96], sizes = [2, 32], strides = [1, 1]} : vector<2x128xf32> to vector<2x32xf32>
    %271 = arith.mulf %249, %270 : vector<2x32xf32>
    %272 = arith.mulf %248, %261 : vector<2x32xf32>
    %273 = arith.addf %271, %272 : vector<2x32xf32>
    %274 = math.tanh %273 : vector<2x32xf32>
    %275 = arith.mulf %250, %274 : vector<2x32xf32>
    %276 = tpu.concatenate %265, %269, %275, %273 in 1 : vector<2x32xf32>, vector<2x32xf32>, vector<2x32xf32>, vector<2x32xf32> -> vector<2x128xf32>
    %c0_55 = arith.constant 0 : index
    %c4 = arith.constant 4 : index
    %c0_56 = arith.constant 0 : index
    %277 = vector.load %arg20[%c0_55, %c4, %c0_56] : memref<2x8x128xf32, #tpu.memory_space<vmem>>, vector<2x1x128xf32>
    %278 = vector.shape_cast %277 : vector<2x1x128xf32> to vector<2x128xf32>
    %279 = vector.shape_cast %276 : vector<2x128xf32> to vector<2x1x128xf32>
    tpu.vector_store %arg20[%c0_55, %c4, %c0_56], %279 {strides = array<i32>} : memref<2x8x128xf32, #tpu.memory_space<vmem>>, vector<2x1x128xf32>,
    %cst_57 = arith.constant dense<0.000000e+00> : vector<2x320xf32>
    %280 = tpu.matmul %276, %49, %cst_57 {dimension_numbers = #tpu.dot_dimension_numbers<[1], [0], [0], [1], [0, 0, 1, 1], [], []>} : vector<2x128xf32>, vector<128x320xf32>, vector<2x320xf32> -> vector<2x320xf32>
    %281 = vector.extract_strided_slice %48 {offsets = [0, 5, 0], sizes = [2, 1, 320], strides = [1, 1, 1]} : vector<2x8x320xf32> to vector<2x1x320xf32>
    %282 = vector.shape_cast %281 : vector<2x1x320xf32> to vector<2x320xf32>
    %283 = vector.extract_strided_slice %282 {offsets = [0, 0], sizes = [2, 224], strides = [1, 1]} : vector<2x320xf32> to vector<2x224xf32>
    %284 = vector.extract_strided_slice %280 {offsets = [0, 0], sizes = [2, 224], strides = [1, 1]} : vector<2x320xf32> to vector<2x224xf32>
    %285 = arith.addf %283, %284 : vector<2x224xf32>
    %286 = arith.negf %285 : vector<2x224xf32>
    %287 = math.exp %286 : vector<2x224xf32>
    %cst_58 = arith.constant 1.000000e+00 : f32
    %288 = vector.broadcast %cst_58 : f32 to vector<2x224xf32>
    %289 = arith.addf %288, %287 : vector<2x224xf32>
    %290 = arith.divf %288, %289 : vector<2x224xf32>
    %291 = vector.extract_strided_slice %290 {offsets = [0, 64], sizes = [2, 32], strides = [1, 1]} : vector<2x224xf32> to vector<2x32xf32>
    %292 = vector.extract_strided_slice %290 {offsets = [0, 96], sizes = [2, 32], strides = [1, 1]} : vector<2x224xf32> to vector<2x32xf32>
    %293 = vector.extract_strided_slice %290 {offsets = [0, 128], sizes = [2, 32], strides = [1, 1]} : vector<2x224xf32> to vector<2x32xf32>
    %294 = vector.extract_strided_slice %290 {offsets = [0, 160], sizes = [2, 32], strides = [1, 1]} : vector<2x224xf32> to vector<2x32xf32>
    %295 = vector.extract_strided_slice %290 {offsets = [0, 192], sizes = [2, 32], strides = [1, 1]} : vector<2x224xf32> to vector<2x32xf32>
    %296 = vector.extract_strided_slice %290 {offsets = [0, 0], sizes = [2, 64], strides = [1, 1]} : vector<2x224xf32> to vector<2x64xf32>
    %297 = tpu.concatenate %296, %53 in 1 : vector<2x64xf32>, vector<2x32xf32> -> vector<2x96xf32>
    %298 = vector.extract_strided_slice %282 {offsets = [0, 224], sizes = [2, 96], strides = [1, 1]} : vector<2x320xf32> to vector<2x96xf32>
    %299 = vector.extract_strided_slice %280 {offsets = [0, 224], sizes = [2, 96], strides = [1, 1]} : vector<2x320xf32> to vector<2x96xf32>
    %300 = arith.addf %299, %52 : vector<2x96xf32>
    %301 = arith.mulf %297, %300 : vector<2x96xf32>
    %302 = arith.addf %298, %301 : vector<2x96xf32>
    %303 = math.tanh %302 : vector<2x96xf32>
    %304 = vector.extract_strided_slice %303 {offsets = [0, 0], sizes = [2, 32], strides = [1, 1]} : vector<2x96xf32> to vector<2x32xf32>
    %305 = vector.extract_strided_slice %303 {offsets = [0, 32], sizes = [2, 32], strides = [1, 1]} : vector<2x96xf32> to vector<2x32xf32>
    %306 = vector.extract_strided_slice %303 {offsets = [0, 64], sizes = [2, 32], strides = [1, 1]} : vector<2x96xf32> to vector<2x32xf32>
    %307 = vector.extract_strided_slice %276 {offsets = [0, 0], sizes = [2, 32], strides = [1, 1]} : vector<2x128xf32> to vector<2x32xf32>
    %308 = arith.subf %307, %304 : vector<2x32xf32>
    %309 = arith.mulf %291, %308 : vector<2x32xf32>
    %310 = arith.addf %304, %309 : vector<2x32xf32>
    %311 = vector.extract_strided_slice %276 {offsets = [0, 32], sizes = [2, 32], strides = [1, 1]} : vector<2x128xf32> to vector<2x32xf32>
    %312 = arith.subf %311, %305 : vector<2x32xf32>
    %313 = arith.mulf %292, %312 : vector<2x32xf32>
    %314 = arith.addf %305, %313 : vector<2x32xf32>
    %315 = vector.extract_strided_slice %276 {offsets = [0, 96], sizes = [2, 32], strides = [1, 1]} : vector<2x128xf32> to vector<2x32xf32>
    %316 = arith.mulf %294, %315 : vector<2x32xf32>
    %317 = arith.mulf %293, %306 : vector<2x32xf32>
    %318 = arith.addf %316, %317 : vector<2x32xf32>
    %319 = math.tanh %318 : vector<2x32xf32>
    %320 = arith.mulf %295, %319 : vector<2x32xf32>
    %321 = tpu.concatenate %310, %314, %320, %318 in 1 : vector<2x32xf32>, vector<2x32xf32>, vector<2x32xf32>, vector<2x32xf32> -> vector<2x128xf32>
    %c0_59 = arith.constant 0 : index
    %c5 = arith.constant 5 : index
    %c0_60 = arith.constant 0 : index
    %322 = vector.load %arg20[%c0_59, %c5, %c0_60] : memref<2x8x128xf32, #tpu.memory_space<vmem>>, vector<2x1x128xf32>
    %323 = vector.shape_cast %322 : vector<2x1x128xf32> to vector<2x128xf32>
    %324 = vector.shape_cast %321 : vector<2x128xf32> to vector<2x1x128xf32>
    tpu.vector_store %arg20[%c0_59, %c5, %c0_60], %324 {strides = array<i32>} : memref<2x8x128xf32, #tpu.memory_space<vmem>>, vector<2x1x128xf32>,
    %cst_61 = arith.constant dense<0.000000e+00> : vector<2x320xf32>
    %325 = tpu.matmul %321, %49, %cst_61 {dimension_numbers = #tpu.dot_dimension_numbers<[1], [0], [0], [1], [0, 0, 1, 1], [], []>} : vector<2x128xf32>, vector<128x320xf32>, vector<2x320xf32> -> vector<2x320xf32>
    %326 = vector.extract_strided_slice %48 {offsets = [0, 6, 0], sizes = [2, 1, 320], strides = [1, 1, 1]} : vector<2x8x320xf32> to vector<2x1x320xf32>
    %327 = vector.shape_cast %326 : vector<2x1x320xf32> to vector<2x320xf32>
    %328 = vector.extract_strided_slice %327 {offsets = [0, 0], sizes = [2, 224], strides = [1, 1]} : vector<2x320xf32> to vector<2x224xf32>
    %329 = vector.extract_strided_slice %325 {offsets = [0, 0], sizes = [2, 224], strides = [1, 1]} : vector<2x320xf32> to vector<2x224xf32>
    %330 = arith.addf %328, %329 : vector<2x224xf32>
    %331 = arith.negf %330 : vector<2x224xf32>
    %332 = math.exp %331 : vector<2x224xf32>
    %cst_62 = arith.constant 1.000000e+00 : f32
    %333 = vector.broadcast %cst_62 : f32 to vector<2x224xf32>
    %334 = arith.addf %333, %332 : vector<2x224xf32>
    %335 = arith.divf %333, %334 : vector<2x224xf32>
    %336 = vector.extract_strided_slice %335 {offsets = [0, 64], sizes = [2, 32], strides = [1, 1]} : vector<2x224xf32> to vector<2x32xf32>
    %337 = vector.extract_strided_slice %335 {offsets = [0, 96], sizes = [2, 32], strides = [1, 1]} : vector<2x224xf32> to vector<2x32xf32>
    %338 = vector.extract_strided_slice %335 {offsets = [0, 128], sizes = [2, 32], strides = [1, 1]} : vector<2x224xf32> to vector<2x32xf32>
    %339 = vector.extract_strided_slice %335 {offsets = [0, 160], sizes = [2, 32], strides = [1, 1]} : vector<2x224xf32> to vector<2x32xf32>
    %340 = vector.extract_strided_slice %335 {offsets = [0, 192], sizes = [2, 32], strides = [1, 1]} : vector<2x224xf32> to vector<2x32xf32>
    %341 = vector.extract_strided_slice %335 {offsets = [0, 0], sizes = [2, 64], strides = [1, 1]} : vector<2x224xf32> to vector<2x64xf32>
    %342 = tpu.concatenate %341, %53 in 1 : vector<2x64xf32>, vector<2x32xf32> -> vector<2x96xf32>
    %343 = vector.extract_strided_slice %327 {offsets = [0, 224], sizes = [2, 96], strides = [1, 1]} : vector<2x320xf32> to vector<2x96xf32>
    %344 = vector.extract_strided_slice %325 {offsets = [0, 224], sizes = [2, 96], strides = [1, 1]} : vector<2x320xf32> to vector<2x96xf32>
    %345 = arith.addf %344, %52 : vector<2x96xf32>
    %346 = arith.mulf %342, %345 : vector<2x96xf32>
    %347 = arith.addf %343, %346 : vector<2x96xf32>
    %348 = math.tanh %347 : vector<2x96xf32>
    %349 = vector.extract_strided_slice %348 {offsets = [0, 0], sizes = [2, 32], strides = [1, 1]} : vector<2x96xf32> to vector<2x32xf32>
    %350 = vector.extract_strided_slice %348 {offsets = [0, 32], sizes = [2, 32], strides = [1, 1]} : vector<2x96xf32> to vector<2x32xf32>
    %351 = vector.extract_strided_slice %348 {offsets = [0, 64], sizes = [2, 32], strides = [1, 1]} : vector<2x96xf32> to vector<2x32xf32>
    %352 = vector.extract_strided_slice %321 {offsets = [0, 0], sizes = [2, 32], strides = [1, 1]} : vector<2x128xf32> to vector<2x32xf32>
    %353 = arith.subf %352, %349 : vector<2x32xf32>
    %354 = arith.mulf %336, %353 : vector<2x32xf32>
    %355 = arith.addf %349, %354 : vector<2x32xf32>
    %356 = vector.extract_strided_slice %321 {offsets = [0, 32], sizes = [2, 32], strides = [1, 1]} : vector<2x128xf32> to vector<2x32xf32>
    %357 = arith.subf %356, %350 : vector<2x32xf32>
    %358 = arith.mulf %337, %357 : vector<2x32xf32>
    %359 = arith.addf %350, %358 : vector<2x32xf32>
    %360 = vector.extract_strided_slice %321 {offsets = [0, 96], sizes = [2, 32], strides = [1, 1]} : vector<2x128xf32> to vector<2x32xf32>
    %361 = arith.mulf %339, %360 : vector<2x32xf32>
    %362 = arith.mulf %338, %351 : vector<2x32xf32>
    %363 = arith.addf %361, %362 : vector<2x32xf32>
    %364 = math.tanh %363 : vector<2x32xf32>
    %365 = arith.mulf %340, %364 : vector<2x32xf32>
    %366 = tpu.concatenate %355, %359, %365, %363 in 1 : vector<2x32xf32>, vector<2x32xf32>, vector<2x32xf32>, vector<2x32xf32> -> vector<2x128xf32>
    %c0_63 = arith.constant 0 : index
    %c6 = arith.constant 6 : index
    %c0_64 = arith.constant 0 : index
    %367 = vector.load %arg20[%c0_63, %c6, %c0_64] : memref<2x8x128xf32, #tpu.memory_space<vmem>>, vector<2x1x128xf32>
    %368 = vector.shape_cast %367 : vector<2x1x128xf32> to vector<2x128xf32>
    %369 = vector.shape_cast %366 : vector<2x128xf32> to vector<2x1x128xf32>
    tpu.vector_store %arg20[%c0_63, %c6, %c0_64], %369 {strides = array<i32>} : memref<2x8x128xf32, #tpu.memory_space<vmem>>, vector<2x1x128xf32>,
    %cst_65 = arith.constant dense<0.000000e+00> : vector<2x320xf32>
    %370 = tpu.matmul %366, %49, %cst_65 {dimension_numbers = #tpu.dot_dimension_numbers<[1], [0], [0], [1], [0, 0, 1, 1], [], []>} : vector<2x128xf32>, vector<128x320xf32>, vector<2x320xf32> -> vector<2x320xf32>
    %371 = vector.extract_strided_slice %48 {offsets = [0, 7, 0], sizes = [2, 1, 320], strides = [1, 1, 1]} : vector<2x8x320xf32> to vector<2x1x320xf32>
    %372 = vector.shape_cast %371 : vector<2x1x320xf32> to vector<2x320xf32>
    %373 = vector.extract_strided_slice %372 {offsets = [0, 0], sizes = [2, 224], strides = [1, 1]} : vector<2x320xf32> to vector<2x224xf32>
    %374 = vector.extract_strided_slice %370 {offsets = [0, 0], sizes = [2, 224], strides = [1, 1]} : vector<2x320xf32> to vector<2x224xf32>
    %375 = arith.addf %373, %374 : vector<2x224xf32>
    %376 = arith.negf %375 : vector<2x224xf32>
    %377 = math.exp %376 : vector<2x224xf32>
    %cst_66 = arith.constant 1.000000e+00 : f32
    %378 = vector.broadcast %cst_66 : f32 to vector<2x224xf32>
    %379 = arith.addf %378, %377 : vector<2x224xf32>
    %380 = arith.divf %378, %379 : vector<2x224xf32>
    %381 = vector.extract_strided_slice %380 {offsets = [0, 64], sizes = [2, 32], strides = [1, 1]} : vector<2x224xf32> to vector<2x32xf32>
    %382 = vector.extract_strided_slice %380 {offsets = [0, 96], sizes = [2, 32], strides = [1, 1]} : vector<2x224xf32> to vector<2x32xf32>
    %383 = vector.extract_strided_slice %380 {offsets = [0, 128], sizes = [2, 32], strides = [1, 1]} : vector<2x224xf32> to vector<2x32xf32>
    %384 = vector.extract_strided_slice %380 {offsets = [0, 160], sizes = [2, 32], strides = [1, 1]} : vector<2x224xf32> to vector<2x32xf32>
    %385 = vector.extract_strided_slice %380 {offsets = [0, 192], sizes = [2, 32], strides = [1, 1]} : vector<2x224xf32> to vector<2x32xf32>
    %386 = vector.extract_strided_slice %380 {offsets = [0, 0], sizes = [2, 64], strides = [1, 1]} : vector<2x224xf32> to vector<2x64xf32>
    %387 = tpu.concatenate %386, %53 in 1 : vector<2x64xf32>, vector<2x32xf32> -> vector<2x96xf32>
    %388 = vector.extract_strided_slice %372 {offsets = [0, 224], sizes = [2, 96], strides = [1, 1]} : vector<2x320xf32> to vector<2x96xf32>
    %389 = vector.extract_strided_slice %370 {offsets = [0, 224], sizes = [2, 96], strides = [1, 1]} : vector<2x320xf32> to vector<2x96xf32>
    %390 = arith.addf %389, %52 : vector<2x96xf32>
    %391 = arith.mulf %387, %390 : vector<2x96xf32>
    %392 = arith.addf %388, %391 : vector<2x96xf32>
    %393 = math.tanh %392 : vector<2x96xf32>
    %394 = vector.extract_strided_slice %393 {offsets = [0, 0], sizes = [2, 32], strides = [1, 1]} : vector<2x96xf32> to vector<2x32xf32>
    %395 = vector.extract_strided_slice %393 {offsets = [0, 32], sizes = [2, 32], strides = [1, 1]} : vector<2x96xf32> to vector<2x32xf32>
    %396 = vector.extract_strided_slice %393 {offsets = [0, 64], sizes = [2, 32], strides = [1, 1]} : vector<2x96xf32> to vector<2x32xf32>
    %397 = vector.extract_strided_slice %366 {offsets = [0, 0], sizes = [2, 32], strides = [1, 1]} : vector<2x128xf32> to vector<2x32xf32>
    %398 = arith.subf %397, %394 : vector<2x32xf32>
    %399 = arith.mulf %381, %398 : vector<2x32xf32>
    %400 = arith.addf %394, %399 : vector<2x32xf32>
    %401 = vector.extract_strided_slice %366 {offsets = [0, 32], sizes = [2, 32], strides = [1, 1]} : vector<2x128xf32> to vector<2x32xf32>
    %402 = arith.subf %401, %395 : vector<2x32xf32>
    %403 = arith.mulf %382, %402 : vector<2x32xf32>
    %404 = arith.addf %395, %403 : vector<2x32xf32>
    %405 = vector.extract_strided_slice %366 {offsets = [0, 96], sizes = [2, 32], strides = [1, 1]} : vector<2x128xf32> to vector<2x32xf32>
    %406 = arith.mulf %384, %405 : vector<2x32xf32>
    %407 = arith.mulf %383, %396 : vector<2x32xf32>
    %408 = arith.addf %406, %407 : vector<2x32xf32>
    %409 = math.tanh %408 : vector<2x32xf32>
    %410 = arith.mulf %385, %409 : vector<2x32xf32>
    %411 = tpu.concatenate %400, %404, %410, %408 in 1 : vector<2x32xf32>, vector<2x32xf32>, vector<2x32xf32>, vector<2x32xf32> -> vector<2x128xf32>
    %c0_67 = arith.constant 0 : index
    %c7 = arith.constant 7 : index
    %c0_68 = arith.constant 0 : index
    %412 = vector.load %arg20[%c0_67, %c7, %c0_68] : memref<2x8x128xf32, #tpu.memory_space<vmem>>, vector<2x1x128xf32>
    %413 = vector.shape_cast %412 : vector<2x1x128xf32> to vector<2x128xf32>
    %414 = vector.shape_cast %411 : vector<2x128xf32> to vector<2x1x128xf32>
    tpu.vector_store %arg20[%c0_67, %c7, %c0_68], %414 {strides = array<i32>} : memref<2x8x128xf32, #tpu.memory_space<vmem>>, vector<2x1x128xf32>,
    %c0_69 = arith.constant 0 : index
    %c0_70 = arith.constant 0 : index
    %c0_71 = arith.constant 0 : index
    %415 = vector.load %arg20[%c0_69, %c0_70, %c0_71] : memref<2x8x128xf32, #tpu.memory_space<vmem>>, vector<2x8x128xf32>
    "tpu.trace_start"() <{level = 10 : i32, message = "bst,btf->bsf"}> : () -> ()
    %cst_72 = arith.constant dense<0.000000e+00> : vector<2x8x128xf32>
    %416 = tpu.matmul %41, %415, %cst_72 {dimension_numbers = #tpu.dot_dimension_numbers<[2], [1], [1], [2], [0, 0, 0, 1, 1, 2], [0], [0]>} : vector<2x8x8xf32>, vector<2x8x128xf32>, vector<2x8x128xf32> -> vector<2x8x128xf32>
    "tpu.trace_stop"() : () -> ()
    %417 = vector.extract_strided_slice %415 {offsets = [0, 0, 0], sizes = [2, 8, 16], strides = [1, 1, 1]} : vector<2x8x128xf32> to vector<2x8x16xf32>
    %418 = vector.extract_strided_slice %416 {offsets = [0, 0, 16], sizes = [2, 8, 16], strides = [1, 1, 1]} : vector<2x8x128xf32> to vector<2x8x16xf32>
    %419 = tpu.concatenate %417, %418 in 2 : vector<2x8x16xf32>, vector<2x8x16xf32> -> vector<2x8x32xf32>
    %420 = vector.extract_strided_slice %415 {offsets = [0, 0, 32], sizes = [2, 8, 16], strides = [1, 1, 1]} : vector<2x8x128xf32> to vector<2x8x16xf32>
    %421 = vector.extract_strided_slice %416 {offsets = [0, 0, 48], sizes = [2, 8, 16], strides = [1, 1, 1]} : vector<2x8x128xf32> to vector<2x8x16xf32>
    %422 = tpu.concatenate %420, %421 in 2 : vector<2x8x16xf32>, vector<2x8x16xf32> -> vector<2x8x32xf32>
    %423 = vector.extract_strided_slice %415 {offsets = [0, 0, 64], sizes = [2, 8, 16], strides = [1, 1, 1]} : vector<2x8x128xf32> to vector<2x8x16xf32>
    %424 = vector.extract_strided_slice %416 {offsets = [0, 0, 80], sizes = [2, 8, 16], strides = [1, 1, 1]} : vector<2x8x128xf32> to vector<2x8x16xf32>
    %425 = tpu.concatenate %423, %424 in 2 : vector<2x8x16xf32>, vector<2x8x16xf32> -> vector<2x8x32xf32>
    %426 = vector.extract_strided_slice %415 {offsets = [0, 0, 0], sizes = [2, 8, 32], strides = [1, 1, 1]} : vector<2x8x128xf32> to vector<2x8x32xf32>
    %cst_73 = arith.constant dense<0.000000e+00> : vector<2x32xf32>
    %427 = vector.multi_reduction <add>, %426, %cst_73 [1] : vector<2x8x32xf32> to vector<2x32xf32>
    %cst_74 = arith.constant 1.250000e-01 : f32
    %428 = vector.broadcast %cst_74 : f32 to vector<2x32xf32>
    %429 = arith.mulf %427, %428 : vector<2x32xf32>
    %430 = vector.extract_strided_slice %415 {offsets = [0, 0, 32], sizes = [2, 8, 32], strides = [1, 1, 1]} : vector<2x8x128xf32> to vector<2x8x32xf32>
    %cst_75 = arith.constant dense<0.000000e+00> : vector<2x32xf32>
    %431 = vector.multi_reduction <add>, %430, %cst_75 [1] : vector<2x8x32xf32> to vector<2x32xf32>
    %cst_76 = arith.constant 1.250000e-01 : f32
    %432 = vector.broadcast %cst_76 : f32 to vector<2x32xf32>
    %433 = arith.mulf %431, %432 : vector<2x32xf32>
    "tpu.trace_start"() <{level = 10 : i32, message = "bse,bte->bst"}> : () -> ()
    %cst_77 = arith.constant dense<0.000000e+00> : vector<2x8x8xf32>
    %434 = tpu.matmul %419, %422, %cst_77 {dimension_numbers = #tpu.dot_dimension_numbers<[2], [2], [1], [1], [0, 0, 0, 1, 1, 1], [0], [0]>} : vector<2x8x32xf32>, vector<2x8x32xf32>, vector<2x8x8xf32> -> vector<2x8x8xf32>
    "tpu.trace_stop"() : () -> ()
    %cst_78 = arith.constant dense<0xFF800000> : vector<2x8xf32>
    %435 = vector.multi_reduction <maximumf>, %434, %cst_78 [2] : vector<2x8x8xf32> to vector<2x8xf32>
    %436 = vector.shape_cast %435 : vector<2x8xf32> to vector<2x8x1xf32>
    %437 = vector.broadcast %436 : vector<2x8x1xf32> to vector<2x8x8xf32>
    %438 = arith.subf %434, %437 : vector<2x8x8xf32>
    %439 = math.exp %438 : vector<2x8x8xf32>
    %cst_79 = arith.constant dense<0.000000e+00> : vector<2x8xf32>
    %440 = vector.multi_reduction <add>, %439, %cst_79 [2] : vector<2x8x8xf32> to vector<2x8xf32>
    %441 = vector.shape_cast %440 : vector<2x8xf32> to vector<2x8x1xf32>
    %442 = vector.broadcast %441 : vector<2x8x1xf32> to vector<2x8x8xf32>
    %443 = arith.divf %439, %442 : vector<2x8x8xf32>
    %cst_80 = arith.constant dense<0xFF800000> : vector<2x8xf32>
    %444 = vector.multi_reduction <maximumf>, %434, %cst_80 [1] : vector<2x8x8xf32> to vector<2x8xf32>
    %445 = vector.shape_cast %444 : vector<2x8xf32> to vector<2x1x8xf32>
    %446 = vector.broadcast %445 : vector<2x1x8xf32> to vector<2x8x8xf32>
    %447 = arith.subf %434, %446 : vector<2x8x8xf32>
    %448 = math.exp %447 : vector<2x8x8xf32>
    %cst_81 = arith.constant dense<0.000000e+00> : vector<2x8xf32>
    %449 = vector.multi_reduction <add>, %448, %cst_81 [1] : vector<2x8x8xf32> to vector<2x8xf32>
    %450 = vector.shape_cast %449 : vector<2x8xf32> to vector<2x1x8xf32>
    %451 = vector.broadcast %450 : vector<2x1x8xf32> to vector<2x8x8xf32>
    %452 = arith.divf %448, %451 : vector<2x8x8xf32>
    %cst_82 = arith.constant dense<0.000000e+00> : vector<2x8xf32>
    %453 = vector.multi_reduction <add>, %452, %cst_82 [2] : vector<2x8x8xf32> to vector<2x8xf32>
    %cst_83 = arith.constant 8.000000e+00 : f32
    %454 = vector.broadcast %cst_83 : f32 to vector<2x8xf32>
    %455 = arith.divf %453, %454 : vector<2x8xf32>
    %456 = vector.shape_cast %455 : vector<2x8xf32> to vector<2x8x1xf32>
    %457 = vector.broadcast %456 : vector<2x8x1xf32> to vector<2x8x8xf32>
    %458 = arith.mulf %443, %457 : vector<2x8x8xf32>
    %cst_84 = arith.constant dense<0.000000e+00> : vector<2x8xf32>
    %459 = vector.multi_reduction <add>, %458, %cst_84 [1] : vector<2x8x8xf32> to vector<2x8xf32>
    %460 = vector.shape_cast %459 : vector<2x8xf32> to vector<2x8x1xf32>
    %461 = vector.broadcast %460 : vector<2x8x1xf32> to vector<2x8x32xf32>
    %462 = arith.mulf %461, %422 : vector<2x8x32xf32>
    %cst_85 = arith.constant dense<0.000000e+00> : vector<2x32xf32>
    %463 = vector.multi_reduction <add>, %462, %cst_85 [1] : vector<2x8x32xf32> to vector<2x32xf32>
    %464 = vector.shape_cast %425 : vector<2x8x32xf32> to vector<16x32xf32>
    %c0_86 = arith.constant 0 : index
    %c0_87 = arith.constant 0 : index
    %465 = vector.load %arg13[%c0_86, %c0_87] : memref<32x96xf32, #tpu.memory_space<vmem>>, vector<32x96xf32>
    %cst_88 = arith.constant dense<0.000000e+00> : vector<16x96xf32>
    %466 = tpu.matmul %464, %465, %cst_88 {dimension_numbers = #tpu.dot_dimension_numbers<[1], [0], [0], [1], [0, 0, 1, 1], [], []>} : vector<16x32xf32>, vector<32x96xf32>, vector<16x96xf32> -> vector<16x96xf32>
    %c0_89 = arith.constant 0 : index
    %c0_90 = arith.constant 0 : index
    %467 = vector.load %arg14[%c0_89, %c0_90] : memref<1x96xf32, #tpu.memory_space<vmem>>, vector<1x96xf32>
    %468 = vector.broadcast %467 : vector<1x96xf32> to vector<16x96xf32>
    %469 = arith.addf %466, %468 : vector<16x96xf32>
    %470 = vector.shape_cast %469 : vector<16x96xf32> to vector<2x8x96xf32>
    %471 = vector.extract_strided_slice %470 {offsets = [0, 0, 0], sizes = [2, 8, 32], strides = [1, 1, 1]} : vector<2x8x96xf32> to vector<2x8x32xf32>
    %472 = vector.extract_strided_slice %470 {offsets = [0, 0, 32], sizes = [2, 8, 32], strides = [1, 1, 1]} : vector<2x8x96xf32> to vector<2x8x32xf32>
    %473 = vector.extract_strided_slice %470 {offsets = [0, 0, 64], sizes = [2, 8, 32], strides = [1, 1, 1]} : vector<2x8x96xf32> to vector<2x8x32xf32>
    "tpu.trace_start"() <{level = 10 : i32, message = "bqe,bke->bqk"}> : () -> ()
    %cst_91 = arith.constant dense<0.000000e+00> : vector<2x8x8xf32>
    %474 = tpu.matmul %471, %472, %cst_91 {dimension_numbers = #tpu.dot_dimension_numbers<[2], [2], [1], [1], [0, 0, 0, 1, 1, 1], [0], [0]>} : vector<2x8x32xf32>, vector<2x8x32xf32>, vector<2x8x8xf32> -> vector<2x8x8xf32>
    "tpu.trace_stop"() : () -> ()
    %cst_92 = arith.constant 0.176776692 : f32
    %475 = vector.broadcast %cst_92 : f32 to vector<2x8x8xf32>
    %476 = arith.mulf %474, %475 : vector<2x8x8xf32>
    %cst_93 = arith.constant dense<0xFF800000> : vector<2x8xf32>
    %477 = vector.multi_reduction <maximumf>, %476, %cst_93 [2] : vector<2x8x8xf32> to vector<2x8xf32>
    %478 = vector.shape_cast %477 : vector<2x8xf32> to vector<2x8x1xf32>
    %479 = vector.broadcast %478 : vector<2x8x1xf32> to vector<2x8x8xf32>
    %480 = arith.subf %476, %479 : vector<2x8x8xf32>
    %481 = math.exp %480 : vector<2x8x8xf32>
    %cst_94 = arith.constant dense<0.000000e+00> : vector<2x8xf32>
    %482 = vector.multi_reduction <add>, %481, %cst_94 [2] : vector<2x8x8xf32> to vector<2x8xf32>
    %483 = vector.shape_cast %482 : vector<2x8xf32> to vector<2x8x1xf32>
    %484 = vector.broadcast %483 : vector<2x8x1xf32> to vector<2x8x8xf32>
    %485 = arith.divf %481, %484 : vector<2x8x8xf32>
    "tpu.trace_start"() <{level = 10 : i32, message = "bqk,bke->bqe"}> : () -> ()
    %cst_95 = arith.constant dense<0.000000e+00> : vector<2x8x32xf32>
    %486 = tpu.matmul %485, %473, %cst_95 {dimension_numbers = #tpu.dot_dimension_numbers<[2], [1], [1], [2], [0, 0, 0, 1, 1, 2], [0], [0]>} : vector<2x8x8xf32>, vector<2x8x32xf32>, vector<2x8x32xf32> -> vector<2x8x32xf32>
    "tpu.trace_stop"() : () -> ()
    %487 = vector.shape_cast %486 : vector<2x8x32xf32> to vector<16x32xf32>
    %c0_96 = arith.constant 0 : index
    %c0_97 = arith.constant 0 : index
    %488 = vector.load %arg15[%c0_96, %c0_97] : memref<32x32xf32, #tpu.memory_space<vmem>>, vector<32x32xf32>
    %cst_98 = arith.constant dense<0.000000e+00> : vector<16x32xf32>
    %489 = tpu.matmul %487, %488, %cst_98 {dimension_numbers = #tpu.dot_dimension_numbers<[1], [0], [0], [1], [0, 0, 1, 1], [], []>} : vector<16x32xf32>, vector<32x32xf32>, vector<16x32xf32> -> vector<16x32xf32>
    %c0_99 = arith.constant 0 : index
    %c0_100 = arith.constant 0 : index
    %490 = vector.load %arg16[%c0_99, %c0_100] : memref<1x32xf32, #tpu.memory_space<vmem>>, vector<1x32xf32>
    %491 = vector.broadcast %490 : vector<1x32xf32> to vector<16x32xf32>
    %492 = arith.addf %489, %491 : vector<16x32xf32>
    %493 = vector.shape_cast %492 : vector<16x32xf32> to vector<2x8x32xf32>
    %cst_101 = arith.constant dense<0.000000e+00> : vector<2x32xf32>
    %494 = vector.multi_reduction <add>, %493, %cst_101 [1] : vector<2x8x32xf32> to vector<2x32xf32>
    %cst_102 = arith.constant 1.250000e-01 : f32
    %495 = vector.broadcast %cst_102 : f32 to vector<2x32xf32>
    %496 = arith.mulf %494, %495 : vector<2x32xf32>
    %497 = tpu.concatenate %463, %496, %429, %433 in 1 : vector<2x32xf32>, vector<2x32xf32>, vector<2x32xf32>, vector<2x32xf32> -> vector<2x128xf32>
    %cst_103 = arith.constant 0.000000e+00 : f32
    %498 = vector.broadcast %cst_103 : f32 to vector<2x128xf32>
    %499 = arith.maximumf %497, %498 : vector<2x128xf32>
    %c0_104 = arith.constant 0 : index
    %c0_105 = arith.constant 0 : index
    %500 = vector.load %arg17[%c0_104, %c0_105] : memref<128x3xf32, #tpu.memory_space<vmem>>, vector<128x3xf32>
    %cst_106 = arith.constant dense<0.000000e+00> : vector<2x3xf32>
    %501 = tpu.matmul %499, %500, %cst_106 {dimension_numbers = #tpu.dot_dimension_numbers<[1], [0], [0], [1], [0, 0, 1, 1], [], []>} : vector<2x128xf32>, vector<128x3xf32>, vector<2x3xf32> -> vector<2x3xf32>
    %c0_107 = arith.constant 0 : index
    %c0_108 = arith.constant 0 : index
    %502 = vector.load %arg18[%c0_107, %c0_108] : memref<1x3xf32, #tpu.memory_space<vmem>>, vector<1x3xf32>
    %503 = vector.broadcast %502 : vector<1x3xf32> to vector<2x3xf32>
    %504 = arith.addf %501, %503 : vector<2x3xf32>
    %505 = arith.negf %504 : vector<2x3xf32>
    %506 = math.exp %505 : vector<2x3xf32>
    %cst_109 = arith.constant 1.000000e+00 : f32
    %507 = vector.broadcast %cst_109 : f32 to vector<2x3xf32>
    %508 = arith.addf %507, %506 : vector<2x3xf32>
    %509 = arith.divf %507, %508 : vector<2x3xf32>
    %c0_110 = arith.constant 0 : index
    %c0_111 = arith.constant 0 : index
    %510 = vector.load %arg19[%c0_110, %c0_111] : memref<2x3xf32, #tpu.memory_space<vmem>>, vector<2x3xf32>
    tpu.vector_store %arg19[%c0_110, %c0_111], %509 {strides = array<i32>} : memref<2x3xf32, #tpu.memory_space<vmem>>, vector<2x3xf32>,
    return
  }
}

</mosaic_0001>

<llo_original>
// kernel: tpu_custom_call.1
$region0: #{tpu_custom_call.1}
  #allocation0 [shape = 'u32[]', space=smem, size = 0x4, offset = 0x4, fixed_abs, tag = 'smem constant byte address 0x4 - core index']
  #allocation1 [shape = 'u32[144,128]{1,0:T(1,128)}', space=vmem, size = 0x12000, scoped, tag = 'internal scratch']
  #allocation2 [shape = 'f32[2,8,128]{2,1,0:T(8,128)}', space=vmem, size = 0x2000, scoped, tag = 'scratch operand']
  %s0 = inlined_call_operand.vmem [shape: f32[2,8,32], index: 0, kind: input, shape index: {}]
  %s1 = inlined_call_operand.vmem [shape: f32[2,8,32], index: 1, kind: input, shape index: {}]
  %s2 = inlined_call_operand.vmem [shape: f32[2,8,32], index: 2, kind: input, shape index: {}]
  %s3 = inlined_call_operand.vmem [shape: f32[32,96], index: 3, kind: input, shape index: {}]
  %s4 = inlined_call_operand.vmem [shape: f32[1,96], index: 4, kind: input, shape index: {}]
  %s5 = inlined_call_operand.vmem [shape: f32[32,96], index: 5, kind: input, shape index: {}]
  %s6 = inlined_call_operand.vmem [shape: f32[1,96], index: 6, kind: input, shape index: {}]
  %s7 = inlined_call_operand.vmem [shape: f32[32,128], index: 7, kind: input, shape index: {}]
  %s8 = inlined_call_operand.vmem [shape: f32[1,128], index: 8, kind: input, shape index: {}]
  %s9 = inlined_call_operand.vmem [shape: f32[128,320], index: 9, kind: input, shape index: {}]
  %s10 = inlined_call_operand.vmem [shape: f32[1,96], index: 10, kind: input, shape index: {}]
  %s11 = inlined_call_operand.vmem [shape: f32[1,320], index: 11, kind: input, shape index: {}]
  %s12 = inlined_call_operand.vmem [shape: f32[8,8], index: 12, kind: input, shape index: {}]
  %s13 = inlined_call_operand.vmem [shape: f32[32,96], index: 13, kind: input, shape index: {}]
  %s14 = inlined_call_operand.vmem [shape: f32[1,96], index: 14, kind: input, shape index: {}]
  %s15 = inlined_call_operand.vmem [shape: f32[32,32], index: 15, kind: input, shape index: {}]
  %s16 = inlined_call_operand.vmem [shape: f32[1,32], index: 16, kind: input, shape index: {}]
  %s17 = inlined_call_operand.vmem [shape: f32[128,3], index: 17, kind: input, shape index: {}]
  %s18 = inlined_call_operand.vmem [shape: f32[1,3], index: 18, kind: input, shape index: {}]
  %s19 = inlined_call_operand.hbm [shape: f32[2,3], index: 19, kind: output, shape index: {}]
  %s20 = sld [smem:[#allocation0]]
  $region86: #{tpu_custom_call.1} parent=0
    _
  %s22 = ssub.s32 1, %s20
  %s23 = scalar_select 0, %s22, %s20
  $region1: #{tpu_custom_call.1} parent=0
    #allocation3 [shape = 'u8[1024]{0}', space=vmem, size = 0x400, scoped, tag = 'output window, operand 0, single buffered']
    #allocation4 [shape = 's32[1]{0}', space=sflag, size = 0x4, scoped, tag = 'scoped memory for tpu_custom_call.1']
    %24 = vsyncpa [#allocation4], 0
    // Predicated region
    $region2: #{tpu_custom_call.1} parent=1 // pred_check
      _
    $region3: #{tpu_custom_call.1} parent=1 // pred_check_branch
      %26 = sbr.rel (0) target = $region5
    $region4: #{tpu_custom_call.1} parent=1 // pred_region
      _
    $region5: #{tpu_custom_call.1} parent=1 // pred_fallthru
      _
    // Predicated region
    $region6: #{tpu_custom_call.1} parent=1 // pred_check
      _
    $region7: #{tpu_custom_call.1} parent=1 // pred_check_branch
      %28 = sbr.rel (0) target = $region9
    $region8: #{tpu_custom_call.1} parent=1 // pred_region
      _
    $region9: #{tpu_custom_call.1} parent=1 // pred_fallthru
      _
    // Predicated region
    $region10: #{tpu_custom_call.1} parent=1 // pred_check
      _
    $region11: #{tpu_custom_call.1} parent=1 // pred_check_branch
      %30 = sbr.rel (0) target = $region13
    $region12: #{tpu_custom_call.1} parent=1 // pred_region
      _
    $region13: #{tpu_custom_call.1} parent=1 // pred_fallthru
      _
    // Predicated region
    $region14: #{tpu_custom_call.1} parent=1 // pred_check
      _
    $region15: #{tpu_custom_call.1} parent=1 // pred_check_branch
      %32 = sbr.rel (0) target = $region17
    $region16: #{tpu_custom_call.1} parent=1 // pred_region
      _
    $region17: #{tpu_custom_call.1} parent=1 // pred_fallthru
      _
    // Predicated region
    $region18: #{tpu_custom_call.1} parent=1 // pred_check
      _
    $region19: #{tpu_custom_call.1} parent=1 // pred_check_branch
      %34 = sbr.rel (0) target = $region21
    $region20: #{tpu_custom_call.1} parent=1 // pred_region
      _
    $region21: #{tpu_custom_call.1} parent=1 // pred_fallthru
      _
    // Predicated region
    $region22: #{tpu_custom_call.1} parent=1 // pred_check
      _
    $region23: #{tpu_custom_call.1} parent=1 // pred_check_branch
      %36 = sbr.rel (0) target = $region25
    $region24: #{tpu_custom_call.1} parent=1 // pred_region
      _
    $region25: #{tpu_custom_call.1} parent=1 // pred_fallthru
      _
    // Predicated region
    $region26: #{tpu_custom_call.1} parent=1 // pred_check
      _
    $region27: #{tpu_custom_call.1} parent=1 // pred_check_branch
      %38 = sbr.rel (0) target = $region29
    $region28: #{tpu_custom_call.1} parent=1 // pred_region
      _
    $region29: #{tpu_custom_call.1} parent=1 // pred_fallthru
      _
    // Predicated region
    $region30: #{tpu_custom_call.1} parent=1 // pred_check
      _
    $region31: #{tpu_custom_call.1} parent=1 // pred_check_branch
      %40 = sbr.rel (0) target = $region33
    $region32: #{tpu_custom_call.1} parent=1 // pred_region
      _
    $region33: #{tpu_custom_call.1} parent=1 // pred_fallthru
      _
    // Predicated region
    $region34: #{tpu_custom_call.1} parent=1 // pred_check
      _
    $region35: #{tpu_custom_call.1} parent=1 // pred_check_branch
      %42 = sbr.rel (0) target = $region37
    $region36: #{tpu_custom_call.1} parent=1 // pred_region
      _
    $region37: #{tpu_custom_call.1} parent=1 // pred_fallthru
      _
    // Predicated region
    $region38: #{tpu_custom_call.1} parent=1 // pred_check
      _
    $region39: #{tpu_custom_call.1} parent=1 // pred_check_branch
      %44 = sbr.rel (0) target = $region41
    $region40: #{tpu_custom_call.1} parent=1 // pred_region
      _
    $region41: #{tpu_custom_call.1} parent=1 // pred_fallthru
      _
    // Predicated region
    $region42: #{tpu_custom_call.1} parent=1 // pred_check
      _
    $region43: #{tpu_custom_call.1} parent=1 // pred_check_branch
      %46 = sbr.rel (0) target = $region45
    $region44: #{tpu_custom_call.1} parent=1 // pred_region
      _
    $region45: #{tpu_custom_call.1} parent=1 // pred_fallthru
      _
    // Predicated region
    $region46: #{tpu_custom_call.1} parent=1 // pred_check
      _
    $region47: #{tpu_custom_call.1} parent=1 // pred_check_branch
      %48 = sbr.rel (0) target = $region49
    $region48: #{tpu_custom_call.1} parent=1 // pred_region
      _
    $region49: #{tpu_custom_call.1} parent=1 // pred_fallthru
      _
    // Predicated region
    $region50: #{tpu_custom_call.1} parent=1 // pred_check
      _
    $region51: #{tpu_custom_call.1} parent=1 // pred_check_branch
      %50 = sbr.rel (0) target = $region53
    $region52: #{tpu_custom_call.1} parent=1 // pred_region
      _
    $region53: #{tpu_custom_call.1} parent=1 // pred_fallthru
      _
    // Predicated region
    $region54: #{tpu_custom_call.1} parent=1 // pred_check
      _
    $region55: #{tpu_custom_call.1} parent=1 // pred_check_branch
      %52 = sbr.rel (0) target = $region57
    $region56: #{tpu_custom_call.1} parent=1 // pred_region
      _
    $region57: #{tpu_custom_call.1} parent=1 // pred_fallthru
      _
    // Predicated region
    $region58: #{tpu_custom_call.1} parent=1 // pred_check
      _
    $region59: #{tpu_custom_call.1} parent=1 // pred_check_branch
      %54 = sbr.rel (0) target = $region61
    $region60: #{tpu_custom_call.1} parent=1 // pred_region
      _
    $region61: #{tpu_custom_call.1} parent=1 // pred_fallthru
      _
    // Predicated region
    $region62: #{tpu_custom_call.1} parent=1 // pred_check
      _
    $region63: #{tpu_custom_call.1} parent=1 // pred_check_branch
      %56 = sbr.rel (0) target = $region65
    $region64: #{tpu_custom_call.1} parent=1 // pred_region
      _
    $region65: #{tpu_custom_call.1} parent=1 // pred_fallthru
      _
    // Predicated region
    $region66: #{tpu_custom_call.1} parent=1 // pred_check
      _
    $region67: #{tpu_custom_call.1} parent=1 // pred_check_branch
      %58 = sbr.rel (0) target = $region69
    $region68: #{tpu_custom_call.1} parent=1 // pred_region
      _
    $region69: #{tpu_custom_call.1} parent=1 // pred_fallthru
      _
    // Predicated region
    $region70: #{tpu_custom_call.1} parent=1 // pred_check
      _
    $region71: #{tpu_custom_call.1} parent=1 // pred_check_branch
      %60 = sbr.rel (0) target = $region73
    $region72: #{tpu_custom_call.1} parent=1 // pred_region
      _
    $region73: #{tpu_custom_call.1} parent=1 // pred_fallthru
      _
    // Predicated region
    $region74: #{tpu_custom_call.1} parent=1 // pred_check
      _
    $region75: #{tpu_custom_call.1} parent=1 // pred_check_branch
      %62 = sbr.rel (0) target = $region77
    $region76: #{tpu_custom_call.1} parent=1 // pred_region
      _
    $region77: #{tpu_custom_call.1} parent=1 // pred_fallthru
      _
    %v63 = vld [vmem:[%s0] sm:$0xff]
    %v64 = vld [vmem:[%s0 + $0x8] sm:$0xff]
    %v65 = vmax.f32 %v63, 0.0
    %v66 = vmax.f32 %v64, 0.0
    %v67 = vld [vmem:[%s3] sm:$0xff]
    %v68 = vld [vmem:[%s3 + $0x8] sm:$0xff]
    %v69 = vld [vmem:[%s3 + $0x10] sm:$0xff]
    %v70 = vld [vmem:[%s3 + $0x18] sm:$0xff]
    %v71 = vld [vmem:[%s4] sm:$0x1]
    %v73 = vlaneseq
    %v74 = vshrl.u32 %v73, 7
    %v75 = vsub.s32 0, %v74
    %v76 = vrot.slane %v71, %v75
    %vm78 = vcmask 261120
    %v80 = vsel %vm78, %v65, 0
    %v83 = vsel %vm78, %v66, 0
    %85 = vmatprep.subr.mxu0 0.0
    %86 = vmatpush1.msra.mxu0 %v67
    %87 = vmatprep.subr.mxu0 0.0
    %88 = vmatpush1.msra.mxu0 %v68
    %89 = vmatprep.subr.mxu0 0.0
    %90 = vmatpush1.msra.mxu0 %v69
    %91 = vmatprep.subr.mxu0 0.0
    %92 = vmatpush1.msra.mxu0 %v70
    %93 = vmatprep.subr.mxu0 0.0
    %94 = vmatpush1.msra.mxu0 0.0
    %95 = vmatprep.subr.mxu0 0.0
    %96 = vmatpush1.msra.mxu0 0.0
    %97 = vmatprep.subr.mxu0 0.0
    %98 = vmatpush1.msra.mxu0 0.0
    %99 = vmatprep.subr.mxu0 0.0
    %100 = vmatpush1.msra.mxu0 0.0
    %101 = vmatprep.subr.mxu0 0.0
    %102 = vmatpush1.msra.mxu0 0.0
    %103 = vmatprep.subr.mxu0 0.0
    %104 = vmatpush1.msra.mxu0 0.0
    %105 = vmatprep.subr.mxu0 0.0
    %106 = vmatpush1.msra.mxu0 0.0
    %107 = vmatprep.subr.mxu0 0.0
    %108 = vmatpush1.msra.mxu0 0.0
    %109 = vmatprep.subr.mxu0 0.0
    %110 = vmatpush1.msra.mxu0 0.0
    %111 = vmatprep.subr.mxu0 0.0
    %112 = vmatpush1.msra.mxu0 0.0
    %113 = vmatprep.subr.mxu0 0.0
    %114 = vmatpush1.msra.mxu0 0.0
    %115 = vmatprep.subr.mxu0 0.0
    %116 = vmatpush1.msra.mxu0 0.0
    %117 = vmatprep.subr.mxu0 0.0
    %118 = vmatpush1.msra.mxu0 0.0
    %119 = vmatprep.subr.mxu0 0.0
    %120 = vmatpush1.msra.mxu0 0.0
    %121 = vmatprep.subr.mxu0 0.0
    %122 = vmatpush1.msra.mxu0 0.0
    %123 = vmatprep.subr.mxu0 0.0
    %124 = vmatpush1.msra.mxu0 0.0
    %125 = vmatprep.subr.mxu0 0.0
    %126 = vmatpush1.msra.mxu0 0.0
    %127 = vmatprep.subr.mxu0 0.0
    %128 = vmatpush1.msra.mxu0 0.0
    %129 = vmatprep.subr.mxu0 0.0
    %130 = vmatpush1.msra.mxu0 0.0
    %131 = vmatprep.subr.mxu0 0.0
    %132 = vmatpush1.msra.mxu0 0.0
    %133 = vmatprep.subr.mxu0 0.0
    %134 = vmatpush1.msra.mxu0 0.0
    %135 = vmatprep.subr.mxu0 0.0
    %136 = vmatpush1.msra.mxu0 0.0
    %137 = vmatprep.subr.mxu0 0.0
    %138 = vmatpush1.msra.mxu0 0.0
    %139 = vmatprep.subr.mxu0 0.0
    %140 = vmatpush1.msra.mxu0 0.0
    %141 = vmatprep.subr.mxu0 0.0
    %142 = vmatpush1.msra.mxu0 0.0
    %143 = vmatprep.subr.mxu0 0.0
    %144 = vmatpush1.msra.mxu0 0.0
    %145 = vmatprep.subr.mxu0 0.0
    %146 = vmatpush1.msra.mxu0 0.0
    %147 = vmatprep.subr.mxu0 0.0
    %148 = vmatpush1.msra.mxu0 0.0
    %149 = vmatprep.mubr.f32.mxu0 0.0
    %150 = vmatmul.mubr.f32.gmra.mrb[0].mxu0 %v80
    %v151 = vpop.f32.mrb[0].mxu0
    %v152 = vadd.f32 %v76, %v151
    %v153 = vpop.f32.mrb[0].mxu0
    %154 = vmatprep.mubr.f32.mxu0 0.0
    %155 = vmatmul.mubr.f32.gmra.mrb[0].mxu0 %v83
    %v156 = vpop.f32.mrb[0].mxu0
    %v157 = vadd.f32 %v76, %v156
    %v158 = vpop.f32.mrb[0].mxu0
    %159 = vdwg.mxu0
    %v160 = vld [vmem:[%s1] sm:$0xff]
    %v161 = vld [vmem:[%s1 + $0x8] sm:$0xff]
    %v162 = vmax.f32 %v160, 0.0
    %v163 = vmax.f32 %v161, 0.0
    %v164 = vld [vmem:[%s5] sm:$0xff]
    %v165 = vld [vmem:[%s5 + $0x8] sm:$0xff]
    %v166 = vld [vmem:[%s5 + $0x10] sm:$0xff]
    %v167 = vld [vmem:[%s5 + $0x18] sm:$0xff]
    %v168 = vld [vmem:[%s6] sm:$0x1]
    %v170 = vlaneseq
    %v171 = vshrl.u32 %v170, 7
    %v172 = vsub.s32 0, %v171
    %v173 = vrot.slane %v168, %v172
    %v176 = vsel %vm78, %v162, 0
    %v179 = vsel %vm78, %v163, 0
    %181 = vmatprep.subr.mxu0 0.0
    %182 = vmatpush1.msra.mxu0 %v164
    %183 = vmatprep.subr.mxu0 0.0
    %184 = vmatpush1.msra.mxu0 %v165
    %185 = vmatprep.subr.mxu0 0.0
    %186 = vmatpush1.msra.mxu0 %v166
    %187 = vmatprep.subr.mxu0 0.0
    %188 = vmatpush1.msra.mxu0 %v167
    %189 = vmatprep.subr.mxu0 0.0
    %190 = vmatpush1.msra.mxu0 0.0
    %191 = vmatprep.subr.mxu0 0.0
    %192 = vmatpush1.msra.mxu0 0.0
    %193 = vmatprep.subr.mxu0 0.0
    %194 = vmatpush1.msra.mxu0 0.0
    %195 = vmatprep.subr.mxu0 0.0
    %196 = vmatpush1.msra.mxu0 0.0
    %197 = vmatprep.subr.mxu0 0.0
    %198 = vmatpush1.msra.mxu0 0.0
    %199 = vmatprep.subr.mxu0 0.0
    %200 = vmatpush1.msra.mxu0 0.0
    %201 = vmatprep.subr.mxu0 0.0
    %202 = vmatpush1.msra.mxu0 0.0
    %203 = vmatprep.subr.mxu0 0.0
    %204 = vmatpush1.msra.mxu0 0.0
    %205 = vmatprep.subr.mxu0 0.0
    %206 = vmatpush1.msra.mxu0 0.0
    %207 = vmatprep.subr.mxu0 0.0
    %208 = vmatpush1.msra.mxu0 0.0
    %209 = vmatprep.subr.mxu0 0.0
    %210 = vmatpush1.msra.mxu0 0.0
    %211 = vmatprep.subr.mxu0 0.0
    %212 = vmatpush1.msra.mxu0 0.0
    %213 = vmatprep.subr.mxu0 0.0
    %214 = vmatpush1.msra.mxu0 0.0
    %215 = vmatprep.subr.mxu0 0.0
    %216 = vmatpush1.msra.mxu0 0.0
    %217 = vmatprep.subr.mxu0 0.0
    %218 = vmatpush1.msra.mxu0 0.0
    %219 = vmatprep.subr.mxu0 0.0
    %220 = vmatpush1.msra.mxu0 0.0
    %221 = vmatprep.subr.mxu0 0.0
    %222 = vmatpush1.msra.mxu0 0.0
    %223 = vmatprep.subr.mxu0 0.0
    %224 = vmatpush1.msra.mxu0 0.0
    %225 = vmatprep.subr.mxu0 0.0
    %226 = vmatpush1.msra.mxu0 0.0
    %227 = vmatprep.subr.mxu0 0.0
    %228 = vmatpush1.msra.mxu0 0.0
    %229 = vmatprep.subr.mxu0 0.0
    %230 = vmatpush1.msra.mxu0 0.0
    %231 = vmatprep.subr.mxu0 0.0
    %232 = vmatpush1.msra.mxu0 0.0
    %233 = vmatprep.subr.mxu0 0.0
    %234 = vmatpush1.msra.mxu0 0.0
    %235 = vmatprep.subr.mxu0 0.0
    %236 = vmatpush1.msra.mxu0 0.0
    %237 = vmatprep.subr.mxu0 0.0
    %238 = vmatpush1.msra.mxu0 0.0
    %239 = vmatprep.subr.mxu0 0.0
    %240 = vmatpush1.msra.mxu0 0.0
    %241 = vmatprep.subr.mxu0 0.0
    %242 = vmatpush1.msra.mxu0 0.0
    %243 = vmatprep.subr.mxu0 0.0
    %244 = vmatpush1.msra.mxu0 0.0
    %245 = vmatprep.mubr.f32.mxu0 0.0
    %246 = vmatmul.mubr.f32.gmra.mrb[0].mxu0 %v176
    %v247 = vpop.f32.mrb[0].mxu0
    %v248 = vadd.f32 %v173, %v247
    %v249 = vpop.f32.mrb[0].mxu0
    %250 = vmatprep.mubr.f32.mxu0 0.0
    %251 = vmatmul.mubr.f32.gmra.mrb[0].mxu0 %v179
    %v252 = vpop.f32.mrb[0].mxu0
    %v253 = vadd.f32 %v173, %v252
    %v254 = vpop.f32.mrb[0].mxu0
    %255 = vdwg.mxu0
    %v256 = vld [vmem:[%s2] sm:$0xff]
    %v257 = vld [vmem:[%s2 + $0x8] sm:$0xff]
    %v258 = vmax.f32 %v256, 0.0
    %v259 = vmax.f32 %v257, 0.0
    %v260 = vld [vmem:[%s7] sm:$0xff]
    %v261 = vld [vmem:[%s7 + $0x8] sm:$0xff]
    %v262 = vld [vmem:[%s7 + $0x10] sm:$0xff]
    %v263 = vld [vmem:[%s7 + $0x18] sm:$0xff]
    %v264 = vld [vmem:[%s8] sm:$0x1]
    %v266 = vlaneseq
    %v267 = vshrl.u32 %v266, 7
    %v268 = vsub.s32 0, %v267
    %v269 = vrot.slane %v264, %v268
    %v272 = vsel %vm78, %v258, 0
    %v275 = vsel %vm78, %v259, 0
    %277 = vmatprep.subr.mxu0 0.0
    %278 = vmatpush1.msra.mxu0 %v260
    %279 = vmatprep.subr.mxu0 0.0
    %280 = vmatpush1.msra.mxu0 %v261
    %281 = vmatprep.subr.mxu0 0.0
    %282 = vmatpush1.msra.mxu0 %v262
    %283 = vmatprep.subr.mxu0 0.0
    %284 = vmatpush1.msra.mxu0 %v263
    %285 = vmatprep.subr.mxu0 0.0
    %286 = vmatpush1.msra.mxu0 0.0
    %287 = vmatprep.subr.mxu0 0.0
    %288 = vmatpush1.msra.mxu0 0.0
    %289 = vmatprep.subr.mxu0 0.0
    %290 = vmatpush1.msra.mxu0 0.0
    %291 = vmatprep.subr.mxu0 0.0
    %292 = vmatpush1.msra.mxu0 0.0
    %293 = vmatprep.subr.mxu0 0.0
    %294 = vmatpush1.msra.mxu0 0.0
    %295 = vmatprep.subr.mxu0 0.0
    %296 = vmatpush1.msra.mxu0 0.0
    %297 = vmatprep.subr.mxu0 0.0
    %298 = vmatpush1.msra.mxu0 0.0
    %299 = vmatprep.subr.mxu0 0.0
    %300 = vmatpush1.msra.mxu0 0.0
    %301 = vmatprep.subr.mxu0 0.0
    %302 = vmatpush1.msra.mxu0 0.0
    %303 = vmatprep.subr.mxu0 0.0
    %304 = vmatpush1.msra.mxu0 0.0
    %305 = vmatprep.subr.mxu0 0.0
    %306 = vmatpush1.msra.mxu0 0.0
    %307 = vmatprep.subr.mxu0 0.0
    %308 = vmatpush1.msra.mxu0 0.0
    %309 = vmatprep.subr.mxu0 0.0
    %310 = vmatpush1.msra.mxu0 0.0
    %311 = vmatprep.subr.mxu0 0.0
    %312 = vmatpush1.msra.mxu0 0.0
    %313 = vmatprep.subr.mxu0 0.0
    %314 = vmatpush1.msra.mxu0 0.0
    %315 = vmatprep.subr.mxu0 0.0
    %316 = vmatpush1.msra.mxu0 0.0
    %317 = vmatprep.subr.mxu0 0.0
    %318 = vmatpush1.msra.mxu0 0.0
    %319 = vmatprep.subr.mxu0 0.0
    %320 = vmatpush1.msra.mxu0 0.0
    %321 = vmatprep.subr.mxu0 0.0
    %322 = vmatpush1.msra.mxu0 0.0
    %323 = vmatprep.subr.mxu0 0.0
    %324 = vmatpush1.msra.mxu0 0.0
    %325 = vmatprep.subr.mxu0 0.0
    %326 = vmatpush1.msra.mxu0 0.0
    %327 = vmatprep.subr.mxu0 0.0
    %328 = vmatpush1.msra.mxu0 0.0
    %329 = vmatprep.subr.mxu0 0.0
    %330 = vmatpush1.msra.mxu0 0.0
    %331 = vmatprep.subr.mxu0 0.0
    %332 = vmatpush1.msra.mxu0 0.0
    %333 = vmatprep.subr.mxu0 0.0
    %334 = vmatpush1.msra.mxu0 0.0
    %335 = vmatprep.subr.mxu0 0.0
    %336 = vmatpush1.msra.mxu0 0.0
    %337 = vmatprep.subr.mxu0 0.0
    %338 = vmatpush1.msra.mxu0 0.0
    %339 = vmatprep.subr.mxu0 0.0
    %340 = vmatpush1.msra.mxu0 0.0
    %341 = vmatprep.mubr.f32.mxu0 0.0
    %342 = vmatmul.mubr.f32.gmra.mrb[0].mxu0 %v272
    %v343 = vpop.f32.mrb[0].mxu0
    %v344 = vadd.f32 %v269, %v343
    %v345 = vpop.f32.mrb[0].mxu0
    %346 = vmatprep.mubr.f32.mxu0 0.0
    %347 = vmatmul.mubr.f32.gmra.mrb[0].mxu0 %v275
    %v348 = vpop.f32.mrb[0].mxu0
    %v349 = vadd.f32 %v269, %v348
    %v350 = vpop.f32.mrb[0].mxu0
    %351 = vdwg.mxu0
    %354 = vrot.lane.b32.xlu0 %v248, 32
    %v355 = vpop.permute.xlu0 %354
    %356 = vrot.lane.b32.xlu0 %v253, 32
    %v357 = vpop.permute.xlu0 %356
    %362 = vrot.lane.b32.xlu0 %v152, 32
    %v363 = vpop.permute.xlu0 %362
    %364 = vrot.lane.b32.xlu0 %v157, 32
    %v365 = vpop.permute.xlu0 %364
    %368 = vrot.lane.b32.xlu0 %v248, 64
    %v369 = vpop.permute.xlu0 %368
    %370 = vrot.lane.b32.xlu0 %v253, 64
    %v371 = vpop.permute.xlu0 %370
    %376 = vrot.lane.b32.xlu0 %v344, 64
    %v377 = vpop.permute.xlu0 %376
    %378 = vrot.lane.b32.xlu0 %v349, 64
    %v379 = vpop.permute.xlu0 %378
    %v382 = vsel %vm78, %v152, %v355
    %v383 = vsel %vm78, %v157, %v357
    %vm384 = vcmask 523264
    %v385 = vsel %vm384, %v382, %v363
    %v386 = vsel %vm384, %v383, %v365
    %vm387 = vcmask 785408
    %v388 = vsel %vm387, %v385, %v369
    %v389 = vsel %vm387, %v386, %v371
    %v390 = vsel %vm387, %v344, %v363
    %v391 = vsel %vm387, %v349, %v365
    %v392 = vsel %vm78, %v369, %v377
    %v393 = vsel %vm78, %v371, %v379
    %v394 = vld [vmem:[%s12] sm:$0xff]
    %vm395 = vcmask 64512
    %v397 = vsel %vm395, %v394, 0
    %399 = vmatprep.subr.mxu0 %v390
    %400 = vmatpush1.msra.mxu0 %v388
    %401 = vmatprep.subr.mxu0 0.0
    %402 = vmatpush1.msra.mxu0 0.0
    %403 = vmatprep.subr.mxu0 0.0
    %404 = vmatpush1.msra.mxu0 0.0
    %405 = vmatprep.subr.mxu0 0.0
    %406 = vmatpush1.msra.mxu0 0.0
    %407 = vmatprep.subr.mxu0 0.0
    %408 = vmatpush1.msra.mxu0 0.0
    %409 = vmatprep.subr.mxu0 0.0
    %410 = vmatpush1.msra.mxu0 0.0
    %411 = vmatprep.subr.mxu0 0.0
    %412 = vmatpush1.msra.mxu0 0.0
    %413 = vmatprep.subr.mxu0 0.0
    %414 = vmatpush1.msra.mxu0 0.0
    %415 = vmatprep.subr.mxu0 0.0
    %416 = vmatpush1.msra.mxu0 0.0
    %417 = vmatprep.subr.mxu0 0.0
    %418 = vmatpush1.msra.mxu0 0.0
    %419 = vmatprep.subr.mxu0 0.0
    %420 = vmatpush1.msra.mxu0 0.0
    %421 = vmatprep.subr.mxu0 0.0
    %422 = vmatpush1.msra.mxu0 0.0
    %423 = vmatprep.subr.mxu0 0.0
    %424 = vmatpush1.msra.mxu0 0.0
    %425 = vmatprep.subr.mxu0 0.0
    %426 = vmatpush1.msra.mxu0 0.0
    %427 = vmatprep.subr.mxu0 0.0
    %428 = vmatpush1.msra.mxu0 0.0
    %429 = vmatprep.subr.mxu0 0.0
    %430 = vmatpush1.msra.mxu0 0.0
    %431 = vmatprep.subr.mxu0 0.0
    %432 = vmatpush1.msra.mxu0 0.0
    %433 = vmatprep.subr.mxu0 0.0
    %434 = vmatpush1.msra.mxu0 0.0
    %435 = vmatprep.subr.mxu0 0.0
    %436 = vmatpush1.msra.mxu0 0.0
    %437 = vmatprep.subr.mxu0 0.0
    %438 = vmatpush1.msra.mxu0 0.0
    %439 = vmatprep.subr.mxu0 0.0
    %440 = vmatpush1.msra.mxu0 0.0
    %441 = vmatprep.subr.mxu0 0.0
    %442 = vmatpush1.msra.mxu0 0.0
    %443 = vmatprep.subr.mxu0 0.0
    %444 = vmatpush1.msra.mxu0 0.0
    %445 = vmatprep.subr.mxu0 0.0
    %446 = vmatpush1.msra.mxu0 0.0
    %447 = vmatprep.subr.mxu0 0.0
    %448 = vmatpush1.msra.mxu0 0.0
    %449 = vmatprep.subr.mxu0 0.0
    %450 = vmatpush1.msra.mxu0 0.0
    %451 = vmatprep.subr.mxu0 0.0
    %452 = vmatpush1.msra.mxu0 0.0
    %453 = vmatprep.subr.mxu0 0.0
    %454 = vmatpush1.msra.mxu0 0.0
    %455 = vmatprep.subr.mxu0 0.0
    %456 = vmatpush1.msra.mxu0 0.0
    %457 = vmatprep.subr.mxu0 0.0
    %458 = vmatpush1.msra.mxu0 0.0
    %459 = vmatprep.subr.mxu0 0.0
    %460 = vmatpush1.msra.mxu0 0.0
    %461 = vmatprep.subr.mxu0 0.0
    %462 = vmatpush1.msra.mxu0 0.0
    %463 = vmatprep.mubr.f32.mxu0 0.0
    %464 = vmatmul.mubr.f32.gmra.mrb[0].mxu0 %v397
    %v465 = vpop.f32.mrb[0].mxu0
    %v466 = vadd.f32 0.0, %v465
    %v467 = vpop.f32.mrb[0].mxu0
    %v468 = vadd.f32 0.0, %v467
    %469 = vdwg.mxu0
    %470 = vmatprep.subr.mxu0 0.0
    %471 = vmatpush1.msra.mxu0 %v392
    %472 = vmatprep.subr.mxu0 0.0
    %473 = vmatpush1.msra.mxu0 0.0
    %474 = vmatprep.subr.mxu0 0.0
    %475 = vmatpush1.msra.mxu0 0.0
    %476 = vmatprep.subr.mxu0 0.0
    %477 = vmatpush1.msra.mxu0 0.0
    %478 = vmatprep.subr.mxu0 0.0
    %479 = vmatpush1.msra.mxu0 0.0
    %480 = vmatprep.subr.mxu0 0.0
    %481 = vmatpush1.msra.mxu0 0.0
    %482 = vmatprep.subr.mxu0 0.0
    %483 = vmatpush1.msra.mxu0 0.0
    %484 = vmatprep.subr.mxu0 0.0
    %485 = vmatpush1.msra.mxu0 0.0
    %486 = vmatprep.subr.mxu0 0.0
    %487 = vmatpush1.msra.mxu0 0.0
    %488 = vmatprep.subr.mxu0 0.0
    %489 = vmatpush1.msra.mxu0 0.0
    %490 = vmatprep.subr.mxu0 0.0
    %491 = vmatpush1.msra.mxu0 0.0
    %492 = vmatprep.subr.mxu0 0.0
    %493 = vmatpush1.msra.mxu0 0.0
    %494 = vmatprep.subr.mxu0 0.0
    %495 = vmatpush1.msra.mxu0 0.0
    %496 = vmatprep.subr.mxu0 0.0
    %497 = vmatpush1.msra.mxu0 0.0
    %498 = vmatprep.subr.mxu0 0.0
    %499 = vmatpush1.msra.mxu0 0.0
    %500 = vmatprep.subr.mxu0 0.0
    %501 = vmatpush1.msra.mxu0 0.0
    %502 = vmatprep.subr.mxu0 0.0
    %503 = vmatpush1.msra.mxu0 0.0
    %504 = vmatprep.subr.mxu0 0.0
    %505 = vmatpush1.msra.mxu0 0.0
    %506 = vmatprep.subr.mxu0 0.0
    %507 = vmatpush1.msra.mxu0 0.0
    %508 = vmatprep.subr.mxu0 0.0
    %509 = vmatpush1.msra.mxu0 0.0
    %510 = vmatprep.subr.mxu0 0.0
    %511 = vmatpush1.msra.mxu0 0.0
    %512 = vmatprep.subr.mxu0 0.0
    %513 = vmatpush1.msra.mxu0 0.0
    %514 = vmatprep.subr.mxu0 0.0
    %515 = vmatpush1.msra.mxu0 0.0
    %516 = vmatprep.subr.mxu0 0.0
    %517 = vmatpush1.msra.mxu0 0.0
    %518 = vmatprep.subr.mxu0 0.0
    %519 = vmatpush1.msra.mxu0 0.0
    %520 = vmatprep.subr.mxu0 0.0
    %521 = vmatpush1.msra.mxu0 0.0
    %522 = vmatprep.subr.mxu0 0.0
    %523 = vmatpush1.msra.mxu0 0.0
    %524 = vmatprep.subr.mxu0 0.0
    %525 = vmatpush1.msra.mxu0 0.0
    %526 = vmatprep.subr.mxu0 0.0
    %527 = vmatpush1.msra.mxu0 0.0
    %528 = vmatprep.subr.mxu0 0.0
    %529 = vmatpush1.msra.mxu0 0.0
    %530 = vmatprep.subr.mxu0 0.0
    %531 = vmatpush1.msra.mxu0 0.0
    %532 = vmatprep.subr.mxu0 0.0
    %533 = vmatpush1.msra.mxu0 0.0
    %534 = vmatprep.mubr.f32.mxu0 0.0
    %535 = vmatmul.mubr.f32.gmra.mrb[0].mxu0 %v397
    %v536 = vpop.f32.mrb[0].mxu0
    %v537 = vadd.f32 0.0, %v536
    %v538 = vpop.f32.mrb[0].mxu0
    %539 = vdwg.mxu0
    %540 = vmatprep.subr.mxu0 %v391
    %541 = vmatpush1.msra.mxu0 %v389
    %542 = vmatprep.subr.mxu0 0.0
    %543 = vmatpush1.msra.mxu0 0.0
    %544 = vmatprep.subr.mxu0 0.0
    %545 = vmatpush1.msra.mxu0 0.0
    %546 = vmatprep.subr.mxu0 0.0
    %547 = vmatpush1.msra.mxu0 0.0
    %548 = vmatprep.subr.mxu0 0.0
    %549 = vmatpush1.msra.mxu0 0.0
    %550 = vmatprep.subr.mxu0 0.0
    %551 = vmatpush1.msra.mxu0 0.0
    %552 = vmatprep.subr.mxu0 0.0
    %553 = vmatpush1.msra.mxu0 0.0
    %554 = vmatprep.subr.mxu0 0.0
    %555 = vmatpush1.msra.mxu0 0.0
    %556 = vmatprep.subr.mxu0 0.0
    %557 = vmatpush1.msra.mxu0 0.0
    %558 = vmatprep.subr.mxu0 0.0
    %559 = vmatpush1.msra.mxu0 0.0
    %560 = vmatprep.subr.mxu0 0.0
    %561 = vmatpush1.msra.mxu0 0.0
    %562 = vmatprep.subr.mxu0 0.0
    %563 = vmatpush1.msra.mxu0 0.0
    %564 = vmatprep.subr.mxu0 0.0
    %565 = vmatpush1.msra.mxu0 0.0
    %566 = vmatprep.subr.mxu0 0.0
    %567 = vmatpush1.msra.mxu0 0.0
    %568 = vmatprep.subr.mxu0 0.0
    %569 = vmatpush1.msra.mxu0 0.0
    %570 = vmatprep.subr.mxu0 0.0
    %571 = vmatpush1.msra.mxu0 0.0
    %572 = vmatprep.subr.mxu0 0.0
    %573 = vmatpush1.msra.mxu0 0.0
    %574 = vmatprep.subr.mxu0 0.0
    %575 = vmatpush1.msra.mxu0 0.0
    %576 = vmatprep.subr.mxu0 0.0
    %577 = vmatpush1.msra.mxu0 0.0
    %578 = vmatprep.subr.mxu0 0.0
    %579 = vmatpush1.msra.mxu0 0.0
    %580 = vmatprep.subr.mxu0 0.0
    %581 = vmatpush1.msra.mxu0 0.0
    %582 = vmatprep.subr.mxu0 0.0
    %583 = vmatpush1.msra.mxu0 0.0
    %584 = vmatprep.subr.mxu0 0.0
    %585 = vmatpush1.msra.mxu0 0.0
    %586 = vmatprep.subr.mxu0 0.0
    %587 = vmatpush1.msra.mxu0 0.0
    %588 = vmatprep.subr.mxu0 0.0
    %589 = vmatpush1.msra.mxu0 0.0
    %590 = vmatprep.subr.mxu0 0.0
    %591 = vmatpush1.msra.mxu0 0.0
    %592 = vmatprep.subr.mxu0 0.0
    %593 = vmatpush1.msra.mxu0 0.0
    %594 = vmatprep.subr.mxu0 0.0
    %595 = vmatpush1.msra.mxu0 0.0
    %596 = vmatprep.subr.mxu0 0.0
    %597 = vmatpush1.msra.mxu0 0.0
    %598 = vmatprep.subr.mxu0 0.0
    %599 = vmatpush1.msra.mxu0 0.0
    %600 = vmatprep.subr.mxu0 0.0
    %601 = vmatpush1.msra.mxu0 0.0
    %602 = vmatprep.subr.mxu0 0.0
    %603 = vmatpush1.msra.mxu0 0.0
    %604 = vmatprep.mubr.f32.mxu0 0.0
    %605 = vmatmul.mubr.f32.gmra.mrb[0].mxu0 %v397
    %v606 = vpop.f32.mrb[0].mxu0
    %v607 = vadd.f32 0.0, %v606
    %v608 = vpop.f32.mrb[0].mxu0
    %v609 = vadd.f32 0.0, %v608
    %610 = vdwg.mxu0
    %611 = vmatprep.subr.mxu0 0.0
    %612 = vmatpush1.msra.mxu0 %v393
    %613 = vmatprep.subr.mxu0 0.0
    %614 = vmatpush1.msra.mxu0 0.0
    %615 = vmatprep.subr.mxu0 0.0
    %616 = vmatpush1.msra.mxu0 0.0
    %617 = vmatprep.subr.mxu0 0.0
    %618 = vmatpush1.msra.mxu0 0.0
    %619 = vmatprep.subr.mxu0 0.0
    %620 = vmatpush1.msra.mxu0 0.0
    %621 = vmatprep.subr.mxu0 0.0
    %622 = vmatpush1.msra.mxu0 0.0
    %623 = vmatprep.subr.mxu0 0.0
    %624 = vmatpush1.msra.mxu0 0.0
    %625 = vmatprep.subr.mxu0 0.0
    %626 = vmatpush1.msra.mxu0 0.0
    %627 = vmatprep.subr.mxu0 0.0
    %628 = vmatpush1.msra.mxu0 0.0
    %629 = vmatprep.subr.mxu0 0.0
    %630 = vmatpush1.msra.mxu0 0.0
    %631 = vmatprep.subr.mxu0 0.0
    %632 = vmatpush1.msra.mxu0 0.0
    %633 = vmatprep.subr.mxu0 0.0
    %634 = vmatpush1.msra.mxu0 0.0
    %635 = vmatprep.subr.mxu0 0.0
    %636 = vmatpush1.msra.mxu0 0.0
    %637 = vmatprep.subr.mxu0 0.0
    %638 = vmatpush1.msra.mxu0 0.0
    %639 = vmatprep.subr.mxu0 0.0
    %640 = vmatpush1.msra.mxu0 0.0
    %641 = vmatprep.subr.mxu0 0.0
    %642 = vmatpush1.msra.mxu0 0.0
    %643 = vmatprep.subr.mxu0 0.0
    %644 = vmatpush1.msra.mxu0 0.0
    %645 = vmatprep.subr.mxu0 0.0
    %646 = vmatpush1.msra.mxu0 0.0
    %647 = vmatprep.subr.mxu0 0.0
    %648 = vmatpush1.msra.mxu0 0.0
    %649 = vmatprep.subr.mxu0 0.0
    %650 = vmatpush1.msra.mxu0 0.0
    %651 = vmatprep.subr.mxu0 0.0
    %652 = vmatpush1.msra.mxu0 0.0
    %653 = vmatprep.subr.mxu0 0.0
    %654 = vmatpush1.msra.mxu0 0.0
    %655 = vmatprep.subr.mxu0 0.0
    %656 = vmatpush1.msra.mxu0 0.0
    %657 = vmatprep.subr.mxu0 0.0
    %658 = vmatpush1.msra.mxu0 0.0
    %659 = vmatprep.subr.mxu0 0.0
    %660 = vmatpush1.msra.mxu0 0.0
    %661 = vmatprep.subr.mxu0 0.0
    %662 = vmatpush1.msra.mxu0 0.0
    %663 = vmatprep.subr.mxu0 0.0
    %664 = vmatpush1.msra.mxu0 0.0
    %665 = vmatprep.subr.mxu0 0.0
    %666 = vmatpush1.msra.mxu0 0.0
    %667 = vmatprep.subr.mxu0 0.0
    %668 = vmatpush1.msra.mxu0 0.0
    %669 = vmatprep.subr.mxu0 0.0
    %670 = vmatpush1.msra.mxu0 0.0
    %671 = vmatprep.subr.mxu0 0.0
    %672 = vmatpush1.msra.mxu0 0.0
    %673 = vmatprep.subr.mxu0 0.0
    %674 = vmatpush1.msra.mxu0 0.0
    %675 = vmatprep.mubr.f32.mxu0 0.0
    %676 = vmatmul.mubr.f32.gmra.mrb[0].mxu0 %v397
    %v677 = vpop.f32.mrb[0].mxu0
    %v678 = vadd.f32 0.0, %v677
    %v679 = vpop.f32.mrb[0].mxu0
    %680 = vdwg.mxu0
    %v681 = vld [vmem:[%s11] sm:$0x7]
    %v682 = vsub.f32 %v466, %v388
    %v683 = vsub.f32 %v468, %v390
    %v684 = vsub.f32 %v537, %v392
    %v685 = vsub.f32 %v607, %v389
    %v686 = vsub.f32 %v609, %v391
    %v687 = vsub.f32 %v678, %v393
    %v689 = vlaneseq
    %v690 = vshrl.u32 %v689, 7
    %v691 = vsub.s32 0, %v690
    %v692 = vrot.slane %v681, %v691
    %v693 = vlaneseq
    %v694 = vshrl.u32 %v693, 7
    %v695 = vsub.s32 1, %v694
    %v696 = vrot.slane %v681, %v695
    %v697 = vlaneseq
    %v698 = vshrl.u32 %v697, 7
    %v699 = vsub.s32 2, %v698
    %v700 = vrot.slane %v681, %v699
    %v704 = vmul.f32 %v692, %v682
    %v705 = vmul.f32 %v696, %v683
    %v706 = vmul.f32 %v700, %v684
    %v707 = vmul.f32 %v692, %v685
    %v708 = vmul.f32 %v696, %v686
    %v709 = vmul.f32 %v700, %v687
    %v710 = vadd.f32 %v388, %v704
    %v711 = vadd.f32 %v390, %v705
    %v712 = vadd.f32 %v392, %v706
    %v713 = vadd.f32 %v389, %v707
    %v714 = vadd.f32 %v391, %v708
    %v715 = vadd.f32 %v393, %v709
    %v716 = vld [vmem:[%s9] sm:$0xff]
    %v717 = vld [vmem:[%s9 + $0x8] sm:$0xff]
    %v718 = vld [vmem:[%s9 + $0x10] sm:$0xff]
    %v719 = vld [vmem:[%s9 + $0x18] sm:$0xff]
    %v720 = vld [vmem:[%s9 + $0x20] sm:$0xff]
    %v721 = vld [vmem:[%s9 + $0x28] sm:$0xff]
    %v722 = vld [vmem:[%s9 + $0x30] sm:$0xff]
    %v723 = vld [vmem:[%s9 + $0x38] sm:$0xff]
    %v724 = vld [vmem:[%s9 + $0x40] sm:$0xff]
    %v725 = vld [vmem:[%s9 + $0x48] sm:$0xff]
    %v726 = vld [vmem:[%s9 + $0x50] sm:$0xff]
    %v727 = vld [vmem:[%s9 + $0x58] sm:$0xff]
    %v728 = vld [vmem:[%s9 + $0x60] sm:$0xff]
    %v729 = vld [vmem:[%s9 + $0x68] sm:$0xff]
    %v730 = vld [vmem:[%s9 + $0x70] sm:$0xff]
    %v731 = vld [vmem:[%s9 + $0x78] sm:$0xff]
    %v732 = vld [vmem:[%s9 + $0x80] sm:$0xff]
    %v733 = vld [vmem:[%s9 + $0x88] sm:$0xff]
    %v734 = vld [vmem:[%s9 + $0x90] sm:$0xff]
    %v735 = vld [vmem:[%s9 + $0x98] sm:$0xff]
    %v736 = vld [vmem:[%s9 + $0xa0] sm:$0xff]
    %v737 = vld [vmem:[%s9 + $0xa8] sm:$0xff]
    %v738 = vld [vmem:[%s9 + $0xb0] sm:$0xff]
    %v739 = vld [vmem:[%s9 + $0xb8] sm:$0xff]
    %v740 = vld [vmem:[%s9 + $0xc0] sm:$0xff]
    %v741 = vld [vmem:[%s9 + $0xc8] sm:$0xff]
    %v742 = vld [vmem:[%s9 + $0xd0] sm:$0xff]
    %v743 = vld [vmem:[%s9 + $0xd8] sm:$0xff]
    %v744 = vld [vmem:[%s9 + $0xe0] sm:$0xff]
    %v745 = vld [vmem:[%s9 + $0xe8] sm:$0xff]
    %v746 = vld [vmem:[%s9 + $0xf0] sm:$0xff]
    %v747 = vld [vmem:[%s9 + $0xf8] sm:$0xff]
    %v748 = vld [vmem:[%s9 + $0x100] sm:$0xff]
    %v749 = vld [vmem:[%s9 + $0x108] sm:$0xff]
    %v750 = vld [vmem:[%s9 + $0x110] sm:$0xff]
    %v751 = vld [vmem:[%s9 + $0x118] sm:$0xff]
    %v752 = vld [vmem:[%s9 + $0x120] sm:$0xff]
    %v753 = vld [vmem:[%s9 + $0x128] sm:$0xff]
    %v754 = vld [vmem:[%s9 + $0x130] sm:$0xff]
    %v755 = vld [vmem:[%s9 + $0x138] sm:$0xff]
    %v756 = vld [vmem:[%s9 + $0x140] sm:$0xff]
    %v757 = vld [vmem:[%s9 + $0x148] sm:$0xff]
    %v758 = vld [vmem:[%s9 + $0x150] sm:$0xff]
    %v759 = vld [vmem:[%s9 + $0x158] sm:$0xff]
    %v760 = vld [vmem:[%s9 + $0x160] sm:$0xff]
    %v761 = vld [vmem:[%s9 + $0x168] sm:$0xff]
    %v762 = vld [vmem:[%s9 + $0x170] sm:$0xff]
    %v763 = vld [vmem:[%s9 + $0x178] sm:$0xff]
    %v764 = vld [vmem:[%s10] sm:$0x1]
    %v766 = vlaneseq
    %v767 = vshrl.u32 %v766, 7
    %v768 = vsub.s32 0, %v767
    %v769 = vrot.slane %v764, %v768
    %770 = vmatprep.subr.mxu0 %v717
    %771 = vmatpush1.msra.mxu0 %v716
    %772 = vmatprep.subr.mxu0 %v720
    %773 = vmatpush1.msra.mxu0 %v719
    %774 = vmatprep.subr.mxu0 %v723
    %775 = vmatpush1.msra.mxu0 %v722
    %776 = vmatprep.subr.mxu0 %v726
    %777 = vmatpush1.msra.mxu0 %v725
    %778 = vmatprep.subr.mxu0 %v729
    %779 = vmatpush1.msra.mxu0 %v728
    %780 = vmatprep.subr.mxu0 %v732
    %781 = vmatpush1.msra.mxu0 %v731
    %782 = vmatprep.subr.mxu0 %v735
    %783 = vmatpush1.msra.mxu0 %v734
    %784 = vmatprep.subr.mxu0 %v738
    %785 = vmatpush1.msra.mxu0 %v737
    %786 = vmatprep.subr.mxu0 %v741
    %787 = vmatpush1.msra.mxu0 %v740
    %788 = vmatprep.subr.mxu0 %v744
    %789 = vmatpush1.msra.mxu0 %v743
    %790 = vmatprep.subr.mxu0 %v747
    %791 = vmatpush1.msra.mxu0 %v746
    %792 = vmatprep.subr.mxu0 %v750
    %793 = vmatpush1.msra.mxu0 %v749
    %794 = vmatprep.subr.mxu0 %v753
    %795 = vmatpush1.msra.mxu0 %v752
    %796 = vmatprep.subr.mxu0 %v756
    %797 = vmatpush1.msra.mxu0 %v755
    %798 = vmatprep.subr.mxu0 %v759
    %799 = vmatpush1.msra.mxu0 %v758
    %800 = vmatprep.subr.mxu0 %v762
    %801 = vmatpush1.msra.mxu0 %v761
    %802 = vmatprep.subr.mxu0 0.0
    %803 = vmatpush1.msra.mxu0 0.0
    %804 = vmatprep.subr.mxu0 0.0
    %805 = vmatpush1.msra.mxu0 0.0
    %806 = vmatprep.subr.mxu0 0.0
    %807 = vmatpush1.msra.mxu0 0.0
    %808 = vmatprep.subr.mxu0 0.0
    %809 = vmatpush1.msra.mxu0 0.0
    %810 = vmatprep.subr.mxu0 0.0
    %811 = vmatpush1.msra.mxu0 0.0
    %812 = vmatprep.subr.mxu0 0.0
    %813 = vmatpush1.msra.mxu0 0.0
    %814 = vmatprep.subr.mxu0 0.0
    %815 = vmatpush1.msra.mxu0 0.0
    %816 = vmatprep.subr.mxu0 0.0
    %817 = vmatpush1.msra.mxu0 0.0
    %818 = vmatprep.subr.mxu0 0.0
    %819 = vmatpush1.msra.mxu0 0.0
    %820 = vmatprep.subr.mxu0 0.0
    %821 = vmatpush1.msra.mxu0 0.0
    %822 = vmatprep.subr.mxu0 0.0
    %823 = vmatpush1.msra.mxu0 0.0
    %824 = vmatprep.subr.mxu0 0.0
    %825 = vmatpush1.msra.mxu0 0.0
    %826 = vmatprep.subr.mxu0 0.0
    %827 = vmatpush1.msra.mxu0 0.0
    %828 = vmatprep.subr.mxu0 0.0
    %829 = vmatpush1.msra.mxu0 0.0
    %830 = vmatprep.subr.mxu0 0.0
    %831 = vmatpush1.msra.mxu0 0.0
    %832 = vmatprep.subr.mxu0 0.0
    %833 = vmatpush1.msra.mxu0 0.0
    %834 = vmatprep.mubr.f32.mxu0 0.0
    %835 = vmatmul.mubr.f32.gmra.mrb[0].mxu0 0.0
    %v836 = vpop.f32.mrb[0].mxu0
    %v837 = vadd.f32 0.0, %v836
    %v838 = vpop.f32.mrb[0].mxu0
    %v839 = vadd.f32 0.0, %v838
    %840 = vdwg.mxu0
    %841 = vmatprep.subr.mxu0 0.0
    %842 = vmatpush1.msra.mxu0 %v718
    %843 = vmatprep.subr.mxu0 0.0
    %844 = vmatpush1.msra.mxu0 %v721
    %845 = vmatprep.subr.mxu0 0.0
    %846 = vmatpush1.msra.mxu0 %v724
    %847 = vmatprep.subr.mxu0 0.0
    %848 = vmatpush1.msra.mxu0 %v727
    %849 = vmatprep.subr.mxu0 0.0
    %850 = vmatpush1.msra.mxu0 %v730
    %851 = vmatprep.subr.mxu0 0.0
    %852 = vmatpush1.msra.mxu0 %v733
    %853 = vmatprep.subr.mxu0 0.0
    %854 = vmatpush1.msra.mxu0 %v736
    %855 = vmatprep.subr.mxu0 0.0
    %856 = vmatpush1.msra.mxu0 %v739
    %857 = vmatprep.subr.mxu0 0.0
    %858 = vmatpush1.msra.mxu0 %v742
    %859 = vmatprep.subr.mxu0 0.0
    %860 = vmatpush1.msra.mxu0 %v745
    %861 = vmatprep.subr.mxu0 0.0
    %862 = vmatpush1.msra.mxu0 %v748
    %863 = vmatprep.subr.mxu0 0.0
    %864 = vmatpush1.msra.mxu0 %v751
    %865 = vmatprep.subr.mxu0 0.0
    %866 = vmatpush1.msra.mxu0 %v754
    %867 = vmatprep.subr.mxu0 0.0
    %868 = vmatpush1.msra.mxu0 %v757
    %869 = vmatprep.subr.mxu0 0.0
    %870 = vmatpush1.msra.mxu0 %v760
    %871 = vmatprep.subr.mxu0 0.0
    %872 = vmatpush1.msra.mxu0 %v763
    %873 = vmatprep.subr.mxu0 0.0
    %874 = vmatpush1.msra.mxu0 0.0
    %875 = vmatprep.subr.mxu0 0.0
    %876 = vmatpush1.msra.mxu0 0.0
    %877 = vmatprep.subr.mxu0 0.0
    %878 = vmatpush1.msra.mxu0 0.0
    %879 = vmatprep.subr.mxu0 0.0
    %880 = vmatpush1.msra.mxu0 0.0
    %881 = vmatprep.subr.mxu0 0.0
    %882 = vmatpush1.msra.mxu0 0.0
    %883 = vmatprep.subr.mxu0 0.0
    %884 = vmatpush1.msra.mxu0 0.0
    %885 = vmatprep.subr.mxu0 0.0
    %886 = vmatpush1.msra.mxu0 0.0
    %887 = vmatprep.subr.mxu0 0.0
    %888 = vmatpush1.msra.mxu0 0.0
    %889 = vmatprep.subr.mxu0 0.0
    %890 = vmatpush1.msra.mxu0 0.0
    %891 = vmatprep.subr.mxu0 0.0
    %892 = vmatpush1.msra.mxu0 0.0
    %893 = vmatprep.subr.mxu0 0.0
    %894 = vmatpush1.msra.mxu0 0.0
    %895 = vmatprep.subr.mxu0 0.0
    %896 = vmatpush1.msra.mxu0 0.0
    %897 = vmatprep.subr.mxu0 0.0
    %898 = vmatpush1.msra.mxu0 0.0
    %899 = vmatprep.subr.mxu0 0.0
    %900 = vmatpush1.msra.mxu0 0.0
    %901 = vmatprep.subr.mxu0 0.0
    %902 = vmatpush1.msra.mxu0 0.0
    %903 = vmatprep.subr.mxu0 0.0
    %904 = vmatpush1.msra.mxu0 0.0
    %905 = vmatprep.mubr.f32.mxu0 0.0
    %906 = vmatmul.mubr.f32.gmra.mrb[0].mxu0 0.0
    %v907 = vpop.f32.mrb[0].mxu0
    %v908 = vadd.f32 0.0, %v907
    %v909 = vpop.f32.mrb[0].mxu0
    %910 = vdwg.mxu0
    %v913 = vrot.slane %v837, 1
    %v914 = vrot.slane %v839, 1
    %v919 = vadd.f32 %v710, %v837
    %v920 = vadd.f32 %v711, %v839
    %v921 = vadd.f32 %v713, %v913
    %v922 = vadd.f32 %v714, %v914
    %v923 = vxor.u32 %v919, 2147483648
    %v924 = vxor.u32 %v920, 2147483648
    %v925 = vxor.u32 %v921, 2147483648
    %v926 = vxor.u32 %v922, 2147483648
    %v927 = vmul.f32 %v923, 1.442695
    %v928 = vpow.pop %v927
    %v929 = vmul.f32 %v924, 1.442695
    %v930 = vpow.pop %v929
    %v931 = vmul.f32 %v925, 1.442695
    %v932 = vpow.pop %v931
    %v933 = vmul.f32 %v926, 1.442695
    %v934 = vpow.pop %v933
    %v935 = vadd.f32 %v928, 1.0
    %v936 = vadd.f32 %v930, 1.0
    %v937 = vadd.f32 %v932, 1.0
    %v938 = vadd.f32 %v934, 1.0
    %v939 = vrcp.pop %v935
    %v940 = vmul.f32 1.0, %v939
    %v941 = vrcp.pop %v936
    %v942 = vmul.f32 1.0, %v941
    %v943 = vrcp.pop %v937
    %v944 = vmul.f32 1.0, %v943
    %v945 = vrcp.pop %v938
    %v946 = vmul.f32 1.0, %v945
    %v949 = vrot.slane %v944, 7
    %vm950 = vcmask 1041409
    %v951 = vsel %vm950, %v949, %v940
    %v953 = vsel %vm384, %v951, 1.0
    %954 = vrot.lane.b32.xlu0 %v769, 96
    %v955 = vpop.permute.xlu0 %954
    %v957 = vadd.f32 %v839, %v955
    %v958 = vadd.f32 %v908, %v955
    %961 = vrot.lane.b32.xlu0 %v957, 32
    %v962 = vpop.permute.xlu0 %961
    %963 = vrot.lane.b32.xlu0 %v958, 32
    %v964 = vpop.permute.xlu0 %963
    %v965 = vsel %vm78, %v962, %v964
    %v967 = vmul.f32 %v953, %v965
    %v969 = vrot.slane %v967, 1
    %970 = vrot.lane.b32.xlu0 %v967, 96
    %v971 = vpop.permute.xlu0 %970
    %972 = vrot.lane.b32.xlu0 %v969, 96
    %v973 = vpop.permute.xlu0 %972
    %v976 = vadd.f32 %v711, %v971
    %v977 = vadd.f32 %v712, %v971
    %v978 = vadd.f32 %v714, %v973
    %v979 = vadd.f32 %v715, %v973
    %v980 = vtanh.pop %v976
    %v981 = vtanh.pop %v977
    %v982 = vtanh.pop %v978
    %v983 = vtanh.pop %v979
    %v984 = vsub.f32 0.0, %v980
    %v985 = vsub.f32 0.0, %v982
    %988 = vrot.lane.b32.xlu0 %v984, 96
    %v989 = vpop.permute.xlu0 %988
    %990 = vrot.lane.b32.xlu0 %v985, 96
    %v991 = vpop.permute.xlu0 %990
    %v994 = vmul.f32 %v940, %v989
    %v995 = vmul.f32 %v944, %v991
    %998 = vrot.lane.b32.xlu0 %v994, 32
    %v999 = vpop.permute.xlu0 %998
    %1000 = vrot.lane.b32.xlu0 %v995, 32
    %v1001 = vpop.permute.xlu0 %1000
    %v1004 = vadd.f32 %v980, %v999
    %v1005 = vadd.f32 %v982, %v1001
    %v1006 = vsub.f32 0.0, %v981
    %v1007 = vsub.f32 0.0, %v983
    %1010 = vrot.lane.b32.xlu0 %v1006, 96
    %v1011 = vpop.permute.xlu0 %1010
    %1012 = vrot.lane.b32.xlu0 %v1007, 96
    %v1013 = vpop.permute.xlu0 %1012
    %v1016 = vmul.f32 %v940, %v1011
    %v1017 = vmul.f32 %v944, %v1013
    %1020 = vrot.lane.b32.xlu0 %v1016, 32
    %v1021 = vpop.permute.xlu0 %1020
    %1022 = vrot.lane.b32.xlu0 %v1017, 32
    %v1023 = vpop.permute.xlu0 %1022
    %v1026 = vadd.f32 %v981, %v1021
    %v1027 = vadd.f32 %v983, %v1023
    %v1028 = vmul.f32 %v942, 0.0
    %v1029 = vmul.f32 %v946, 0.0
    %1032 = vrot.lane.b32.xlu0 %v981, 96
    %v1033 = vpop.permute.xlu0 %1032
    %1034 = vrot.lane.b32.xlu0 %v983, 96
    %v1035 = vpop.permute.xlu0 %1034
    %v1038 = vmul.f32 %v942, %v1033
    %v1039 = vmul.f32 %v946, %v1035
    %1042 = vrot.lane.b32.xlu0 %v1038, 32
    %v1043 = vpop.permute.xlu0 %1042
    %1044 = vrot.lane.b32.xlu0 %v1039, 32
    %v1045 = vpop.permute.xlu0 %1044
    %v1048 = vadd.f32 %v1028, %v1043
    %v1049 = vadd.f32 %v1029, %v1045
    %v1050 = vtanh.pop %v1048
    %v1051 = vtanh.pop %v1049
    %1054 = vrot.lane.b32.xlu0 %v1050, 32
    %v1055 = vpop.permute.xlu0 %1054
    %1056 = vrot.lane.b32.xlu0 %v1051, 32
    %v1057 = vpop.permute.xlu0 %1056
    %v1060 = vmul.f32 %v942, %v1055
    %v1061 = vmul.f32 %v946, %v1057
    %v1064 = vrot.slane %v1005, 7
    %v1065 = vsel %vm950, %v1064, %v1004
    %1066 = vrot.lane.b32.xlu0 %v1065, 32
    %v1067 = vpop.permute.xlu0 %1066
    %v1071 = vrot.slane %v1027, 7
    %v1072 = vsel %vm950, %v1071, %v1026
    %1073 = vrot.lane.b32.xlu0 %v1072, 32
    %v1074 = vpop.permute.xlu0 %1073
    %v1078 = vrot.slane %v1061, 7
    %v1079 = vsel %vm950, %v1078, %v1060
    %v1083 = vrot.slane %v1049, 7
    %v1084 = vsel %vm950, %v1083, %v1048
    %1085 = vrot.lane.b32.xlu0 %v1084, 64
    %v1086 = vpop.permute.xlu0 %1085
    %v1088 = vsel %vm78, %v1067, %v1074
    %v1089 = vsel %vm384, %v1088, %v1079
    %v1090 = vsel %vm387, %v1089, %v1086
    %v1093 = vunpack.c.l.s4 1966171168
    %v1094 = vunpack.c.0.s8 %v1093
    %v1095 = vlaneseq
    %v1096 = vshrl.u32 %v1095, 7
    %v1097 = vsub.s32 %v1094, %v1096
    %v1098 = vrot.slane %v1090, %v1097
    %v1099 = vcombine.high %v1098, %v1098
    %v1101 = vunpack.c.l.s4 1966171168
    %v1102 = vunpack.c.0.s8 %v1101
    %v1103 = vlaneseq
    %v1104 = vshrl.u32 %v1103, 7
    %v1105 = vsub.s32 %v1102, %v1104
    %v1106 = vrot.slane %v1098, %v1105
    %v1108 = vunpack.c.l.s4 1966171168
    %v1109 = vunpack.c.0.s8 %v1108
    %v1110 = vlaneseq
    %v1111 = vshrl.u32 %v1110, 7
    %v1112 = vsub.s32 %v1109, %v1111
    %v1113 = vrot.slane %v1099, %v1112
    %1116 = vst [vmem:[#allocation2] sm:$0x1] %v1106
    %1117 = vst [vmem:[#allocation2 + $0x8] sm:$0x1] %v1113
    %1118 = vmatprep.subr.mxu0 %v717
    %1119 = vmatpush1.msra.mxu0 %v716
    %1120 = vmatprep.subr.mxu0 %v720
    %1121 = vmatpush1.msra.mxu0 %v719
    %1122 = vmatprep.subr.mxu0 %v723
    %1123 = vmatpush1.msra.mxu0 %v722
    %1124 = vmatprep.subr.mxu0 %v726
    %1125 = vmatpush1.msra.mxu0 %v725
    %1126 = vmatprep.subr.mxu0 %v729
    %1127 = vmatpush1.msra.mxu0 %v728
    %1128 = vmatprep.subr.mxu0 %v732
    %1129 = vmatpush1.msra.mxu0 %v731
    %1130 = vmatprep.subr.mxu0 %v735
    %1131 = vmatpush1.msra.mxu0 %v734
    %1132 = vmatprep.subr.mxu0 %v738
    %1133 = vmatpush1.msra.mxu0 %v737
    %1134 = vmatprep.subr.mxu0 %v741
    %1135 = vmatpush1.msra.mxu0 %v740
    %1136 = vmatprep.subr.mxu0 %v744
    %1137 = vmatpush1.msra.mxu0 %v743
    %1138 = vmatprep.subr.mxu0 %v747
    %1139 = vmatpush1.msra.mxu0 %v746
    %1140 = vmatprep.subr.mxu0 %v750
    %1141 = vmatpush1.msra.mxu0 %v749
    %1142 = vmatprep.subr.mxu0 %v753
    %1143 = vmatpush1.msra.mxu0 %v752
    %1144 = vmatprep.subr.mxu0 %v756
    %1145 = vmatpush1.msra.mxu0 %v755
    %1146 = vmatprep.subr.mxu0 %v759
    %1147 = vmatpush1.msra.mxu0 %v758
    %1148 = vmatprep.subr.mxu0 %v762
    %1149 = vmatpush1.msra.mxu0 %v761
    %1150 = vmatprep.subr.mxu0 0.0
    %1151 = vmatpush1.msra.mxu0 0.0
    %1152 = vmatprep.subr.mxu0 0.0
    %1153 = vmatpush1.msra.mxu0 0.0
    %1154 = vmatprep.subr.mxu0 0.0
    %1155 = vmatpush1.msra.mxu0 0.0
    %1156 = vmatprep.subr.mxu0 0.0
    %1157 = vmatpush1.msra.mxu0 0.0
    %1158 = vmatprep.subr.mxu0 0.0
    %1159 = vmatpush1.msra.mxu0 0.0
    %1160 = vmatprep.subr.mxu0 0.0
    %1161 = vmatpush1.msra.mxu0 0.0
    %1162 = vmatprep.subr.mxu0 0.0
    %1163 = vmatpush1.msra.mxu0 0.0
    %1164 = vmatprep.subr.mxu0 0.0
    %1165 = vmatpush1.msra.mxu0 0.0
    %1166 = vmatprep.subr.mxu0 0.0
    %1167 = vmatpush1.msra.mxu0 0.0
    %1168 = vmatprep.subr.mxu0 0.0
    %1169 = vmatpush1.msra.mxu0 0.0
    %1170 = vmatprep.subr.mxu0 0.0
    %1171 = vmatpush1.msra.mxu0 0.0
    %1172 = vmatprep.subr.mxu0 0.0
    %1173 = vmatpush1.msra.mxu0 0.0
    %1174 = vmatprep.subr.mxu0 0.0
    %1175 = vmatpush1.msra.mxu0 0.0
    %1176 = vmatprep.subr.mxu0 0.0
    %1177 = vmatpush1.msra.mxu0 0.0
    %1178 = vmatprep.subr.mxu0 0.0
    %1179 = vmatpush1.msra.mxu0 0.0
    %1180 = vmatprep.subr.mxu0 0.0
    %1181 = vmatpush1.msra.mxu0 0.0
    %1182 = vmatprep.mubr.f32.mxu0 0.0
    %1183 = vmatmul.mubr.f32.gmra.mrb[0].mxu0 %v1090
    %v1184 = vpop.f32.mrb[0].mxu0
    %v1185 = vadd.f32 0.0, %v1184
    %v1186 = vpop.f32.mrb[0].mxu0
    %v1187 = vadd.f32 0.0, %v1186
    %1188 = vdwg.mxu0
    %1189 = vmatprep.subr.mxu0 0.0
    %1190 = vmatpush1.msra.mxu0 %v718
    %1191 = vmatprep.subr.mxu0 0.0
    %1192 = vmatpush1.msra.mxu0 %v721
    %1193 = vmatprep.subr.mxu0 0.0
    %1194 = vmatpush1.msra.mxu0 %v724
    %1195 = vmatprep.subr.mxu0 0.0
    %1196 = vmatpush1.msra.mxu0 %v727
    %1197 = vmatprep.subr.mxu0 0.0
    %1198 = vmatpush1.msra.mxu0 %v730
    %1199 = vmatprep.subr.mxu0 0.0
    %1200 = vmatpush1.msra.mxu0 %v733
    %1201 = vmatprep.subr.mxu0 0.0
    %1202 = vmatpush1.msra.mxu0 %v736
    %1203 = vmatprep.subr.mxu0 0.0
    %1204 = vmatpush1.msra.mxu0 %v739
    %1205 = vmatprep.subr.mxu0 0.0
    %1206 = vmatpush1.msra.mxu0 %v742
    %1207 = vmatprep.subr.mxu0 0.0
    %1208 = vmatpush1.msra.mxu0 %v745
    %1209 = vmatprep.subr.mxu0 0.0
    %1210 = vmatpush1.msra.mxu0 %v748
    %1211 = vmatprep.subr.mxu0 0.0
    %1212 = vmatpush1.msra.mxu0 %v751
    %1213 = vmatprep.subr.mxu0 0.0
    %1214 = vmatpush1.msra.mxu0 %v754
    %1215 = vmatprep.subr.mxu0 0.0
    %1216 = vmatpush1.msra.mxu0 %v757
    %1217 = vmatprep.subr.mxu0 0.0
    %1218 = vmatpush1.msra.mxu0 %v760
    %1219 = vmatprep.subr.mxu0 0.0
    %1220 = vmatpush1.msra.mxu0 %v763
    %1221 = vmatprep.subr.mxu0 0.0
    %1222 = vmatpush1.msra.mxu0 0.0
    %1223 = vmatprep.subr.mxu0 0.0
    %1224 = vmatpush1.msra.mxu0 0.0
    %1225 = vmatprep.subr.mxu0 0.0
    %1226 = vmatpush1.msra.mxu0 0.0
    %1227 = vmatprep.subr.mxu0 0.0
    %1228 = vmatpush1.msra.mxu0 0.0
    %1229 = vmatprep.subr.mxu0 0.0
    %1230 = vmatpush1.msra.mxu0 0.0
    %1231 = vmatprep.subr.mxu0 0.0
    %1232 = vmatpush1.msra.mxu0 0.0
    %1233 = vmatprep.subr.mxu0 0.0
    %1234 = vmatpush1.msra.mxu0 0.0
    %1235 = vmatprep.subr.mxu0 0.0
    %1236 = vmatpush1.msra.mxu0 0.0
    %1237 = vmatprep.subr.mxu0 0.0
    %1238 = vmatpush1.msra.mxu0 0.0
    %1239 = vmatprep.subr.mxu0 0.0
    %1240 = vmatpush1.msra.mxu0 0.0
    %1241 = vmatprep.subr.mxu0 0.0
    %1242 = vmatpush1.msra.mxu0 0.0
    %1243 = vmatprep.subr.mxu0 0.0
    %1244 = vmatpush1.msra.mxu0 0.0
    %1245 = vmatprep.subr.mxu0 0.0
    %1246 = vmatpush1.msra.mxu0 0.0
    %1247 = vmatprep.subr.mxu0 0.0
    %1248 = vmatpush1.msra.mxu0 0.0
    %1249 = vmatprep.subr.mxu0 0.0
    %1250 = vmatpush1.msra.mxu0 0.0
    %1251 = vmatprep.subr.mxu0 0.0
    %1252 = vmatpush1.msra.mxu0 0.0
    %1253 = vmatprep.mubr.f32.mxu0 0.0
    %1254 = vmatmul.mubr.f32.gmra.mrb[0].mxu0 %v1090
    %v1255 = vpop.f32.mrb[0].mxu0
    %v1256 = vadd.f32 0.0, %v1255
    %v1257 = vpop.f32.mrb[0].mxu0
    %1258 = vdwg.mxu0
    %v1261 = vrot.slane %v1185, 7
    %v1262 = vrot.slane %v1187, 7
    %v1267 = vadd.f32 %v710, %v1261
    %v1268 = vadd.f32 %v711, %v1262
    %v1269 = vadd.f32 %v713, %v1185
    %v1270 = vadd.f32 %v714, %v1187
    %v1271 = vxor.u32 %v1267, 2147483648
    %v1272 = vxor.u32 %v1268, 2147483648
    %v1273 = vxor.u32 %v1269, 2147483648
    %v1274 = vxor.u32 %v1270, 2147483648
    %v1275 = vmul.f32 %v1271, 1.442695
    %v1276 = vpow.pop %v1275
    %v1277 = vmul.f32 %v1272, 1.442695
    %v1278 = vpow.pop %v1277
    %v1279 = vmul.f32 %v1273, 1.442695
    %v1280 = vpow.pop %v1279
    %v1281 = vmul.f32 %v1274, 1.442695
    %v1282 = vpow.pop %v1281
    %v1283 = vadd.f32 %v1276, 1.0
    %v1284 = vadd.f32 %v1278, 1.0
    %v1285 = vadd.f32 %v1280, 1.0
    %v1286 = vadd.f32 %v1282, 1.0
    %v1287 = vrcp.pop %v1283
    %v1288 = vmul.f32 1.0, %v1287
    %v1289 = vrcp.pop %v1284
    %v1290 = vmul.f32 1.0, %v1289
    %v1291 = vrcp.pop %v1285
    %v1292 = vmul.f32 1.0, %v1291
    %v1293 = vrcp.pop %v1286
    %v1294 = vmul.f32 1.0, %v1293
    %v1297 = vrot.slane %v1292, 7
    %vm1298 = vcmask 1042434
    %v1299 = vsel %vm1298, %v1297, %v1288
    %v1301 = vsel %vm384, %v1299, 1.0
    %v1302 = vadd.f32 %v1187, %v955
    %v1303 = vadd.f32 %v1256, %v955
    %v1306 = vrot.slane %v1302, 7
    %v1307 = vrot.slane %v1303, 7
    %1308 = vrot.lane.b32.xlu0 %v1306, 32
    %v1309 = vpop.permute.xlu0 %1308
    %1310 = vrot.lane.b32.xlu0 %v1307, 32
    %v1311 = vpop.permute.xlu0 %1310
    %v1312 = vsel %vm78, %v1309, %v1311
    %v1314 = vmul.f32 %v1301, %v1312
    %v1316 = vrot.slane %v1314, 1
    %1317 = vrot.lane.b32.xlu0 %v1314, 96
    %v1318 = vpop.permute.xlu0 %1317
    %1319 = vrot.lane.b32.xlu0 %v1316, 96
    %v1320 = vpop.permute.xlu0 %1319
    %v1323 = vadd.f32 %v711, %v1318
    %v1324 = vadd.f32 %v712, %v1318
    %v1325 = vadd.f32 %v714, %v1320
    %v1326 = vadd.f32 %v715, %v1320
    %v1327 = vtanh.pop %v1323
    %v1328 = vtanh.pop %v1324
    %v1329 = vtanh.pop %v1325
    %v1330 = vtanh.pop %v1326
    %v1333 = vrot.slane %v1327, 1
    %v1334 = vsel %vm950, %v1329, %v1333
    %1335 = vrot.lane.b32.xlu0 %v1334, 32
    %v1336 = vpop.permute.xlu0 %1335
    %v1338 = vsub.f32 %v1090, %v1336
    %v1340 = vrot.slane %v1338, 7
    %1341 = vrot.lane.b32.xlu0 %v1340, 64
    %v1342 = vpop.permute.xlu0 %1341
    %1343 = vrot.lane.b32.xlu0 %v1338, 64
    %v1344 = vpop.permute.xlu0 %1343
    %v1347 = vmul.f32 %v1288, %v1342
    %v1348 = vmul.f32 %v1292, %v1344
    %1351 = vrot.lane.b32.xlu0 %v1347, 32
    %v1352 = vpop.permute.xlu0 %1351
    %1353 = vrot.lane.b32.xlu0 %v1348, 32
    %v1354 = vpop.permute.xlu0 %1353
    %v1357 = vadd.f32 %v1327, %v1352
    %v1358 = vadd.f32 %v1329, %v1354
    %v1361 = vrot.slane %v1328, 1
    %v1362 = vsel %vm950, %v1330, %v1361
    %1363 = vrot.lane.b32.xlu0 %v1362, 32
    %v1364 = vpop.permute.xlu0 %1363
    %v1366 = vsub.f32 %v1090, %v1364
    %v1368 = vrot.slane %v1366, 7
    %1369 = vrot.lane.b32.xlu0 %v1368, 64
    %v1370 = vpop.permute.xlu0 %1369
    %1371 = vrot.lane.b32.xlu0 %v1366, 64
    %v1372 = vpop.permute.xlu0 %1371
    %v1375 = vmul.f32 %v1288, %v1370
    %v1376 = vmul.f32 %v1292, %v1372
    %1379 = vrot.lane.b32.xlu0 %v1375, 32
    %v1380 = vpop.permute.xlu0 %1379
    %1381 = vrot.lane.b32.xlu0 %v1376, 32
    %v1382 = vpop.permute.xlu0 %1381
    %v1385 = vadd.f32 %v1328, %v1380
    %v1386 = vadd.f32 %v1330, %v1382
    %v1387 = vrot.slane %v1090, 7
    %1388 = vrot.lane.b32.xlu0 %v1387, 64
    %v1389 = vpop.permute.xlu0 %1388
    %1390 = vrot.lane.b32.xlu0 %v1090, 64
    %v1391 = vpop.permute.xlu0 %1390
    %v1394 = vmul.f32 %v1290, %v1389
    %v1395 = vmul.f32 %v1294, %v1391
    %1396 = vrot.lane.b32.xlu0 %v1328, 96
    %v1397 = vpop.permute.xlu0 %1396
    %1398 = vrot.lane.b32.xlu0 %v1330, 96
    %v1399 = vpop.permute.xlu0 %1398
    %v1402 = vmul.f32 %v1290, %v1397
    %v1403 = vmul.f32 %v1294, %v1399
    %1406 = vrot.lane.b32.xlu0 %v1402, 32
    %v1407 = vpop.permute.xlu0 %1406
    %1408 = vrot.lane.b32.xlu0 %v1403, 32
    %v1409 = vpop.permute.xlu0 %1408
    %v1412 = vadd.f32 %v1394, %v1407
    %v1413 = vadd.f32 %v1395, %v1409
    %v1414 = vtanh.pop %v1412
    %v1415 = vtanh.pop %v1413
    %1418 = vrot.lane.b32.xlu0 %v1414, 32
    %v1419 = vpop.permute.xlu0 %1418
    %1420 = vrot.lane.b32.xlu0 %v1415, 32
    %v1421 = vpop.permute.xlu0 %1420
    %v1424 = vmul.f32 %v1290, %v1419
    %v1425 = vmul.f32 %v1294, %v1421
    %v1428 = vrot.slane %v1358, 7
    %v1429 = vsel %vm1298, %v1428, %v1357
    %1430 = vrot.lane.b32.xlu0 %v1429, 32
    %v1431 = vpop.permute.xlu0 %1430
    %v1435 = vrot.slane %v1386, 7
    %v1436 = vsel %vm1298, %v1435, %v1385
    %1437 = vrot.lane.b32.xlu0 %v1436, 32
    %v1438 = vpop.permute.xlu0 %1437
    %v1442 = vrot.slane %v1425, 7
    %v1443 = vsel %vm1298, %v1442, %v1424
    %v1447 = vrot.slane %v1413, 7
    %v1448 = vsel %vm1298, %v1447, %v1412
    %1449 = vrot.lane.b32.xlu0 %v1448, 64
    %v1450 = vpop.permute.xlu0 %1449
    %v1452 = vsel %vm78, %v1431, %v1438
    %v1453 = vsel %vm384, %v1452, %v1443
    %v1454 = vsel %vm387, %v1453, %v1450
    %v1457 = vunpack.c.l.s4 1966171168
    %v1458 = vunpack.c.0.s8 %v1457
    %v1459 = vlaneseq
    %v1460 = vshrl.u32 %v1459, 7
    %v1461 = vsub.s32 %v1458, %v1460
    %v1462 = vrot.slane %v1454, %v1461
    %v1463 = vcombine.high %v1462, %v1462
    %v1465 = vunpack.c.l.s4 1966171168
    %v1466 = vunpack.c.0.s8 %v1465
    %v1467 = vlaneseq
    %v1468 = vshrl.u32 %v1467, 7
    %v1469 = vsub.s32 %v1466, %v1468
    %v1470 = vrot.slane %v1462, %v1469
    %v1472 = vunpack.c.l.s4 1966171168
    %v1473 = vunpack.c.0.s8 %v1472
    %v1474 = vlaneseq
    %v1475 = vshrl.u32 %v1474, 7
    %v1476 = vsub.s32 %v1473, %v1475
    %v1477 = vrot.slane %v1463, %v1476
    %v1478 = vcombine.high %v1470, %v1470
    %1481 = vst [vmem:[#allocation2 + $0x1] sm:$0x1] %v1477
    %1482 = vst [vmem:[#allocation2 + $0x9] sm:$0x1] %v1478
    %v1483 = vrot.slane %v1454, 1
    %1485 = vmatprep.subr.mxu0 %v717
    %1486 = vmatpush1.msra.mxu0 %v716
    %1487 = vmatprep.subr.mxu0 %v720
    %1488 = vmatpush1.msra.mxu0 %v719
    %1489 = vmatprep.subr.mxu0 %v723
    %1490 = vmatpush1.msra.mxu0 %v722
    %1491 = vmatprep.subr.mxu0 %v726
    %1492 = vmatpush1.msra.mxu0 %v725
    %1493 = vmatprep.subr.mxu0 %v729
    %1494 = vmatpush1.msra.mxu0 %v728
    %1495 = vmatprep.subr.mxu0 %v732
    %1496 = vmatpush1.msra.mxu0 %v731
    %1497 = vmatprep.subr.mxu0 %v735
    %1498 = vmatpush1.msra.mxu0 %v734
    %1499 = vmatprep.subr.mxu0 %v738
    %1500 = vmatpush1.msra.mxu0 %v737
    %1501 = vmatprep.subr.mxu0 %v741
    %1502 = vmatpush1.msra.mxu0 %v740
    %1503 = vmatprep.subr.mxu0 %v744
    %1504 = vmatpush1.msra.mxu0 %v743
    %1505 = vmatprep.subr.mxu0 %v747
    %1506 = vmatpush1.msra.mxu0 %v746
    %1507 = vmatprep.subr.mxu0 %v750
    %1508 = vmatpush1.msra.mxu0 %v749
    %1509 = vmatprep.subr.mxu0 %v753
    %1510 = vmatpush1.msra.mxu0 %v752
    %1511 = vmatprep.subr.mxu0 %v756
    %1512 = vmatpush1.msra.mxu0 %v755
    %1513 = vmatprep.subr.mxu0 %v759
    %1514 = vmatpush1.msra.mxu0 %v758
    %1515 = vmatprep.subr.mxu0 %v762
    %1516 = vmatpush1.msra.mxu0 %v761
    %1517 = vmatprep.subr.mxu0 0.0
    %1518 = vmatpush1.msra.mxu0 0.0
    %1519 = vmatprep.subr.mxu0 0.0
    %1520 = vmatpush1.msra.mxu0 0.0
    %1521 = vmatprep.subr.mxu0 0.0
    %1522 = vmatpush1.msra.mxu0 0.0
    %1523 = vmatprep.subr.mxu0 0.0
    %1524 = vmatpush1.msra.mxu0 0.0
    %1525 = vmatprep.subr.mxu0 0.0
    %1526 = vmatpush1.msra.mxu0 0.0
    %1527 = vmatprep.subr.mxu0 0.0
    %1528 = vmatpush1.msra.mxu0 0.0
    %1529 = vmatprep.subr.mxu0 0.0
    %1530 = vmatpush1.msra.mxu0 0.0
    %1531 = vmatprep.subr.mxu0 0.0
    %1532 = vmatpush1.msra.mxu0 0.0
    %1533 = vmatprep.subr.mxu0 0.0
    %1534 = vmatpush1.msra.mxu0 0.0
    %1535 = vmatprep.subr.mxu0 0.0
    %1536 = vmatpush1.msra.mxu0 0.0
    %1537 = vmatprep.subr.mxu0 0.0
    %1538 = vmatpush1.msra.mxu0 0.0
    %1539 = vmatprep.subr.mxu0 0.0
    %1540 = vmatpush1.msra.mxu0 0.0
    %1541 = vmatprep.subr.mxu0 0.0
    %1542 = vmatpush1.msra.mxu0 0.0
    %1543 = vmatprep.subr.mxu0 0.0
    %1544 = vmatpush1.msra.mxu0 0.0
    %1545 = vmatprep.subr.mxu0 0.0
    %1546 = vmatpush1.msra.mxu0 0.0
    %1547 = vmatprep.subr.mxu0 0.0
    %1548 = vmatpush1.msra.mxu0 0.0
    %1549 = vmatprep.mubr.f32.mxu0 0.0
    %1550 = vmatmul.mubr.f32.gmra.mrb[0].mxu0 %v1483
    %v1551 = vpop.f32.mrb[0].mxu0
    %v1552 = vadd.f32 0.0, %v1551
    %v1553 = vpop.f32.mrb[0].mxu0
    %v1554 = vadd.f32 0.0, %v1553
    %1555 = vdwg.mxu0
    %1556 = vmatprep.subr.mxu0 0.0
    %1557 = vmatpush1.msra.mxu0 %v718
    %1558 = vmatprep.subr.mxu0 0.0
    %1559 = vmatpush1.msra.mxu0 %v721
    %1560 = vmatprep.subr.mxu0 0.0
    %1561 = vmatpush1.msra.mxu0 %v724
    %1562 = vmatprep.subr.mxu0 0.0
    %1563 = vmatpush1.msra.mxu0 %v727
    %1564 = vmatprep.subr.mxu0 0.0
    %1565 = vmatpush1.msra.mxu0 %v730
    %1566 = vmatprep.subr.mxu0 0.0
    %1567 = vmatpush1.msra.mxu0 %v733
    %1568 = vmatprep.subr.mxu0 0.0
    %1569 = vmatpush1.msra.mxu0 %v736
    %1570 = vmatprep.subr.mxu0 0.0
    %1571 = vmatpush1.msra.mxu0 %v739
    %1572 = vmatprep.subr.mxu0 0.0
    %1573 = vmatpush1.msra.mxu0 %v742
    %1574 = vmatprep.subr.mxu0 0.0
    %1575 = vmatpush1.msra.mxu0 %v745
    %1576 = vmatprep.subr.mxu0 0.0
    %1577 = vmatpush1.msra.mxu0 %v748
    %1578 = vmatprep.subr.mxu0 0.0
    %1579 = vmatpush1.msra.mxu0 %v751
    %1580 = vmatprep.subr.mxu0 0.0
    %1581 = vmatpush1.msra.mxu0 %v754
    %1582 = vmatprep.subr.mxu0 0.0
    %1583 = vmatpush1.msra.mxu0 %v757
    %1584 = vmatprep.subr.mxu0 0.0
    %1585 = vmatpush1.msra.mxu0 %v760
    %1586 = vmatprep.subr.mxu0 0.0
    %1587 = vmatpush1.msra.mxu0 %v763
    %1588 = vmatprep.subr.mxu0 0.0
    %1589 = vmatpush1.msra.mxu0 0.0
    %1590 = vmatprep.subr.mxu0 0.0
    %1591 = vmatpush1.msra.mxu0 0.0
    %1592 = vmatprep.subr.mxu0 0.0
    %1593 = vmatpush1.msra.mxu0 0.0
    %1594 = vmatprep.subr.mxu0 0.0
    %1595 = vmatpush1.msra.mxu0 0.0
    %1596 = vmatprep.subr.mxu0 0.0
    %1597 = vmatpush1.msra.mxu0 0.0
    %1598 = vmatprep.subr.mxu0 0.0
    %1599 = vmatpush1.msra.mxu0 0.0
    %1600 = vmatprep.subr.mxu0 0.0
    %1601 = vmatpush1.msra.mxu0 0.0
    %1602 = vmatprep.subr.mxu0 0.0
    %1603 = vmatpush1.msra.mxu0 0.0
    %1604 = vmatprep.subr.mxu0 0.0
    %1605 = vmatpush1.msra.mxu0 0.0
    %1606 = vmatprep.subr.mxu0 0.0
    %1607 = vmatpush1.msra.mxu0 0.0
    %1608 = vmatprep.subr.mxu0 0.0
    %1609 = vmatpush1.msra.mxu0 0.0
    %1610 = vmatprep.subr.mxu0 0.0
    %1611 = vmatpush1.msra.mxu0 0.0
    %1612 = vmatprep.subr.mxu0 0.0
    %1613 = vmatpush1.msra.mxu0 0.0
    %1614 = vmatprep.subr.mxu0 0.0
    %1615 = vmatpush1.msra.mxu0 0.0
    %1616 = vmatprep.subr.mxu0 0.0
    %1617 = vmatpush1.msra.mxu0 0.0
    %1618 = vmatprep.subr.mxu0 0.0
    %1619 = vmatpush1.msra.mxu0 0.0
    %1620 = vmatprep.mubr.f32.mxu0 0.0
    %1621 = vmatmul.mubr.f32.gmra.mrb[0].mxu0 %v1483
    %v1622 = vpop.f32.mrb[0].mxu0
    %v1623 = vadd.f32 0.0, %v1622
    %v1624 = vpop.f32.mrb[0].mxu0
    %1625 = vdwg.mxu0
    %v1628 = vrot.slane %v1552, 6
    %v1629 = vrot.slane %v1554, 6
    %v1630 = vrot.slane %v1552, 7
    %v1631 = vrot.slane %v1554, 7
    %v1636 = vadd.f32 %v710, %v1628
    %v1637 = vadd.f32 %v711, %v1629
    %v1638 = vadd.f32 %v713, %v1630
    %v1639 = vadd.f32 %v714, %v1631
    %v1640 = vxor.u32 %v1636, 2147483648
    %v1641 = vxor.u32 %v1637, 2147483648
    %v1642 = vxor.u32 %v1638, 2147483648
    %v1643 = vxor.u32 %v1639, 2147483648
    %v1644 = vmul.f32 %v1640, 1.442695
    %v1645 = vpow.pop %v1644
    %v1646 = vmul.f32 %v1641, 1.442695
    %v1647 = vpow.pop %v1646
    %v1648 = vmul.f32 %v1642, 1.442695
    %v1649 = vpow.pop %v1648
    %v1650 = vmul.f32 %v1643, 1.442695
    %v1651 = vpow.pop %v1650
    %v1652 = vadd.f32 %v1645, 1.0
    %v1653 = vadd.f32 %v1647, 1.0
    %v1654 = vadd.f32 %v1649, 1.0
    %v1655 = vadd.f32 %v1651, 1.0
    %v1656 = vrcp.pop %v1652
    %v1657 = vmul.f32 1.0, %v1656
    %v1658 = vrcp.pop %v1653
    %v1659 = vmul.f32 1.0, %v1658
    %v1660 = vrcp.pop %v1654
    %v1661 = vmul.f32 1.0, %v1660
    %v1662 = vrcp.pop %v1655
    %v1663 = vmul.f32 1.0, %v1662
    %v1666 = vrot.slane %v1661, 7
    %vm1667 = vcmask 1043459
    %v1668 = vsel %vm1667, %v1666, %v1657
    %v1670 = vsel %vm384, %v1668, 1.0
    %v1671 = vadd.f32 %v1554, %v955
    %v1672 = vadd.f32 %v1623, %v955
    %v1675 = vrot.slane %v1671, 6
    %v1676 = vrot.slane %v1672, 6
    %1677 = vrot.lane.b32.xlu0 %v1675, 32
    %v1678 = vpop.permute.xlu0 %1677
    %1679 = vrot.lane.b32.xlu0 %v1676, 32
    %v1680 = vpop.permute.xlu0 %1679
    %v1681 = vsel %vm78, %v1678, %v1680
    %v1683 = vmul.f32 %v1670, %v1681
    %v1685 = vrot.slane %v1683, 1
    %1686 = vrot.lane.b32.xlu0 %v1683, 96
    %v1687 = vpop.permute.xlu0 %1686
    %1688 = vrot.lane.b32.xlu0 %v1685, 96
    %v1689 = vpop.permute.xlu0 %1688
    %v1692 = vadd.f32 %v711, %v1687
    %v1693 = vadd.f32 %v712, %v1687
    %v1694 = vadd.f32 %v714, %v1689
    %v1695 = vadd.f32 %v715, %v1689
    %v1696 = vtanh.pop %v1692
    %v1697 = vtanh.pop %v1693
    %v1698 = vtanh.pop %v1694
    %v1699 = vtanh.pop %v1695
    %v1702 = vrot.slane %v1696, 1
    %v1703 = vsel %vm1298, %v1698, %v1702
    %1704 = vrot.lane.b32.xlu0 %v1703, 32
    %v1705 = vpop.permute.xlu0 %1704
    %v1707 = vsub.f32 %v1454, %v1705
    %v1709 = vrot.slane %v1707, 7
    %1710 = vrot.lane.b32.xlu0 %v1709, 64
    %v1711 = vpop.permute.xlu0 %1710
    %1712 = vrot.lane.b32.xlu0 %v1707, 64
    %v1713 = vpop.permute.xlu0 %1712
    %v1716 = vmul.f32 %v1657, %v1711
    %v1717 = vmul.f32 %v1661, %v1713
    %1720 = vrot.lane.b32.xlu0 %v1716, 32
    %v1721 = vpop.permute.xlu0 %1720
    %1722 = vrot.lane.b32.xlu0 %v1717, 32
    %v1723 = vpop.permute.xlu0 %1722
    %v1726 = vadd.f32 %v1696, %v1721
    %v1727 = vadd.f32 %v1698, %v1723
    %v1730 = vrot.slane %v1697, 1
    %v1731 = vsel %vm1298, %v1699, %v1730
    %1732 = vrot.lane.b32.xlu0 %v1731, 32
    %v1733 = vpop.permute.xlu0 %1732
    %v1735 = vsub.f32 %v1454, %v1733
    %v1737 = vrot.slane %v1735, 7
    %1738 = vrot.lane.b32.xlu0 %v1737, 64
    %v1739 = vpop.permute.xlu0 %1738
    %1740 = vrot.lane.b32.xlu0 %v1735, 64
    %v1741 = vpop.permute.xlu0 %1740
    %v1744 = vmul.f32 %v1657, %v1739
    %v1745 = vmul.f32 %v1661, %v1741
    %1748 = vrot.lane.b32.xlu0 %v1744, 32
    %v1749 = vpop.permute.xlu0 %1748
    %1750 = vrot.lane.b32.xlu0 %v1745, 32
    %v1751 = vpop.permute.xlu0 %1750
    %v1754 = vadd.f32 %v1697, %v1749
    %v1755 = vadd.f32 %v1699, %v1751
    %v1756 = vrot.slane %v1454, 7
    %1757 = vrot.lane.b32.xlu0 %v1756, 64
    %v1758 = vpop.permute.xlu0 %1757
    %1759 = vrot.lane.b32.xlu0 %v1454, 64
    %v1760 = vpop.permute.xlu0 %1759
    %v1763 = vmul.f32 %v1659, %v1758
    %v1764 = vmul.f32 %v1663, %v1760
    %1765 = vrot.lane.b32.xlu0 %v1697, 96
    %v1766 = vpop.permute.xlu0 %1765
    %1767 = vrot.lane.b32.xlu0 %v1699, 96
    %v1768 = vpop.permute.xlu0 %1767
    %v1771 = vmul.f32 %v1659, %v1766
    %v1772 = vmul.f32 %v1663, %v1768
    %1775 = vrot.lane.b32.xlu0 %v1771, 32
    %v1776 = vpop.permute.xlu0 %1775
    %1777 = vrot.lane.b32.xlu0 %v1772, 32
    %v1778 = vpop.permute.xlu0 %1777
    %v1781 = vadd.f32 %v1763, %v1776
    %v1782 = vadd.f32 %v1764, %v1778
    %v1783 = vtanh.pop %v1781
    %v1784 = vtanh.pop %v1782
    %1787 = vrot.lane.b32.xlu0 %v1783, 32
    %v1788 = vpop.permute.xlu0 %1787
    %1789 = vrot.lane.b32.xlu0 %v1784, 32
    %v1790 = vpop.permute.xlu0 %1789
    %v1793 = vmul.f32 %v1659, %v1788
    %v1794 = vmul.f32 %v1663, %v1790
    %v1797 = vrot.slane %v1727, 7
    %v1798 = vsel %vm1667, %v1797, %v1726
    %1799 = vrot.lane.b32.xlu0 %v1798, 32
    %v1800 = vpop.permute.xlu0 %1799
    %v1804 = vrot.slane %v1755, 7
    %v1805 = vsel %vm1667, %v1804, %v1754
    %1806 = vrot.lane.b32.xlu0 %v1805, 32
    %v1807 = vpop.permute.xlu0 %1806
    %v1811 = vrot.slane %v1794, 7
    %v1812 = vsel %vm1667, %v1811, %v1793
    %v1816 = vrot.slane %v1782, 7
    %v1817 = vsel %vm1667, %v1816, %v1781
    %1818 = vrot.lane.b32.xlu0 %v1817, 64
    %v1819 = vpop.permute.xlu0 %1818
    %v1821 = vsel %vm78, %v1800, %v1807
    %v1822 = vsel %vm384, %v1821, %v1812
    %v1823 = vsel %vm387, %v1822, %v1819
    %v1826 = vunpack.c.l.s4 1966171168
    %v1827 = vunpack.c.0.s8 %v1826
    %v1828 = vlaneseq
    %v1829 = vshrl.u32 %v1828, 7
    %v1830 = vsub.s32 %v1827, %v1829
    %v1831 = vrot.slane %v1823, %v1830
    %v1832 = vcombine.high %v1831, %v1831
    %v1834 = vunpack.c.l.s4 1966171168
    %v1835 = vunpack.c.0.s8 %v1834
    %v1836 = vlaneseq
    %v1837 = vshrl.u32 %v1836, 7
    %v1838 = vsub.s32 %v1835, %v1837
    %v1839 = vrot.slane %v1831, %v1838
    %v1841 = vunpack.c.l.s4 1966171168
    %v1842 = vunpack.c.0.s8 %v1841
    %v1843 = vlaneseq
    %v1844 = vshrl.u32 %v1843, 7
    %v1845 = vsub.s32 %v1842, %v1844
    %v1846 = vrot.slane %v1832, %v1845
    %v1847 = vcombine.high %v1839, %v1839
    %v1848 = vcombine.high %v1846, %v1846
    %1851 = vst [vmem:[#allocation2 + $0x2] sm:$0x1] %v1847
    %1852 = vst [vmem:[#allocation2 + $0xa] sm:$0x1] %v1848
    %v1853 = vrot.slane %v1823, 2
    %1855 = vmatprep.subr.mxu0 %v717
    %1856 = vmatpush1.msra.mxu0 %v716
    %1857 = vmatprep.subr.mxu0 %v720
    %1858 = vmatpush1.msra.mxu0 %v719
    %1859 = vmatprep.subr.mxu0 %v723
    %1860 = vmatpush1.msra.mxu0 %v722
    %1861 = vmatprep.subr.mxu0 %v726
    %1862 = vmatpush1.msra.mxu0 %v725
    %1863 = vmatprep.subr.mxu0 %v729
    %1864 = vmatpush1.msra.mxu0 %v728
    %1865 = vmatprep.subr.mxu0 %v732
    %1866 = vmatpush1.msra.mxu0 %v731
    %1867 = vmatprep.subr.mxu0 %v735
    %1868 = vmatpush1.msra.mxu0 %v734
    %1869 = vmatprep.subr.mxu0 %v738
    %1870 = vmatpush1.msra.mxu0 %v737
    %1871 = vmatprep.subr.mxu0 %v741
    %1872 = vmatpush1.msra.mxu0 %v740
    %1873 = vmatprep.subr.mxu0 %v744
    %1874 = vmatpush1.msra.mxu0 %v743
    %1875 = vmatprep.subr.mxu0 %v747
    %1876 = vmatpush1.msra.mxu0 %v746
    %1877 = vmatprep.subr.mxu0 %v750
    %1878 = vmatpush1.msra.mxu0 %v749
    %1879 = vmatprep.subr.mxu0 %v753
    %1880 = vmatpush1.msra.mxu0 %v752
    %1881 = vmatprep.subr.mxu0 %v756
    %1882 = vmatpush1.msra.mxu0 %v755
    %1883 = vmatprep.subr.mxu0 %v759
    %1884 = vmatpush1.msra.mxu0 %v758
    %1885 = vmatprep.subr.mxu0 %v762
    %1886 = vmatpush1.msra.mxu0 %v761
    %1887 = vmatprep.subr.mxu0 0.0
    %1888 = vmatpush1.msra.mxu0 0.0
    %1889 = vmatprep.subr.mxu0 0.0
    %1890 = vmatpush1.msra.mxu0 0.0
    %1891 = vmatprep.subr.mxu0 0.0
    %1892 = vmatpush1.msra.mxu0 0.0
    %1893 = vmatprep.subr.mxu0 0.0
    %1894 = vmatpush1.msra.mxu0 0.0
    %1895 = vmatprep.subr.mxu0 0.0
    %1896 = vmatpush1.msra.mxu0 0.0
    %1897 = vmatprep.subr.mxu0 0.0
    %1898 = vmatpush1.msra.mxu0 0.0
    %1899 = vmatprep.subr.mxu0 0.0
    %1900 = vmatpush1.msra.mxu0 0.0
    %1901 = vmatprep.subr.mxu0 0.0
    %1902 = vmatpush1.msra.mxu0 0.0
    %1903 = vmatprep.subr.mxu0 0.0
    %1904 = vmatpush1.msra.mxu0 0.0
    %1905 = vmatprep.subr.mxu0 0.0
    %1906 = vmatpush1.msra.mxu0 0.0
    %1907 = vmatprep.subr.mxu0 0.0
    %1908 = vmatpush1.msra.mxu0 0.0
    %1909 = vmatprep.subr.mxu0 0.0
    %1910 = vmatpush1.msra.mxu0 0.0
    %1911 = vmatprep.subr.mxu0 0.0
    %1912 = vmatpush1.msra.mxu0 0.0
    %1913 = vmatprep.subr.mxu0 0.0
    %1914 = vmatpush1.msra.mxu0 0.0
    %1915 = vmatprep.subr.mxu0 0.0
    %1916 = vmatpush1.msra.mxu0 0.0
    %1917 = vmatprep.subr.mxu0 0.0
    %1918 = vmatpush1.msra.mxu0 0.0
    %1919 = vmatprep.mubr.f32.mxu0 0.0
    %1920 = vmatmul.mubr.f32.gmra.mrb[0].mxu0 %v1853
    %v1921 = vpop.f32.mrb[0].mxu0
    %v1922 = vadd.f32 0.0, %v1921
    %v1923 = vpop.f32.mrb[0].mxu0
    %v1924 = vadd.f32 0.0, %v1923
    %1925 = vdwg.mxu0
    %1926 = vmatprep.subr.mxu0 0.0
    %1927 = vmatpush1.msra.mxu0 %v718
    %1928 = vmatprep.subr.mxu0 0.0
    %1929 = vmatpush1.msra.mxu0 %v721
    %1930 = vmatprep.subr.mxu0 0.0
    %1931 = vmatpush1.msra.mxu0 %v724
    %1932 = vmatprep.subr.mxu0 0.0
    %1933 = vmatpush1.msra.mxu0 %v727
    %1934 = vmatprep.subr.mxu0 0.0
    %1935 = vmatpush1.msra.mxu0 %v730
    %1936 = vmatprep.subr.mxu0 0.0
    %1937 = vmatpush1.msra.mxu0 %v733
    %1938 = vmatprep.subr.mxu0 0.0
    %1939 = vmatpush1.msra.mxu0 %v736
    %1940 = vmatprep.subr.mxu0 0.0
    %1941 = vmatpush1.msra.mxu0 %v739
    %1942 = vmatprep.subr.mxu0 0.0
    %1943 = vmatpush1.msra.mxu0 %v742
    %1944 = vmatprep.subr.mxu0 0.0
    %1945 = vmatpush1.msra.mxu0 %v745
    %1946 = vmatprep.subr.mxu0 0.0
    %1947 = vmatpush1.msra.mxu0 %v748
    %1948 = vmatprep.subr.mxu0 0.0
    %1949 = vmatpush1.msra.mxu0 %v751
    %1950 = vmatprep.subr.mxu0 0.0
    %1951 = vmatpush1.msra.mxu0 %v754
    %1952 = vmatprep.subr.mxu0 0.0
    %1953 = vmatpush1.msra.mxu0 %v757
    %1954 = vmatprep.subr.mxu0 0.0
    %1955 = vmatpush1.msra.mxu0 %v760
    %1956 = vmatprep.subr.mxu0 0.0
    %1957 = vmatpush1.msra.mxu0 %v763
    %1958 = vmatprep.subr.mxu0 0.0
    %1959 = vmatpush1.msra.mxu0 0.0
    %1960 = vmatprep.subr.mxu0 0.0
    %1961 = vmatpush1.msra.mxu0 0.0
    %1962 = vmatprep.subr.mxu0 0.0
    %1963 = vmatpush1.msra.mxu0 0.0
    %1964 = vmatprep.subr.mxu0 0.0
    %1965 = vmatpush1.msra.mxu0 0.0
    %1966 = vmatprep.subr.mxu0 0.0
    %1967 = vmatpush1.msra.mxu0 0.0
    %1968 = vmatprep.subr.mxu0 0.0
    %1969 = vmatpush1.msra.mxu0 0.0
    %1970 = vmatprep.subr.mxu0 0.0
    %1971 = vmatpush1.msra.mxu0 0.0
    %1972 = vmatprep.subr.mxu0 0.0
    %1973 = vmatpush1.msra.mxu0 0.0
    %1974 = vmatprep.subr.mxu0 0.0
    %1975 = vmatpush1.msra.mxu0 0.0
    %1976 = vmatprep.subr.mxu0 0.0
    %1977 = vmatpush1.msra.mxu0 0.0
    %1978 = vmatprep.subr.mxu0 0.0
    %1979 = vmatpush1.msra.mxu0 0.0
    %1980 = vmatprep.subr.mxu0 0.0
    %1981 = vmatpush1.msra.mxu0 0.0
    %1982 = vmatprep.subr.mxu0 0.0
    %1983 = vmatpush1.msra.mxu0 0.0
    %1984 = vmatprep.subr.mxu0 0.0
    %1985 = vmatpush1.msra.mxu0 0.0
    %1986 = vmatprep.subr.mxu0 0.0
    %1987 = vmatpush1.msra.mxu0 0.0
    %1988 = vmatprep.subr.mxu0 0.0
    %1989 = vmatpush1.msra.mxu0 0.0
    %1990 = vmatprep.mubr.f32.mxu0 0.0
    %1991 = vmatmul.mubr.f32.gmra.mrb[0].mxu0 %v1853
    %v1992 = vpop.f32.mrb[0].mxu0
    %v1993 = vadd.f32 0.0, %v1992
    %v1994 = vpop.f32.mrb[0].mxu0
    %1995 = vdwg.mxu0
    %v1998 = vrot.slane %v1922, 5
    %v1999 = vrot.slane %v1924, 5
    %v2000 = vrot.slane %v1922, 6
    %v2001 = vrot.slane %v1924, 6
    %v2006 = vadd.f32 %v710, %v1998
    %v2007 = vadd.f32 %v711, %v1999
    %v2008 = vadd.f32 %v713, %v2000
    %v2009 = vadd.f32 %v714, %v2001
    %v2010 = vxor.u32 %v2006, 2147483648
    %v2011 = vxor.u32 %v2007, 2147483648
    %v2012 = vxor.u32 %v2008, 2147483648
    %v2013 = vxor.u32 %v2009, 2147483648
    %v2014 = vmul.f32 %v2010, 1.442695
    %v2015 = vpow.pop %v2014
    %v2016 = vmul.f32 %v2011, 1.442695
    %v2017 = vpow.pop %v2016
    %v2018 = vmul.f32 %v2012, 1.442695
    %v2019 = vpow.pop %v2018
    %v2020 = vmul.f32 %v2013, 1.442695
    %v2021 = vpow.pop %v2020
    %v2022 = vadd.f32 %v2015, 1.0
    %v2023 = vadd.f32 %v2017, 1.0
    %v2024 = vadd.f32 %v2019, 1.0
    %v2025 = vadd.f32 %v2021, 1.0
    %v2026 = vrcp.pop %v2022
    %v2027 = vmul.f32 1.0, %v2026
    %v2028 = vrcp.pop %v2023
    %v2029 = vmul.f32 1.0, %v2028
    %v2030 = vrcp.pop %v2024
    %v2031 = vmul.f32 1.0, %v2030
    %v2032 = vrcp.pop %v2025
    %v2033 = vmul.f32 1.0, %v2032
    %v2036 = vrot.slane %v2031, 7
    %vm2037 = vcmask 1044484
    %v2038 = vsel %vm2037, %v2036, %v2027
    %v2040 = vsel %vm384, %v2038, 1.0
    %v2041 = vadd.f32 %v1924, %v955
    %v2042 = vadd.f32 %v1993, %v955
    %v2045 = vrot.slane %v2041, 5
    %v2046 = vrot.slane %v2042, 5
    %2047 = vrot.lane.b32.xlu0 %v2045, 32
    %v2048 = vpop.permute.xlu0 %2047
    %2049 = vrot.lane.b32.xlu0 %v2046, 32
    %v2050 = vpop.permute.xlu0 %2049
    %v2051 = vsel %vm78, %v2048, %v2050
    %v2053 = vmul.f32 %v2040, %v2051
    %v2055 = vrot.slane %v2053, 1
    %2056 = vrot.lane.b32.xlu0 %v2053, 96
    %v2057 = vpop.permute.xlu0 %2056
    %2058 = vrot.lane.b32.xlu0 %v2055, 96
    %v2059 = vpop.permute.xlu0 %2058
    %v2062 = vadd.f32 %v711, %v2057
    %v2063 = vadd.f32 %v712, %v2057
    %v2064 = vadd.f32 %v714, %v2059
    %v2065 = vadd.f32 %v715, %v2059
    %v2066 = vtanh.pop %v2062
    %v2067 = vtanh.pop %v2063
    %v2068 = vtanh.pop %v2064
    %v2069 = vtanh.pop %v2065
    %v2072 = vrot.slane %v2066, 1
    %v2073 = vsel %vm1667, %v2068, %v2072
    %2074 = vrot.lane.b32.xlu0 %v2073, 32
    %v2075 = vpop.permute.xlu0 %2074
    %v2077 = vsub.f32 %v1823, %v2075
    %v2079 = vrot.slane %v2077, 7
    %2080 = vrot.lane.b32.xlu0 %v2079, 64
    %v2081 = vpop.permute.xlu0 %2080
    %2082 = vrot.lane.b32.xlu0 %v2077, 64
    %v2083 = vpop.permute.xlu0 %2082
    %v2086 = vmul.f32 %v2027, %v2081
    %v2087 = vmul.f32 %v2031, %v2083
    %2090 = vrot.lane.b32.xlu0 %v2086, 32
    %v2091 = vpop.permute.xlu0 %2090
    %2092 = vrot.lane.b32.xlu0 %v2087, 32
    %v2093 = vpop.permute.xlu0 %2092
    %v2096 = vadd.f32 %v2066, %v2091
    %v2097 = vadd.f32 %v2068, %v2093
    %v2100 = vrot.slane %v2067, 1
    %v2101 = vsel %vm1667, %v2069, %v2100
    %2102 = vrot.lane.b32.xlu0 %v2101, 32
    %v2103 = vpop.permute.xlu0 %2102
    %v2105 = vsub.f32 %v1823, %v2103
    %v2107 = vrot.slane %v2105, 7
    %2108 = vrot.lane.b32.xlu0 %v2107, 64
    %v2109 = vpop.permute.xlu0 %2108
    %2110 = vrot.lane.b32.xlu0 %v2105, 64
    %v2111 = vpop.permute.xlu0 %2110
    %v2114 = vmul.f32 %v2027, %v2109
    %v2115 = vmul.f32 %v2031, %v2111
    %2118 = vrot.lane.b32.xlu0 %v2114, 32
    %v2119 = vpop.permute.xlu0 %2118
    %2120 = vrot.lane.b32.xlu0 %v2115, 32
    %v2121 = vpop.permute.xlu0 %2120
    %v2124 = vadd.f32 %v2067, %v2119
    %v2125 = vadd.f32 %v2069, %v2121
    %v2126 = vrot.slane %v1823, 7
    %2127 = vrot.lane.b32.xlu0 %v2126, 64
    %v2128 = vpop.permute.xlu0 %2127
    %2129 = vrot.lane.b32.xlu0 %v1823, 64
    %v2130 = vpop.permute.xlu0 %2129
    %v2133 = vmul.f32 %v2029, %v2128
    %v2134 = vmul.f32 %v2033, %v2130
    %2135 = vrot.lane.b32.xlu0 %v2067, 96
    %v2136 = vpop.permute.xlu0 %2135
    %2137 = vrot.lane.b32.xlu0 %v2069, 96
    %v2138 = vpop.permute.xlu0 %2137
    %v2141 = vmul.f32 %v2029, %v2136
    %v2142 = vmul.f32 %v2033, %v2138
    %2145 = vrot.lane.b32.xlu0 %v2141, 32
    %v2146 = vpop.permute.xlu0 %2145
    %2147 = vrot.lane.b32.xlu0 %v2142, 32
    %v2148 = vpop.permute.xlu0 %2147
    %v2151 = vadd.f32 %v2133, %v2146
    %v2152 = vadd.f32 %v2134, %v2148
    %v2153 = vtanh.pop %v2151
    %v2154 = vtanh.pop %v2152
    %2157 = vrot.lane.b32.xlu0 %v2153, 32
    %v2158 = vpop.permute.xlu0 %2157
    %2159 = vrot.lane.b32.xlu0 %v2154, 32
    %v2160 = vpop.permute.xlu0 %2159
    %v2163 = vmul.f32 %v2029, %v2158
    %v2164 = vmul.f32 %v2033, %v2160
    %v2167 = vrot.slane %v2097, 7
    %v2168 = vsel %vm2037, %v2167, %v2096
    %2169 = vrot.lane.b32.xlu0 %v2168, 32
    %v2170 = vpop.permute.xlu0 %2169
    %v2174 = vrot.slane %v2125, 7
    %v2175 = vsel %vm2037, %v2174, %v2124
    %2176 = vrot.lane.b32.xlu0 %v2175, 32
    %v2177 = vpop.permute.xlu0 %2176
    %v2181 = vrot.slane %v2164, 7
    %v2182 = vsel %vm2037, %v2181, %v2163
    %v2186 = vrot.slane %v2152, 7
    %v2187 = vsel %vm2037, %v2186, %v2151
    %2188 = vrot.lane.b32.xlu0 %v2187, 64
    %v2189 = vpop.permute.xlu0 %2188
    %v2191 = vsel %vm78, %v2170, %v2177
    %v2192 = vsel %vm384, %v2191, %v2182
    %v2193 = vsel %vm387, %v2192, %v2189
    %v2195 = vcombine.high %v2193, %v2193
    %v2197 = vunpack.c.l.s4 1966171168
    %v2198 = vunpack.c.0.s8 %v2197
    %v2199 = vlaneseq
    %v2200 = vshrl.u32 %v2199, 7
    %v2201 = vsub.s32 %v2198, %v2200
    %v2202 = vrot.slane %v2193, %v2201
    %v2204 = vunpack.c.l.s4 1966171168
    %v2205 = vunpack.c.0.s8 %v2204
    %v2206 = vlaneseq
    %v2207 = vshrl.u32 %v2206, 7
    %v2208 = vsub.s32 %v2205, %v2207
    %v2209 = vrot.slane %v2195, %v2208
    %v2210 = vcombine.high %v2202, %v2202
    %v2212 = vunpack.c.l.s4 1966171168
    %v2213 = vunpack.c.0.s8 %v2212
    %v2214 = vlaneseq
    %v2215 = vshrl.u32 %v2214, 7
    %v2216 = vsub.s32 %v2213, %v2215
    %v2217 = vrot.slane %v2209, %v2216
    %v2219 = vunpack.c.l.s4 1966171168
    %v2220 = vunpack.c.0.s8 %v2219
    %v2221 = vlaneseq
    %v2222 = vshrl.u32 %v2221, 7
    %v2223 = vsub.s32 %v2220, %v2222
    %v2224 = vrot.slane %v2210, %v2223
    %v2225 = vcombine.high %v2224, %v2224
    %2228 = vst [vmem:[#allocation2 + $0x3] sm:$0x1] %v2225
    %2229 = vst [vmem:[#allocation2 + $0xb] sm:$0x1] %v2217
    %v2230 = vrot.slane %v2193, 3
    %2232 = vmatprep.subr.mxu0 %v717
    %2233 = vmatpush1.msra.mxu0 %v716
    %2234 = vmatprep.subr.mxu0 %v720
    %2235 = vmatpush1.msra.mxu0 %v719
    %2236 = vmatprep.subr.mxu0 %v723
    %2237 = vmatpush1.msra.mxu0 %v722
    %2238 = vmatprep.subr.mxu0 %v726
    %2239 = vmatpush1.msra.mxu0 %v725
    %2240 = vmatprep.subr.mxu0 %v729
    %2241 = vmatpush1.msra.mxu0 %v728
    %2242 = vmatprep.subr.mxu0 %v732
    %2243 = vmatpush1.msra.mxu0 %v731
    %2244 = vmatprep.subr.mxu0 %v735
    %2245 = vmatpush1.msra.mxu0 %v734
    %2246 = vmatprep.subr.mxu0 %v738
    %2247 = vmatpush1.msra.mxu0 %v737
    %2248 = vmatprep.subr.mxu0 %v741
    %2249 = vmatpush1.msra.mxu0 %v740
    %2250 = vmatprep.subr.mxu0 %v744
    %2251 = vmatpush1.msra.mxu0 %v743
    %2252 = vmatprep.subr.mxu0 %v747
    %2253 = vmatpush1.msra.mxu0 %v746
    %2254 = vmatprep.subr.mxu0 %v750
    %2255 = vmatpush1.msra.mxu0 %v749
    %2256 = vmatprep.subr.mxu0 %v753
    %2257 = vmatpush1.msra.mxu0 %v752
    %2258 = vmatprep.subr.mxu0 %v756
    %2259 = vmatpush1.msra.mxu0 %v755
    %2260 = vmatprep.subr.mxu0 %v759
    %2261 = vmatpush1.msra.mxu0 %v758
    %2262 = vmatprep.subr.mxu0 %v762
    %2263 = vmatpush1.msra.mxu0 %v761
    %2264 = vmatprep.subr.mxu0 0.0
    %2265 = vmatpush1.msra.mxu0 0.0
    %2266 = vmatprep.subr.mxu0 0.0
    %2267 = vmatpush1.msra.mxu0 0.0
    %2268 = vmatprep.subr.mxu0 0.0
    %2269 = vmatpush1.msra.mxu0 0.0
    %2270 = vmatprep.subr.mxu0 0.0
    %2271 = vmatpush1.msra.mxu0 0.0
    %2272 = vmatprep.subr.mxu0 0.0
    %2273 = vmatpush1.msra.mxu0 0.0
    %2274 = vmatprep.subr.mxu0 0.0
    %2275 = vmatpush1.msra.mxu0 0.0
    %2276 = vmatprep.subr.mxu0 0.0
    %2277 = vmatpush1.msra.mxu0 0.0
    %2278 = vmatprep.subr.mxu0 0.0
    %2279 = vmatpush1.msra.mxu0 0.0
    %2280 = vmatprep.subr.mxu0 0.0
    %2281 = vmatpush1.msra.mxu0 0.0
    %2282 = vmatprep.subr.mxu0 0.0
    %2283 = vmatpush1.msra.mxu0 0.0
    %2284 = vmatprep.subr.mxu0 0.0
    %2285 = vmatpush1.msra.mxu0 0.0
    %2286 = vmatprep.subr.mxu0 0.0
    %2287 = vmatpush1.msra.mxu0 0.0
    %2288 = vmatprep.subr.mxu0 0.0
    %2289 = vmatpush1.msra.mxu0 0.0
    %2290 = vmatprep.subr.mxu0 0.0
    %2291 = vmatpush1.msra.mxu0 0.0
    %2292 = vmatprep.subr.mxu0 0.0
    %2293 = vmatpush1.msra.mxu0 0.0
    %2294 = vmatprep.subr.mxu0 0.0
    %2295 = vmatpush1.msra.mxu0 0.0
    %2296 = vmatprep.mubr.f32.mxu0 0.0
    %2297 = vmatmul.mubr.f32.gmra.mrb[0].mxu0 %v2230
    %v2298 = vpop.f32.mrb[0].mxu0
    %v2299 = vadd.f32 0.0, %v2298
    %v2300 = vpop.f32.mrb[0].mxu0
    %v2301 = vadd.f32 0.0, %v2300
    %2302 = vdwg.mxu0
    %2303 = vmatprep.subr.mxu0 0.0
    %2304 = vmatpush1.msra.mxu0 %v718
    %2305 = vmatprep.subr.mxu0 0.0
    %2306 = vmatpush1.msra.mxu0 %v721
    %2307 = vmatprep.subr.mxu0 0.0
    %2308 = vmatpush1.msra.mxu0 %v724
    %2309 = vmatprep.subr.mxu0 0.0
    %2310 = vmatpush1.msra.mxu0 %v727
    %2311 = vmatprep.subr.mxu0 0.0
    %2312 = vmatpush1.msra.mxu0 %v730
    %2313 = vmatprep.subr.mxu0 0.0
    %2314 = vmatpush1.msra.mxu0 %v733
    %2315 = vmatprep.subr.mxu0 0.0
    %2316 = vmatpush1.msra.mxu0 %v736
    %2317 = vmatprep.subr.mxu0 0.0
    %2318 = vmatpush1.msra.mxu0 %v739
    %2319 = vmatprep.subr.mxu0 0.0
    %2320 = vmatpush1.msra.mxu0 %v742
    %2321 = vmatprep.subr.mxu0 0.0
    %2322 = vmatpush1.msra.mxu0 %v745
    %2323 = vmatprep.subr.mxu0 0.0
    %2324 = vmatpush1.msra.mxu0 %v748
    %2325 = vmatprep.subr.mxu0 0.0
    %2326 = vmatpush1.msra.mxu0 %v751
    %2327 = vmatprep.subr.mxu0 0.0
    %2328 = vmatpush1.msra.mxu0 %v754
    %2329 = vmatprep.subr.mxu0 0.0
    %2330 = vmatpush1.msra.mxu0 %v757
    %2331 = vmatprep.subr.mxu0 0.0
    %2332 = vmatpush1.msra.mxu0 %v760
    %2333 = vmatprep.subr.mxu0 0.0
    %2334 = vmatpush1.msra.mxu0 %v763
    %2335 = vmatprep.subr.mxu0 0.0
    %2336 = vmatpush1.msra.mxu0 0.0
    %2337 = vmatprep.subr.mxu0 0.0
    %2338 = vmatpush1.msra.mxu0 0.0
    %2339 = vmatprep.subr.mxu0 0.0
    %2340 = vmatpush1.msra.mxu0 0.0
    %2341 = vmatprep.subr.mxu0 0.0
    %2342 = vmatpush1.msra.mxu0 0.0
    %2343 = vmatprep.subr.mxu0 0.0
    %2344 = vmatpush1.msra.mxu0 0.0
    %2345 = vmatprep.subr.mxu0 0.0
    %2346 = vmatpush1.msra.mxu0 0.0
    %2347 = vmatprep.subr.mxu0 0.0
    %2348 = vmatpush1.msra.mxu0 0.0
    %2349 = vmatprep.subr.mxu0 0.0
    %2350 = vmatpush1.msra.mxu0 0.0
    %2351 = vmatprep.subr.mxu0 0.0
    %2352 = vmatpush1.msra.mxu0 0.0
    %2353 = vmatprep.subr.mxu0 0.0
    %2354 = vmatpush1.msra.mxu0 0.0
    %2355 = vmatprep.subr.mxu0 0.0
    %2356 = vmatpush1.msra.mxu0 0.0
    %2357 = vmatprep.subr.mxu0 0.0
    %2358 = vmatpush1.msra.mxu0 0.0
    %2359 = vmatprep.subr.mxu0 0.0
    %2360 = vmatpush1.msra.mxu0 0.0
    %2361 = vmatprep.subr.mxu0 0.0
    %2362 = vmatpush1.msra.mxu0 0.0
    %2363 = vmatprep.subr.mxu0 0.0
    %2364 = vmatpush1.msra.mxu0 0.0
    %2365 = vmatprep.subr.mxu0 0.0
    %2366 = vmatpush1.msra.mxu0 0.0
    %2367 = vmatprep.mubr.f32.mxu0 0.0
    %2368 = vmatmul.mubr.f32.gmra.mrb[0].mxu0 %v2230
    %v2369 = vpop.f32.mrb[0].mxu0
    %v2370 = vadd.f32 0.0, %v2369
    %v2371 = vpop.f32.mrb[0].mxu0
    %2372 = vdwg.mxu0
    %v2375 = vrot.slane %v2299, 4
    %v2376 = vrot.slane %v2301, 4
    %v2377 = vrot.slane %v2299, 5
    %v2378 = vrot.slane %v2301, 5
    %v2383 = vadd.f32 %v710, %v2375
    %v2384 = vadd.f32 %v711, %v2376
    %v2385 = vadd.f32 %v713, %v2377
    %v2386 = vadd.f32 %v714, %v2378
    %v2387 = vxor.u32 %v2383, 2147483648
    %v2388 = vxor.u32 %v2384, 2147483648
    %v2389 = vxor.u32 %v2385, 2147483648
    %v2390 = vxor.u32 %v2386, 2147483648
    %v2391 = vmul.f32 %v2387, 1.442695
    %v2392 = vpow.pop %v2391
    %v2393 = vmul.f32 %v2388, 1.442695
    %v2394 = vpow.pop %v2393
    %v2395 = vmul.f32 %v2389, 1.442695
    %v2396 = vpow.pop %v2395
    %v2397 = vmul.f32 %v2390, 1.442695
    %v2398 = vpow.pop %v2397
    %v2399 = vadd.f32 %v2392, 1.0
    %v2400 = vadd.f32 %v2394, 1.0
    %v2401 = vadd.f32 %v2396, 1.0
    %v2402 = vadd.f32 %v2398, 1.0
    %v2403 = vrcp.pop %v2399
    %v2404 = vmul.f32 1.0, %v2403
    %v2405 = vrcp.pop %v2400
    %v2406 = vmul.f32 1.0, %v2405
    %v2407 = vrcp.pop %v2401
    %v2408 = vmul.f32 1.0, %v2407
    %v2409 = vrcp.pop %v2402
    %v2410 = vmul.f32 1.0, %v2409
    %v2413 = vrot.slane %v2408, 7
    %vm2414 = vcmask 1045509
    %v2415 = vsel %vm2414, %v2413, %v2404
    %v2417 = vsel %vm384, %v2415, 1.0
    %v2418 = vadd.f32 %v2301, %v955
    %v2419 = vadd.f32 %v2370, %v955
    %v2422 = vrot.slane %v2418, 4
    %v2423 = vrot.slane %v2419, 4
    %2424 = vrot.lane.b32.xlu0 %v2422, 32
    %v2425 = vpop.permute.xlu0 %2424
    %2426 = vrot.lane.b32.xlu0 %v2423, 32
    %v2427 = vpop.permute.xlu0 %2426
    %v2428 = vsel %vm78, %v2425, %v2427
    %v2430 = vmul.f32 %v2417, %v2428
    %v2432 = vrot.slane %v2430, 1
    %2433 = vrot.lane.b32.xlu0 %v2430, 96
    %v2434 = vpop.permute.xlu0 %2433
    %2435 = vrot.lane.b32.xlu0 %v2432, 96
    %v2436 = vpop.permute.xlu0 %2435
    %v2439 = vadd.f32 %v711, %v2434
    %v2440 = vadd.f32 %v712, %v2434
    %v2441 = vadd.f32 %v714, %v2436
    %v2442 = vadd.f32 %v715, %v2436
    %v2443 = vtanh.pop %v2439
    %v2444 = vtanh.pop %v2440
    %v2445 = vtanh.pop %v2441
    %v2446 = vtanh.pop %v2442
    %v2449 = vrot.slane %v2443, 1
    %v2450 = vsel %vm2037, %v2445, %v2449
    %2451 = vrot.lane.b32.xlu0 %v2450, 32
    %v2452 = vpop.permute.xlu0 %2451
    %v2454 = vsub.f32 %v2193, %v2452
    %v2456 = vrot.slane %v2454, 7
    %2457 = vrot.lane.b32.xlu0 %v2456, 64
    %v2458 = vpop.permute.xlu0 %2457
    %2459 = vrot.lane.b32.xlu0 %v2454, 64
    %v2460 = vpop.permute.xlu0 %2459
    %v2463 = vmul.f32 %v2404, %v2458
    %v2464 = vmul.f32 %v2408, %v2460
    %2467 = vrot.lane.b32.xlu0 %v2463, 32
    %v2468 = vpop.permute.xlu0 %2467
    %2469 = vrot.lane.b32.xlu0 %v2464, 32
    %v2470 = vpop.permute.xlu0 %2469
    %v2473 = vadd.f32 %v2443, %v2468
    %v2474 = vadd.f32 %v2445, %v2470
    %v2477 = vrot.slane %v2444, 1
    %v2478 = vsel %vm2037, %v2446, %v2477
    %2479 = vrot.lane.b32.xlu0 %v2478, 32
    %v2480 = vpop.permute.xlu0 %2479
    %v2482 = vsub.f32 %v2193, %v2480
    %v2484 = vrot.slane %v2482, 7
    %2485 = vrot.lane.b32.xlu0 %v2484, 64
    %v2486 = vpop.permute.xlu0 %2485
    %2487 = vrot.lane.b32.xlu0 %v2482, 64
    %v2488 = vpop.permute.xlu0 %2487
    %v2491 = vmul.f32 %v2404, %v2486
    %v2492 = vmul.f32 %v2408, %v2488
    %2495 = vrot.lane.b32.xlu0 %v2491, 32
    %v2496 = vpop.permute.xlu0 %2495
    %2497 = vrot.lane.b32.xlu0 %v2492, 32
    %v2498 = vpop.permute.xlu0 %2497
    %v2501 = vadd.f32 %v2444, %v2496
    %v2502 = vadd.f32 %v2446, %v2498
    %v2503 = vrot.slane %v2193, 7
    %2504 = vrot.lane.b32.xlu0 %v2503, 64
    %v2505 = vpop.permute.xlu0 %2504
    %2506 = vrot.lane.b32.xlu0 %v2193, 64
    %v2507 = vpop.permute.xlu0 %2506
    %v2510 = vmul.f32 %v2406, %v2505
    %v2511 = vmul.f32 %v2410, %v2507
    %2512 = vrot.lane.b32.xlu0 %v2444, 96
    %v2513 = vpop.permute.xlu0 %2512
    %2514 = vrot.lane.b32.xlu0 %v2446, 96
    %v2515 = vpop.permute.xlu0 %2514
    %v2518 = vmul.f32 %v2406, %v2513
    %v2519 = vmul.f32 %v2410, %v2515
    %2522 = vrot.lane.b32.xlu0 %v2518, 32
    %v2523 = vpop.permute.xlu0 %2522
    %2524 = vrot.lane.b32.xlu0 %v2519, 32
    %v2525 = vpop.permute.xlu0 %2524
    %v2528 = vadd.f32 %v2510, %v2523
    %v2529 = vadd.f32 %v2511, %v2525
    %v2530 = vtanh.pop %v2528
    %v2531 = vtanh.pop %v2529
    %2534 = vrot.lane.b32.xlu0 %v2530, 32
    %v2535 = vpop.permute.xlu0 %2534
    %2536 = vrot.lane.b32.xlu0 %v2531, 32
    %v2537 = vpop.permute.xlu0 %2536
    %v2540 = vmul.f32 %v2406, %v2535
    %v2541 = vmul.f32 %v2410, %v2537
    %v2544 = vrot.slane %v2474, 7
    %v2545 = vsel %vm2414, %v2544, %v2473
    %2546 = vrot.lane.b32.xlu0 %v2545, 32
    %v2547 = vpop.permute.xlu0 %2546
    %v2551 = vrot.slane %v2502, 7
    %v2552 = vsel %vm2414, %v2551, %v2501
    %2553 = vrot.lane.b32.xlu0 %v2552, 32
    %v2554 = vpop.permute.xlu0 %2553
    %v2558 = vrot.slane %v2541, 7
    %v2559 = vsel %vm2414, %v2558, %v2540
    %v2563 = vrot.slane %v2529, 7
    %v2564 = vsel %vm2414, %v2563, %v2528
    %2565 = vrot.lane.b32.xlu0 %v2564, 64
    %v2566 = vpop.permute.xlu0 %2565
    %v2568 = vsel %vm78, %v2547, %v2554
    %v2569 = vsel %vm384, %v2568, %v2559
    %v2570 = vsel %vm387, %v2569, %v2566
    %v2572 = vcombine.high %v2570, %v2570
    %v2574 = vunpack.c.l.s4 1966171168
    %v2575 = vunpack.c.0.s8 %v2574
    %v2576 = vlaneseq
    %v2577 = vshrl.u32 %v2576, 7
    %v2578 = vsub.s32 %v2575, %v2577
    %v2579 = vrot.slane %v2572, %v2578
    %v2580 = vcombine.high %v2579, %v2579
    %v2582 = vunpack.c.l.s4 1966171168
    %v2583 = vunpack.c.0.s8 %v2582
    %v2584 = vlaneseq
    %v2585 = vshrl.u32 %v2584, 7
    %v2586 = vsub.s32 %v2583, %v2585
    %v2587 = vrot.slane %v2579, %v2586
    %v2589 = vunpack.c.l.s4 1966171168
    %v2590 = vunpack.c.0.s8 %v2589
    %v2591 = vlaneseq
    %v2592 = vshrl.u32 %v2591, 7
    %v2593 = vsub.s32 %v2590, %v2592
    %v2594 = vrot.slane %v2580, %v2593
    %2597 = vst [vmem:[#allocation2 + $0x4] sm:$0x1] %v2587
    %2598 = vst [vmem:[#allocation2 + $0xc] sm:$0x1] %v2594
    %v2599 = vrot.slane %v2570, 4
    %2601 = vmatprep.subr.mxu0 %v717
    %2602 = vmatpush1.msra.mxu0 %v716
    %2603 = vmatprep.subr.mxu0 %v720
    %2604 = vmatpush1.msra.mxu0 %v719
    %2605 = vmatprep.subr.mxu0 %v723
    %2606 = vmatpush1.msra.mxu0 %v722
    %2607 = vmatprep.subr.mxu0 %v726
    %2608 = vmatpush1.msra.mxu0 %v725
    %2609 = vmatprep.subr.mxu0 %v729
    %2610 = vmatpush1.msra.mxu0 %v728
    %2611 = vmatprep.subr.mxu0 %v732
    %2612 = vmatpush1.msra.mxu0 %v731
    %2613 = vmatprep.subr.mxu0 %v735
    %2614 = vmatpush1.msra.mxu0 %v734
    %2615 = vmatprep.subr.mxu0 %v738
    %2616 = vmatpush1.msra.mxu0 %v737
    %2617 = vmatprep.subr.mxu0 %v741
    %2618 = vmatpush1.msra.mxu0 %v740
    %2619 = vmatprep.subr.mxu0 %v744
    %2620 = vmatpush1.msra.mxu0 %v743
    %2621 = vmatprep.subr.mxu0 %v747
    %2622 = vmatpush1.msra.mxu0 %v746
    %2623 = vmatprep.subr.mxu0 %v750
    %2624 = vmatpush1.msra.mxu0 %v749
    %2625 = vmatprep.subr.mxu0 %v753
    %2626 = vmatpush1.msra.mxu0 %v752
    %2627 = vmatprep.subr.mxu0 %v756
    %2628 = vmatpush1.msra.mxu0 %v755
    %2629 = vmatprep.subr.mxu0 %v759
    %2630 = vmatpush1.msra.mxu0 %v758
    %2631 = vmatprep.subr.mxu0 %v762
    %2632 = vmatpush1.msra.mxu0 %v761
    %2633 = vmatprep.subr.mxu0 0.0
    %2634 = vmatpush1.msra.mxu0 0.0
    %2635 = vmatprep.subr.mxu0 0.0
    %2636 = vmatpush1.msra.mxu0 0.0
    %2637 = vmatprep.subr.mxu0 0.0
    %2638 = vmatpush1.msra.mxu0 0.0
    %2639 = vmatprep.subr.mxu0 0.0
    %2640 = vmatpush1.msra.mxu0 0.0
    %2641 = vmatprep.subr.mxu0 0.0
    %2642 = vmatpush1.msra.mxu0 0.0
    %2643 = vmatprep.subr.mxu0 0.0
    %2644 = vmatpush1.msra.mxu0 0.0
    %2645 = vmatprep.subr.mxu0 0.0
    %2646 = vmatpush1.msra.mxu0 0.0
    %2647 = vmatprep.subr.mxu0 0.0
    %2648 = vmatpush1.msra.mxu0 0.0
    %2649 = vmatprep.subr.mxu0 0.0
    %2650 = vmatpush1.msra.mxu0 0.0
    %2651 = vmatprep.subr.mxu0 0.0
    %2652 = vmatpush1.msra.mxu0 0.0
    %2653 = vmatprep.subr.mxu0 0.0
    %2654 = vmatpush1.msra.mxu0 0.0
    %2655 = vmatprep.subr.mxu0 0.0
    %2656 = vmatpush1.msra.mxu0 0.0
    %2657 = vmatprep.subr.mxu0 0.0
    %2658 = vmatpush1.msra.mxu0 0.0
    %2659 = vmatprep.subr.mxu0 0.0
    %2660 = vmatpush1.msra.mxu0 0.0
    %2661 = vmatprep.subr.mxu0 0.0
    %2662 = vmatpush1.msra.mxu0 0.0
    %2663 = vmatprep.subr.mxu0 0.0
    %2664 = vmatpush1.msra.mxu0 0.0
    %2665 = vmatprep.mubr.f32.mxu0 0.0
    %2666 = vmatmul.mubr.f32.gmra.mrb[0].mxu0 %v2599
    %v2667 = vpop.f32.mrb[0].mxu0
    %v2668 = vadd.f32 0.0, %v2667
    %v2669 = vpop.f32.mrb[0].mxu0
    %v2670 = vadd.f32 0.0, %v2669
    %2671 = vdwg.mxu0
    %2672 = vmatprep.subr.mxu0 0.0
    %2673 = vmatpush1.msra.mxu0 %v718
    %2674 = vmatprep.subr.mxu0 0.0
    %2675 = vmatpush1.msra.mxu0 %v721
    %2676 = vmatprep.subr.mxu0 0.0
    %2677 = vmatpush1.msra.mxu0 %v724
    %2678 = vmatprep.subr.mxu0 0.0
    %2679 = vmatpush1.msra.mxu0 %v727
    %2680 = vmatprep.subr.mxu0 0.0
    %2681 = vmatpush1.msra.mxu0 %v730
    %2682 = vmatprep.subr.mxu0 0.0
    %2683 = vmatpush1.msra.mxu0 %v733
    %2684 = vmatprep.subr.mxu0 0.0
    %2685 = vmatpush1.msra.mxu0 %v736
    %2686 = vmatprep.subr.mxu0 0.0
    %2687 = vmatpush1.msra.mxu0 %v739
    %2688 = vmatprep.subr.mxu0 0.0
    %2689 = vmatpush1.msra.mxu0 %v742
    %2690 = vmatprep.subr.mxu0 0.0
    %2691 = vmatpush1.msra.mxu0 %v745
    %2692 = vmatprep.subr.mxu0 0.0
    %2693 = vmatpush1.msra.mxu0 %v748
    %2694 = vmatprep.subr.mxu0 0.0
    %2695 = vmatpush1.msra.mxu0 %v751
    %2696 = vmatprep.subr.mxu0 0.0
    %2697 = vmatpush1.msra.mxu0 %v754
    %2698 = vmatprep.subr.mxu0 0.0
    %2699 = vmatpush1.msra.mxu0 %v757
    %2700 = vmatprep.subr.mxu0 0.0
    %2701 = vmatpush1.msra.mxu0 %v760
    %2702 = vmatprep.subr.mxu0 0.0
    %2703 = vmatpush1.msra.mxu0 %v763
    %2704 = vmatprep.subr.mxu0 0.0
    %2705 = vmatpush1.msra.mxu0 0.0
    %2706 = vmatprep.subr.mxu0 0.0
    %2707 = vmatpush1.msra.mxu0 0.0
    %2708 = vmatprep.subr.mxu0 0.0
    %2709 = vmatpush1.msra.mxu0 0.0
    %2710 = vmatprep.subr.mxu0 0.0
    %2711 = vmatpush1.msra.mxu0 0.0
    %2712 = vmatprep.subr.mxu0 0.0
    %2713 = vmatpush1.msra.mxu0 0.0
    %2714 = vmatprep.subr.mxu0 0.0
    %2715 = vmatpush1.msra.mxu0 0.0
    %2716 = vmatprep.subr.mxu0 0.0
    %2717 = vmatpush1.msra.mxu0 0.0
    %2718 = vmatprep.subr.mxu0 0.0
    %2719 = vmatpush1.msra.mxu0 0.0
    %2720 = vmatprep.subr.mxu0 0.0
    %2721 = vmatpush1.msra.mxu0 0.0
    %2722 = vmatprep.subr.mxu0 0.0
    %2723 = vmatpush1.msra.mxu0 0.0
    %2724 = vmatprep.subr.mxu0 0.0
    %2725 = vmatpush1.msra.mxu0 0.0
    %2726 = vmatprep.subr.mxu0 0.0
    %2727 = vmatpush1.msra.mxu0 0.0
    %2728 = vmatprep.subr.mxu0 0.0
    %2729 = vmatpush1.msra.mxu0 0.0
    %2730 = vmatprep.subr.mxu0 0.0
    %2731 = vmatpush1.msra.mxu0 0.0
    %2732 = vmatprep.subr.mxu0 0.0
    %2733 = vmatpush1.msra.mxu0 0.0
    %2734 = vmatprep.subr.mxu0 0.0
    %2735 = vmatpush1.msra.mxu0 0.0
    %2736 = vmatprep.mubr.f32.mxu0 0.0
    %2737 = vmatmul.mubr.f32.gmra.mrb[0].mxu0 %v2599
    %v2738 = vpop.f32.mrb[0].mxu0
    %v2739 = vadd.f32 0.0, %v2738
    %v2740 = vpop.f32.mrb[0].mxu0
    %2741 = vdwg.mxu0
    %v2744 = vrot.slane %v2668, 3
    %v2745 = vrot.slane %v2670, 3
    %v2746 = vrot.slane %v2668, 4
    %v2747 = vrot.slane %v2670, 4
    %v2752 = vadd.f32 %v710, %v2744
    %v2753 = vadd.f32 %v711, %v2745
    %v2754 = vadd.f32 %v713, %v2746
    %v2755 = vadd.f32 %v714, %v2747
    %v2756 = vxor.u32 %v2752, 2147483648
    %v2757 = vxor.u32 %v2753, 2147483648
    %v2758 = vxor.u32 %v2754, 2147483648
    %v2759 = vxor.u32 %v2755, 2147483648
    %v2760 = vmul.f32 %v2756, 1.442695
    %v2761 = vpow.pop %v2760
    %v2762 = vmul.f32 %v2757, 1.442695
    %v2763 = vpow.pop %v2762
    %v2764 = vmul.f32 %v2758, 1.442695
    %v2765 = vpow.pop %v2764
    %v2766 = vmul.f32 %v2759, 1.442695
    %v2767 = vpow.pop %v2766
    %v2768 = vadd.f32 %v2761, 1.0
    %v2769 = vadd.f32 %v2763, 1.0
    %v2770 = vadd.f32 %v2765, 1.0
    %v2771 = vadd.f32 %v2767, 1.0
    %v2772 = vrcp.pop %v2768
    %v2773 = vmul.f32 1.0, %v2772
    %v2774 = vrcp.pop %v2769
    %v2775 = vmul.f32 1.0, %v2774
    %v2776 = vrcp.pop %v2770
    %v2777 = vmul.f32 1.0, %v2776
    %v2778 = vrcp.pop %v2771
    %v2779 = vmul.f32 1.0, %v2778
    %v2782 = vrot.slane %v2777, 7
    %vm2783 = vcmask 1046534
    %v2784 = vsel %vm2783, %v2782, %v2773
    %v2786 = vsel %vm384, %v2784, 1.0
    %v2787 = vadd.f32 %v2670, %v955
    %v2788 = vadd.f32 %v2739, %v955
    %v2791 = vrot.slane %v2787, 3
    %v2792 = vrot.slane %v2788, 3
    %2793 = vrot.lane.b32.xlu0 %v2791, 32
    %v2794 = vpop.permute.xlu0 %2793
    %2795 = vrot.lane.b32.xlu0 %v2792, 32
    %v2796 = vpop.permute.xlu0 %2795
    %v2797 = vsel %vm78, %v2794, %v2796
    %v2799 = vmul.f32 %v2786, %v2797
    %v2801 = vrot.slane %v2799, 1
    %2802 = vrot.lane.b32.xlu0 %v2799, 96
    %v2803 = vpop.permute.xlu0 %2802
    %2804 = vrot.lane.b32.xlu0 %v2801, 96
    %v2805 = vpop.permute.xlu0 %2804
    %v2808 = vadd.f32 %v711, %v2803
    %v2809 = vadd.f32 %v712, %v2803
    %v2810 = vadd.f32 %v714, %v2805
    %v2811 = vadd.f32 %v715, %v2805
    %v2812 = vtanh.pop %v2808
    %v2813 = vtanh.pop %v2809
    %v2814 = vtanh.pop %v2810
    %v2815 = vtanh.pop %v2811
    %v2818 = vrot.slane %v2812, 1
    %v2819 = vsel %vm2414, %v2814, %v2818
    %2820 = vrot.lane.b32.xlu0 %v2819, 32
    %v2821 = vpop.permute.xlu0 %2820
    %v2823 = vsub.f32 %v2570, %v2821
    %v2825 = vrot.slane %v2823, 7
    %2826 = vrot.lane.b32.xlu0 %v2825, 64
    %v2827 = vpop.permute.xlu0 %2826
    %2828 = vrot.lane.b32.xlu0 %v2823, 64
    %v2829 = vpop.permute.xlu0 %2828
    %v2832 = vmul.f32 %v2773, %v2827
    %v2833 = vmul.f32 %v2777, %v2829
    %2836 = vrot.lane.b32.xlu0 %v2832, 32
    %v2837 = vpop.permute.xlu0 %2836
    %2838 = vrot.lane.b32.xlu0 %v2833, 32
    %v2839 = vpop.permute.xlu0 %2838
    %v2842 = vadd.f32 %v2812, %v2837
    %v2843 = vadd.f32 %v2814, %v2839
    %v2846 = vrot.slane %v2813, 1
    %v2847 = vsel %vm2414, %v2815, %v2846
    %2848 = vrot.lane.b32.xlu0 %v2847, 32
    %v2849 = vpop.permute.xlu0 %2848
    %v2851 = vsub.f32 %v2570, %v2849
    %v2853 = vrot.slane %v2851, 7
    %2854 = vrot.lane.b32.xlu0 %v2853, 64
    %v2855 = vpop.permute.xlu0 %2854
    %2856 = vrot.lane.b32.xlu0 %v2851, 64
    %v2857 = vpop.permute.xlu0 %2856
    %v2860 = vmul.f32 %v2773, %v2855
    %v2861 = vmul.f32 %v2777, %v2857
    %2864 = vrot.lane.b32.xlu0 %v2860, 32
    %v2865 = vpop.permute.xlu0 %2864
    %2866 = vrot.lane.b32.xlu0 %v2861, 32
    %v2867 = vpop.permute.xlu0 %2866
    %v2870 = vadd.f32 %v2813, %v2865
    %v2871 = vadd.f32 %v2815, %v2867
    %v2872 = vrot.slane %v2570, 7
    %2873 = vrot.lane.b32.xlu0 %v2872, 64
    %v2874 = vpop.permute.xlu0 %2873
    %2875 = vrot.lane.b32.xlu0 %v2570, 64
    %v2876 = vpop.permute.xlu0 %2875
    %v2879 = vmul.f32 %v2775, %v2874
    %v2880 = vmul.f32 %v2779, %v2876
    %2881 = vrot.lane.b32.xlu0 %v2813, 96
    %v2882 = vpop.permute.xlu0 %2881
    %2883 = vrot.lane.b32.xlu0 %v2815, 96
    %v2884 = vpop.permute.xlu0 %2883
    %v2887 = vmul.f32 %v2775, %v2882
    %v2888 = vmul.f32 %v2779, %v2884
    %2891 = vrot.lane.b32.xlu0 %v2887, 32
    %v2892 = vpop.permute.xlu0 %2891
    %2893 = vrot.lane.b32.xlu0 %v2888, 32
    %v2894 = vpop.permute.xlu0 %2893
    %v2897 = vadd.f32 %v2879, %v2892
    %v2898 = vadd.f32 %v2880, %v2894
    %v2899 = vtanh.pop %v2897
    %v2900 = vtanh.pop %v2898
    %2903 = vrot.lane.b32.xlu0 %v2899, 32
    %v2904 = vpop.permute.xlu0 %2903
    %2905 = vrot.lane.b32.xlu0 %v2900, 32
    %v2906 = vpop.permute.xlu0 %2905
    %v2909 = vmul.f32 %v2775, %v2904
    %v2910 = vmul.f32 %v2779, %v2906
    %v2913 = vrot.slane %v2843, 7
    %v2914 = vsel %vm2783, %v2913, %v2842
    %2915 = vrot.lane.b32.xlu0 %v2914, 32
    %v2916 = vpop.permute.xlu0 %2915
    %v2920 = vrot.slane %v2871, 7
    %v2921 = vsel %vm2783, %v2920, %v2870
    %2922 = vrot.lane.b32.xlu0 %v2921, 32
    %v2923 = vpop.permute.xlu0 %2922
    %v2927 = vrot.slane %v2910, 7
    %v2928 = vsel %vm2783, %v2927, %v2909
    %v2932 = vrot.slane %v2898, 7
    %v2933 = vsel %vm2783, %v2932, %v2897
    %2934 = vrot.lane.b32.xlu0 %v2933, 64
    %v2935 = vpop.permute.xlu0 %2934
    %v2937 = vsel %vm78, %v2916, %v2923
    %v2938 = vsel %vm384, %v2937, %v2928
    %v2939 = vsel %vm387, %v2938, %v2935
    %v2941 = vcombine.high %v2939, %v2939
    %v2943 = vunpack.c.l.s4 1966171168
    %v2944 = vunpack.c.0.s8 %v2943
    %v2945 = vlaneseq
    %v2946 = vshrl.u32 %v2945, 7
    %v2947 = vsub.s32 %v2944, %v2946
    %v2948 = vrot.slane %v2941, %v2947
    %v2949 = vcombine.high %v2948, %v2948
    %v2951 = vunpack.c.l.s4 1966171168
    %v2952 = vunpack.c.0.s8 %v2951
    %v2953 = vlaneseq
    %v2954 = vshrl.u32 %v2953, 7
    %v2955 = vsub.s32 %v2952, %v2954
    %v2956 = vrot.slane %v2948, %v2955
    %v2958 = vunpack.c.l.s4 1966171168
    %v2959 = vunpack.c.0.s8 %v2958
    %v2960 = vlaneseq
    %v2961 = vshrl.u32 %v2960, 7
    %v2962 = vsub.s32 %v2959, %v2961
    %v2963 = vrot.slane %v2949, %v2962
    %v2964 = vcombine.high %v2956, %v2956
    %2967 = vst [vmem:[#allocation2 + $0x5] sm:$0x1] %v2963
    %2968 = vst [vmem:[#allocation2 + $0xd] sm:$0x1] %v2964
    %v2969 = vrot.slane %v2939, 5
    %2971 = vmatprep.subr.mxu0 %v717
    %2972 = vmatpush1.msra.mxu0 %v716
    %2973 = vmatprep.subr.mxu0 %v720
    %2974 = vmatpush1.msra.mxu0 %v719
    %2975 = vmatprep.subr.mxu0 %v723
    %2976 = vmatpush1.msra.mxu0 %v722
    %2977 = vmatprep.subr.mxu0 %v726
    %2978 = vmatpush1.msra.mxu0 %v725
    %2979 = vmatprep.subr.mxu0 %v729
    %2980 = vmatpush1.msra.mxu0 %v728
    %2981 = vmatprep.subr.mxu0 %v732
    %2982 = vmatpush1.msra.mxu0 %v731
    %2983 = vmatprep.subr.mxu0 %v735
    %2984 = vmatpush1.msra.mxu0 %v734
    %2985 = vmatprep.subr.mxu0 %v738
    %2986 = vmatpush1.msra.mxu0 %v737
    %2987 = vmatprep.subr.mxu0 %v741
    %2988 = vmatpush1.msra.mxu0 %v740
    %2989 = vmatprep.subr.mxu0 %v744
    %2990 = vmatpush1.msra.mxu0 %v743
    %2991 = vmatprep.subr.mxu0 %v747
    %2992 = vmatpush1.msra.mxu0 %v746
    %2993 = vmatprep.subr.mxu0 %v750
    %2994 = vmatpush1.msra.mxu0 %v749
    %2995 = vmatprep.subr.mxu0 %v753
    %2996 = vmatpush1.msra.mxu0 %v752
    %2997 = vmatprep.subr.mxu0 %v756
    %2998 = vmatpush1.msra.mxu0 %v755
    %2999 = vmatprep.subr.mxu0 %v759
    %3000 = vmatpush1.msra.mxu0 %v758
    %3001 = vmatprep.subr.mxu0 %v762
    %3002 = vmatpush1.msra.mxu0 %v761
    %3003 = vmatprep.subr.mxu0 0.0
    %3004 = vmatpush1.msra.mxu0 0.0
    %3005 = vmatprep.subr.mxu0 0.0
    %3006 = vmatpush1.msra.mxu0 0.0
    %3007 = vmatprep.subr.mxu0 0.0
    %3008 = vmatpush1.msra.mxu0 0.0
    %3009 = vmatprep.subr.mxu0 0.0
    %3010 = vmatpush1.msra.mxu0 0.0
    %3011 = vmatprep.subr.mxu0 0.0
    %3012 = vmatpush1.msra.mxu0 0.0
    %3013 = vmatprep.subr.mxu0 0.0
    %3014 = vmatpush1.msra.mxu0 0.0
    %3015 = vmatprep.subr.mxu0 0.0
    %3016 = vmatpush1.msra.mxu0 0.0
    %3017 = vmatprep.subr.mxu0 0.0
    %3018 = vmatpush1.msra.mxu0 0.0
    %3019 = vmatprep.subr.mxu0 0.0
    %3020 = vmatpush1.msra.mxu0 0.0
    %3021 = vmatprep.subr.mxu0 0.0
    %3022 = vmatpush1.msra.mxu0 0.0
    %3023 = vmatprep.subr.mxu0 0.0
    %3024 = vmatpush1.msra.mxu0 0.0
    %3025 = vmatprep.subr.mxu0 0.0
    %3026 = vmatpush1.msra.mxu0 0.0
    %3027 = vmatprep.subr.mxu0 0.0
    %3028 = vmatpush1.msra.mxu0 0.0
    %3029 = vmatprep.subr.mxu0 0.0
    %3030 = vmatpush1.msra.mxu0 0.0
    %3031 = vmatprep.subr.mxu0 0.0
    %3032 = vmatpush1.msra.mxu0 0.0
    %3033 = vmatprep.subr.mxu0 0.0
    %3034 = vmatpush1.msra.mxu0 0.0
    %3035 = vmatprep.mubr.f32.mxu0 0.0
    %3036 = vmatmul.mubr.f32.gmra.mrb[0].mxu0 %v2969
    %v3037 = vpop.f32.mrb[0].mxu0
    %v3038 = vadd.f32 0.0, %v3037
    %v3039 = vpop.f32.mrb[0].mxu0
    %v3040 = vadd.f32 0.0, %v3039
    %3041 = vdwg.mxu0
    %3042 = vmatprep.subr.mxu0 0.0
    %3043 = vmatpush1.msra.mxu0 %v718
    %3044 = vmatprep.subr.mxu0 0.0
    %3045 = vmatpush1.msra.mxu0 %v721
    %3046 = vmatprep.subr.mxu0 0.0
    %3047 = vmatpush1.msra.mxu0 %v724
    %3048 = vmatprep.subr.mxu0 0.0
    %3049 = vmatpush1.msra.mxu0 %v727
    %3050 = vmatprep.subr.mxu0 0.0
    %3051 = vmatpush1.msra.mxu0 %v730
    %3052 = vmatprep.subr.mxu0 0.0
    %3053 = vmatpush1.msra.mxu0 %v733
    %3054 = vmatprep.subr.mxu0 0.0
    %3055 = vmatpush1.msra.mxu0 %v736
    %3056 = vmatprep.subr.mxu0 0.0
    %3057 = vmatpush1.msra.mxu0 %v739
    %3058 = vmatprep.subr.mxu0 0.0
    %3059 = vmatpush1.msra.mxu0 %v742
    %3060 = vmatprep.subr.mxu0 0.0
    %3061 = vmatpush1.msra.mxu0 %v745
    %3062 = vmatprep.subr.mxu0 0.0
    %3063 = vmatpush1.msra.mxu0 %v748
    %3064 = vmatprep.subr.mxu0 0.0
    %3065 = vmatpush1.msra.mxu0 %v751
    %3066 = vmatprep.subr.mxu0 0.0
    %3067 = vmatpush1.msra.mxu0 %v754
    %3068 = vmatprep.subr.mxu0 0.0
    %3069 = vmatpush1.msra.mxu0 %v757
    %3070 = vmatprep.subr.mxu0 0.0
    %3071 = vmatpush1.msra.mxu0 %v760
    %3072 = vmatprep.subr.mxu0 0.0
    %3073 = vmatpush1.msra.mxu0 %v763
    %3074 = vmatprep.subr.mxu0 0.0
    %3075 = vmatpush1.msra.mxu0 0.0
    %3076 = vmatprep.subr.mxu0 0.0
    %3077 = vmatpush1.msra.mxu0 0.0
    %3078 = vmatprep.subr.mxu0 0.0
    %3079 = vmatpush1.msra.mxu0 0.0
    %3080 = vmatprep.subr.mxu0 0.0
    %3081 = vmatpush1.msra.mxu0 0.0
    %3082 = vmatprep.subr.mxu0 0.0
    %3083 = vmatpush1.msra.mxu0 0.0
    %3084 = vmatprep.subr.mxu0 0.0
    %3085 = vmatpush1.msra.mxu0 0.0
    %3086 = vmatprep.subr.mxu0 0.0
    %3087 = vmatpush1.msra.mxu0 0.0
    %3088 = vmatprep.subr.mxu0 0.0
    %3089 = vmatpush1.msra.mxu0 0.0
    %3090 = vmatprep.subr.mxu0 0.0
    %3091 = vmatpush1.msra.mxu0 0.0
    %3092 = vmatprep.subr.mxu0 0.0
    %3093 = vmatpush1.msra.mxu0 0.0
    %3094 = vmatprep.subr.mxu0 0.0
    %3095 = vmatpush1.msra.mxu0 0.0
    %3096 = vmatprep.subr.mxu0 0.0
    %3097 = vmatpush1.msra.mxu0 0.0
    %3098 = vmatprep.subr.mxu0 0.0
    %3099 = vmatpush1.msra.mxu0 0.0
    %3100 = vmatprep.subr.mxu0 0.0
    %3101 = vmatpush1.msra.mxu0 0.0
    %3102 = vmatprep.subr.mxu0 0.0
    %3103 = vmatpush1.msra.mxu0 0.0
    %3104 = vmatprep.subr.mxu0 0.0
    %3105 = vmatpush1.msra.mxu0 0.0
    %3106 = vmatprep.mubr.f32.mxu0 0.0
    %3107 = vmatmul.mubr.f32.gmra.mrb[0].mxu0 %v2969
    %v3108 = vpop.f32.mrb[0].mxu0
    %v3109 = vadd.f32 0.0, %v3108
    %v3110 = vpop.f32.mrb[0].mxu0
    %3111 = vdwg.mxu0
    %v3114 = vrot.slane %v3038, 2
    %v3115 = vrot.slane %v3040, 2
    %v3116 = vrot.slane %v3038, 3
    %v3117 = vrot.slane %v3040, 3
    %v3122 = vadd.f32 %v710, %v3114
    %v3123 = vadd.f32 %v711, %v3115
    %v3124 = vadd.f32 %v713, %v3116
    %v3125 = vadd.f32 %v714, %v3117
    %v3126 = vxor.u32 %v3122, 2147483648
    %v3127 = vxor.u32 %v3123, 2147483648
    %v3128 = vxor.u32 %v3124, 2147483648
    %v3129 = vxor.u32 %v3125, 2147483648
    %v3130 = vmul.f32 %v3126, 1.442695
    %v3131 = vpow.pop %v3130
    %v3132 = vmul.f32 %v3127, 1.442695
    %v3133 = vpow.pop %v3132
    %v3134 = vmul.f32 %v3128, 1.442695
    %v3135 = vpow.pop %v3134
    %v3136 = vmul.f32 %v3129, 1.442695
    %v3137 = vpow.pop %v3136
    %v3138 = vadd.f32 %v3131, 1.0
    %v3139 = vadd.f32 %v3133, 1.0
    %v3140 = vadd.f32 %v3135, 1.0
    %v3141 = vadd.f32 %v3137, 1.0
    %v3142 = vrcp.pop %v3138
    %v3143 = vmul.f32 1.0, %v3142
    %v3144 = vrcp.pop %v3139
    %v3145 = vmul.f32 1.0, %v3144
    %v3146 = vrcp.pop %v3140
    %v3147 = vmul.f32 1.0, %v3146
    %v3148 = vrcp.pop %v3141
    %v3149 = vmul.f32 1.0, %v3148
    %v3152 = vrot.slane %v3147, 7
    %vm3153 = vcmask 1047559
    %v3154 = vsel %vm3153, %v3152, %v3143
    %v3156 = vsel %vm384, %v3154, 1.0
    %v3157 = vadd.f32 %v3040, %v955
    %v3158 = vadd.f32 %v3109, %v955
    %v3161 = vrot.slane %v3157, 2
    %v3162 = vrot.slane %v3158, 2
    %3163 = vrot.lane.b32.xlu0 %v3161, 32
    %v3164 = vpop.permute.xlu0 %3163
    %3165 = vrot.lane.b32.xlu0 %v3162, 32
    %v3166 = vpop.permute.xlu0 %3165
    %v3167 = vsel %vm78, %v3164, %v3166
    %v3169 = vmul.f32 %v3156, %v3167
    %v3171 = vrot.slane %v3169, 1
    %3172 = vrot.lane.b32.xlu0 %v3169, 96
    %v3173 = vpop.permute.xlu0 %3172
    %3174 = vrot.lane.b32.xlu0 %v3171, 96
    %v3175 = vpop.permute.xlu0 %3174
    %v3178 = vadd.f32 %v711, %v3173
    %v3179 = vadd.f32 %v712, %v3173
    %v3180 = vadd.f32 %v714, %v3175
    %v3181 = vadd.f32 %v715, %v3175
    %v3182 = vtanh.pop %v3178
    %v3183 = vtanh.pop %v3179
    %v3184 = vtanh.pop %v3180
    %v3185 = vtanh.pop %v3181
    %v3188 = vrot.slane %v3182, 1
    %v3189 = vsel %vm2783, %v3184, %v3188
    %3190 = vrot.lane.b32.xlu0 %v3189, 32
    %v3191 = vpop.permute.xlu0 %3190
    %v3193 = vsub.f32 %v2939, %v3191
    %v3195 = vrot.slane %v3193, 7
    %3196 = vrot.lane.b32.xlu0 %v3195, 64
    %v3197 = vpop.permute.xlu0 %3196
    %3198 = vrot.lane.b32.xlu0 %v3193, 64
    %v3199 = vpop.permute.xlu0 %3198
    %v3202 = vmul.f32 %v3143, %v3197
    %v3203 = vmul.f32 %v3147, %v3199
    %3206 = vrot.lane.b32.xlu0 %v3202, 32
    %v3207 = vpop.permute.xlu0 %3206
    %3208 = vrot.lane.b32.xlu0 %v3203, 32
    %v3209 = vpop.permute.xlu0 %3208
    %v3212 = vadd.f32 %v3182, %v3207
    %v3213 = vadd.f32 %v3184, %v3209
    %v3216 = vrot.slane %v3183, 1
    %v3217 = vsel %vm2783, %v3185, %v3216
    %3218 = vrot.lane.b32.xlu0 %v3217, 32
    %v3219 = vpop.permute.xlu0 %3218
    %v3221 = vsub.f32 %v2939, %v3219
    %v3223 = vrot.slane %v3221, 7
    %3224 = vrot.lane.b32.xlu0 %v3223, 64
    %v3225 = vpop.permute.xlu0 %3224
    %3226 = vrot.lane.b32.xlu0 %v3221, 64
    %v3227 = vpop.permute.xlu0 %3226
    %v3230 = vmul.f32 %v3143, %v3225
    %v3231 = vmul.f32 %v3147, %v3227
    %3234 = vrot.lane.b32.xlu0 %v3230, 32
    %v3235 = vpop.permute.xlu0 %3234
    %3236 = vrot.lane.b32.xlu0 %v3231, 32
    %v3237 = vpop.permute.xlu0 %3236
    %v3240 = vadd.f32 %v3183, %v3235
    %v3241 = vadd.f32 %v3185, %v3237
    %v3242 = vrot.slane %v2939, 7
    %3243 = vrot.lane.b32.xlu0 %v3242, 64
    %v3244 = vpop.permute.xlu0 %3243
    %3245 = vrot.lane.b32.xlu0 %v2939, 64
    %v3246 = vpop.permute.xlu0 %3245
    %v3249 = vmul.f32 %v3145, %v3244
    %v3250 = vmul.f32 %v3149, %v3246
    %3251 = vrot.lane.b32.xlu0 %v3183, 96
    %v3252 = vpop.permute.xlu0 %3251
    %3253 = vrot.lane.b32.xlu0 %v3185, 96
    %v3254 = vpop.permute.xlu0 %3253
    %v3257 = vmul.f32 %v3145, %v3252
    %v3258 = vmul.f32 %v3149, %v3254
    %3261 = vrot.lane.b32.xlu0 %v3257, 32
    %v3262 = vpop.permute.xlu0 %3261
    %3263 = vrot.lane.b32.xlu0 %v3258, 32
    %v3264 = vpop.permute.xlu0 %3263
    %v3267 = vadd.f32 %v3249, %v3262
    %v3268 = vadd.f32 %v3250, %v3264
    %v3269 = vtanh.pop %v3267
    %v3270 = vtanh.pop %v3268
    %3273 = vrot.lane.b32.xlu0 %v3269, 32
    %v3274 = vpop.permute.xlu0 %3273
    %3275 = vrot.lane.b32.xlu0 %v3270, 32
    %v3276 = vpop.permute.xlu0 %3275
    %v3279 = vmul.f32 %v3145, %v3274
    %v3280 = vmul.f32 %v3149, %v3276
    %v3283 = vrot.slane %v3213, 7
    %v3284 = vsel %vm3153, %v3283, %v3212
    %3285 = vrot.lane.b32.xlu0 %v3284, 32
    %v3286 = vpop.permute.xlu0 %3285
    %v3290 = vrot.slane %v3241, 7
    %v3291 = vsel %vm3153, %v3290, %v3240
    %3292 = vrot.lane.b32.xlu0 %v3291, 32
    %v3293 = vpop.permute.xlu0 %3292
    %v3297 = vrot.slane %v3280, 7
    %v3298 = vsel %vm3153, %v3297, %v3279
    %v3302 = vrot.slane %v3268, 7
    %v3303 = vsel %vm3153, %v3302, %v3267
    %3304 = vrot.lane.b32.xlu0 %v3303, 64
    %v3305 = vpop.permute.xlu0 %3304
    %v3307 = vsel %vm78, %v3286, %v3293
    %v3308 = vsel %vm384, %v3307, %v3298
    %v3309 = vsel %vm387, %v3308, %v3305
    %v3311 = vcombine.high %v3309, %v3309
    %v3313 = vunpack.c.l.s4 1966171168
    %v3314 = vunpack.c.0.s8 %v3313
    %v3315 = vlaneseq
    %v3316 = vshrl.u32 %v3315, 7
    %v3317 = vsub.s32 %v3314, %v3316
    %v3318 = vrot.slane %v3311, %v3317
    %v3319 = vcombine.high %v3318, %v3318
    %v3321 = vunpack.c.l.s4 1966171168
    %v3322 = vunpack.c.0.s8 %v3321
    %v3323 = vlaneseq
    %v3324 = vshrl.u32 %v3323, 7
    %v3325 = vsub.s32 %v3322, %v3324
    %v3326 = vrot.slane %v3318, %v3325
    %v3328 = vunpack.c.l.s4 1966171168
    %v3329 = vunpack.c.0.s8 %v3328
    %v3330 = vlaneseq
    %v3331 = vshrl.u32 %v3330, 7
    %v3332 = vsub.s32 %v3329, %v3331
    %v3333 = vrot.slane %v3319, %v3332
    %v3334 = vcombine.high %v3326, %v3326
    %v3335 = vcombine.high %v3333, %v3333
    %3338 = vst [vmem:[#allocation2 + $0x6] sm:$0x1] %v3334
    %3339 = vst [vmem:[#allocation2 + $0xe] sm:$0x1] %v3335
    %v3340 = vrot.slane %v3309, 6
    %3342 = vmatprep.subr.mxu0 %v717
    %3343 = vmatpush1.msra.mxu0 %v716
    %3344 = vmatprep.subr.mxu0 %v720
    %3345 = vmatpush1.msra.mxu0 %v719
    %3346 = vmatprep.subr.mxu0 %v723
    %3347 = vmatpush1.msra.mxu0 %v722
    %3348 = vmatprep.subr.mxu0 %v726
    %3349 = vmatpush1.msra.mxu0 %v725
    %3350 = vmatprep.subr.mxu0 %v729
    %3351 = vmatpush1.msra.mxu0 %v728
    %3352 = vmatprep.subr.mxu0 %v732
    %3353 = vmatpush1.msra.mxu0 %v731
    %3354 = vmatprep.subr.mxu0 %v735
    %3355 = vmatpush1.msra.mxu0 %v734
    %3356 = vmatprep.subr.mxu0 %v738
    %3357 = vmatpush1.msra.mxu0 %v737
    %3358 = vmatprep.subr.mxu0 %v741
    %3359 = vmatpush1.msra.mxu0 %v740
    %3360 = vmatprep.subr.mxu0 %v744
    %3361 = vmatpush1.msra.mxu0 %v743
    %3362 = vmatprep.subr.mxu0 %v747
    %3363 = vmatpush1.msra.mxu0 %v746
    %3364 = vmatprep.subr.mxu0 %v750
    %3365 = vmatpush1.msra.mxu0 %v749
    %3366 = vmatprep.subr.mxu0 %v753
    %3367 = vmatpush1.msra.mxu0 %v752
    %3368 = vmatprep.subr.mxu0 %v756
    %3369 = vmatpush1.msra.mxu0 %v755
    %3370 = vmatprep.subr.mxu0 %v759
    %3371 = vmatpush1.msra.mxu0 %v758
    %3372 = vmatprep.subr.mxu0 %v762
    %3373 = vmatpush1.msra.mxu0 %v761
    %3374 = vmatprep.subr.mxu0 0.0
    %3375 = vmatpush1.msra.mxu0 0.0
    %3376 = vmatprep.subr.mxu0 0.0
    %3377 = vmatpush1.msra.mxu0 0.0
    %3378 = vmatprep.subr.mxu0 0.0
    %3379 = vmatpush1.msra.mxu0 0.0
    %3380 = vmatprep.subr.mxu0 0.0
    %3381 = vmatpush1.msra.mxu0 0.0
    %3382 = vmatprep.subr.mxu0 0.0
    %3383 = vmatpush1.msra.mxu0 0.0
    %3384 = vmatprep.subr.mxu0 0.0
    %3385 = vmatpush1.msra.mxu0 0.0
    %3386 = vmatprep.subr.mxu0 0.0
    %3387 = vmatpush1.msra.mxu0 0.0
    %3388 = vmatprep.subr.mxu0 0.0
    %3389 = vmatpush1.msra.mxu0 0.0
    %3390 = vmatprep.subr.mxu0 0.0
    %3391 = vmatpush1.msra.mxu0 0.0
    %3392 = vmatprep.subr.mxu0 0.0
    %3393 = vmatpush1.msra.mxu0 0.0
    %3394 = vmatprep.subr.mxu0 0.0
    %3395 = vmatpush1.msra.mxu0 0.0
    %3396 = vmatprep.subr.mxu0 0.0
    %3397 = vmatpush1.msra.mxu0 0.0
    %3398 = vmatprep.subr.mxu0 0.0
    %3399 = vmatpush1.msra.mxu0 0.0
    %3400 = vmatprep.subr.mxu0 0.0
    %3401 = vmatpush1.msra.mxu0 0.0
    %3402 = vmatprep.subr.mxu0 0.0
    %3403 = vmatpush1.msra.mxu0 0.0
    %3404 = vmatprep.subr.mxu0 0.0
    %3405 = vmatpush1.msra.mxu0 0.0
    %3406 = vmatprep.mubr.f32.mxu0 0.0
    %3407 = vmatmul.mubr.f32.gmra.mrb[0].mxu0 %v3340
    %v3408 = vpop.f32.mrb[0].mxu0
    %v3409 = vadd.f32 0.0, %v3408
    %v3410 = vpop.f32.mrb[0].mxu0
    %v3411 = vadd.f32 0.0, %v3410
    %3412 = vdwg.mxu0
    %3413 = vmatprep.subr.mxu0 0.0
    %3414 = vmatpush1.msra.mxu0 %v718
    %3415 = vmatprep.subr.mxu0 0.0
    %3416 = vmatpush1.msra.mxu0 %v721
    %3417 = vmatprep.subr.mxu0 0.0
    %3418 = vmatpush1.msra.mxu0 %v724
    %3419 = vmatprep.subr.mxu0 0.0
    %3420 = vmatpush1.msra.mxu0 %v727
    %3421 = vmatprep.subr.mxu0 0.0
    %3422 = vmatpush1.msra.mxu0 %v730
    %3423 = vmatprep.subr.mxu0 0.0
    %3424 = vmatpush1.msra.mxu0 %v733
    %3425 = vmatprep.subr.mxu0 0.0
    %3426 = vmatpush1.msra.mxu0 %v736
    %3427 = vmatprep.subr.mxu0 0.0
    %3428 = vmatpush1.msra.mxu0 %v739
    %3429 = vmatprep.subr.mxu0 0.0
    %3430 = vmatpush1.msra.mxu0 %v742
    %3431 = vmatprep.subr.mxu0 0.0
    %3432 = vmatpush1.msra.mxu0 %v745
    %3433 = vmatprep.subr.mxu0 0.0
    %3434 = vmatpush1.msra.mxu0 %v748
    %3435 = vmatprep.subr.mxu0 0.0
    %3436 = vmatpush1.msra.mxu0 %v751
    %3437 = vmatprep.subr.mxu0 0.0
    %3438 = vmatpush1.msra.mxu0 %v754
    %3439 = vmatprep.subr.mxu0 0.0
    %3440 = vmatpush1.msra.mxu0 %v757
    %3441 = vmatprep.subr.mxu0 0.0
    %3442 = vmatpush1.msra.mxu0 %v760
    %3443 = vmatprep.subr.mxu0 0.0
    %3444 = vmatpush1.msra.mxu0 %v763
    %3445 = vmatprep.subr.mxu0 0.0
    %3446 = vmatpush1.msra.mxu0 0.0
    %3447 = vmatprep.subr.mxu0 0.0
    %3448 = vmatpush1.msra.mxu0 0.0
    %3449 = vmatprep.subr.mxu0 0.0
    %3450 = vmatpush1.msra.mxu0 0.0
    %3451 = vmatprep.subr.mxu0 0.0
    %3452 = vmatpush1.msra.mxu0 0.0
    %3453 = vmatprep.subr.mxu0 0.0
    %3454 = vmatpush1.msra.mxu0 0.0
    %3455 = vmatprep.subr.mxu0 0.0
    %3456 = vmatpush1.msra.mxu0 0.0
    %3457 = vmatprep.subr.mxu0 0.0
    %3458 = vmatpush1.msra.mxu0 0.0
    %3459 = vmatprep.subr.mxu0 0.0
    %3460 = vmatpush1.msra.mxu0 0.0
    %3461 = vmatprep.subr.mxu0 0.0
    %3462 = vmatpush1.msra.mxu0 0.0
    %3463 = vmatprep.subr.mxu0 0.0
    %3464 = vmatpush1.msra.mxu0 0.0
    %3465 = vmatprep.subr.mxu0 0.0
    %3466 = vmatpush1.msra.mxu0 0.0
    %3467 = vmatprep.subr.mxu0 0.0
    %3468 = vmatpush1.msra.mxu0 0.0
    %3469 = vmatprep.subr.mxu0 0.0
    %3470 = vmatpush1.msra.mxu0 0.0
    %3471 = vmatprep.subr.mxu0 0.0
    %3472 = vmatpush1.msra.mxu0 0.0
    %3473 = vmatprep.subr.mxu0 0.0
    %3474 = vmatpush1.msra.mxu0 0.0
    %3475 = vmatprep.subr.mxu0 0.0
    %3476 = vmatpush1.msra.mxu0 0.0
    %3477 = vmatprep.mubr.f32.mxu0 0.0
    %3478 = vmatmul.mubr.f32.gmra.mrb[0].mxu0 %v3340
    %v3479 = vpop.f32.mrb[0].mxu0
    %v3480 = vadd.f32 0.0, %v3479
    %v3481 = vpop.f32.mrb[0].mxu0
    %3482 = vdwg.mxu0
    %v3485 = vrot.slane %v3409, 1
    %v3486 = vrot.slane %v3411, 1
    %v3487 = vrot.slane %v3409, 2
    %v3488 = vrot.slane %v3411, 2
    %v3493 = vadd.f32 %v710, %v3485
    %v3494 = vadd.f32 %v711, %v3486
    %v3495 = vadd.f32 %v713, %v3487
    %v3496 = vadd.f32 %v714, %v3488
    %v3497 = vxor.u32 %v3493, 2147483648
    %v3498 = vxor.u32 %v3494, 2147483648
    %v3499 = vxor.u32 %v3495, 2147483648
    %v3500 = vxor.u32 %v3496, 2147483648
    %v3501 = vmul.f32 %v3497, 1.442695
    %v3502 = vpow.pop %v3501
    %v3503 = vmul.f32 %v3498, 1.442695
    %v3504 = vpow.pop %v3503
    %v3505 = vmul.f32 %v3499, 1.442695
    %v3506 = vpow.pop %v3505
    %v3507 = vmul.f32 %v3500, 1.442695
    %v3508 = vpow.pop %v3507
    %v3509 = vadd.f32 %v3502, 1.0
    %v3510 = vadd.f32 %v3504, 1.0
    %v3511 = vadd.f32 %v3506, 1.0
    %v3512 = vadd.f32 %v3508, 1.0
    %v3513 = vrcp.pop %v3509
    %v3514 = vmul.f32 1.0, %v3513
    %v3515 = vrcp.pop %v3510
    %v3516 = vmul.f32 1.0, %v3515
    %v3517 = vrcp.pop %v3511
    %v3518 = vmul.f32 1.0, %v3517
    %v3519 = vrcp.pop %v3512
    %v3520 = vmul.f32 1.0, %v3519
    %v3523 = vrot.slane %v3518, 7
    %v3526 = vsel %vm384, %v3514, 1.0
    %v3527 = vsel %vm384, %v3523, 1.0
    %v3528 = vadd.f32 %v3411, %v955
    %v3529 = vadd.f32 %v3480, %v955
    %v3532 = vrot.slane %v3528, 1
    %v3533 = vrot.slane %v3529, 1
    %3534 = vrot.lane.b32.xlu0 %v3532, 32
    %v3535 = vpop.permute.xlu0 %3534
    %3536 = vrot.lane.b32.xlu0 %v3533, 32
    %v3537 = vpop.permute.xlu0 %3536
    %v3538 = vsel %vm78, %v3535, %v3537
    %v3540 = vmul.f32 %v3526, %v3538
    %v3541 = vmul.f32 %v3527, %v3538
    %v3544 = vrot.slane %v3541, 1
    %3545 = vrot.lane.b32.xlu0 %v3540, 96
    %v3546 = vpop.permute.xlu0 %3545
    %3547 = vrot.lane.b32.xlu0 %v3544, 96
    %v3548 = vpop.permute.xlu0 %3547
    %v3551 = vadd.f32 %v711, %v3546
    %v3552 = vadd.f32 %v712, %v3546
    %v3553 = vadd.f32 %v714, %v3548
    %v3554 = vadd.f32 %v715, %v3548
    %v3555 = vtanh.pop %v3551
    %v3556 = vtanh.pop %v3552
    %v3557 = vtanh.pop %v3553
    %v3558 = vtanh.pop %v3554
    %v3561 = vrot.slane %v3555, 1
    %v3562 = vsel %vm3153, %v3557, %v3561
    %3563 = vrot.lane.b32.xlu0 %v3562, 32
    %v3564 = vpop.permute.xlu0 %3563
    %v3566 = vsub.f32 %v3309, %v3564
    %v3568 = vrot.slane %v3566, 7
    %3569 = vrot.lane.b32.xlu0 %v3568, 64
    %v3570 = vpop.permute.xlu0 %3569
    %3571 = vrot.lane.b32.xlu0 %v3566, 64
    %v3572 = vpop.permute.xlu0 %3571
    %v3575 = vmul.f32 %v3514, %v3570
    %v3576 = vmul.f32 %v3518, %v3572
    %3579 = vrot.lane.b32.xlu0 %v3575, 32
    %v3580 = vpop.permute.xlu0 %3579
    %3581 = vrot.lane.b32.xlu0 %v3576, 32
    %v3582 = vpop.permute.xlu0 %3581
    %v3585 = vadd.f32 %v3555, %v3580
    %v3586 = vadd.f32 %v3557, %v3582
    %v3589 = vrot.slane %v3556, 1
    %v3590 = vsel %vm3153, %v3558, %v3589
    %3591 = vrot.lane.b32.xlu0 %v3590, 32
    %v3592 = vpop.permute.xlu0 %3591
    %v3594 = vsub.f32 %v3309, %v3592
    %v3596 = vrot.slane %v3594, 7
    %3597 = vrot.lane.b32.xlu0 %v3596, 64
    %v3598 = vpop.permute.xlu0 %3597
    %3599 = vrot.lane.b32.xlu0 %v3594, 64
    %v3600 = vpop.permute.xlu0 %3599
    %v3603 = vmul.f32 %v3514, %v3598
    %v3604 = vmul.f32 %v3518, %v3600
    %3607 = vrot.lane.b32.xlu0 %v3603, 32
    %v3608 = vpop.permute.xlu0 %3607
    %3609 = vrot.lane.b32.xlu0 %v3604, 32
    %v3610 = vpop.permute.xlu0 %3609
    %v3613 = vadd.f32 %v3556, %v3608
    %v3614 = vadd.f32 %v3558, %v3610
    %v3615 = vrot.slane %v3309, 7
    %3616 = vrot.lane.b32.xlu0 %v3615, 64
    %v3617 = vpop.permute.xlu0 %3616
    %3618 = vrot.lane.b32.xlu0 %v3309, 64
    %v3619 = vpop.permute.xlu0 %3618
    %v3622 = vmul.f32 %v3516, %v3617
    %v3623 = vmul.f32 %v3520, %v3619
    %3624 = vrot.lane.b32.xlu0 %v3556, 96
    %v3625 = vpop.permute.xlu0 %3624
    %3626 = vrot.lane.b32.xlu0 %v3558, 96
    %v3627 = vpop.permute.xlu0 %3626
    %v3630 = vmul.f32 %v3516, %v3625
    %v3631 = vmul.f32 %v3520, %v3627
    %3634 = vrot.lane.b32.xlu0 %v3630, 32
    %v3635 = vpop.permute.xlu0 %3634
    %3636 = vrot.lane.b32.xlu0 %v3631, 32
    %v3637 = vpop.permute.xlu0 %3636
    %v3640 = vadd.f32 %v3622, %v3635
    %v3641 = vadd.f32 %v3623, %v3637
    %v3642 = vtanh.pop %v3640
    %v3643 = vtanh.pop %v3641
    %3646 = vrot.lane.b32.xlu0 %v3642, 32
    %v3647 = vpop.permute.xlu0 %3646
    %3648 = vrot.lane.b32.xlu0 %v3643, 32
    %v3649 = vpop.permute.xlu0 %3648
    %v3652 = vmul.f32 %v3516, %v3647
    %v3653 = vmul.f32 %v3520, %v3649
    %v3656 = vrot.slane %v3586, 7
    %3657 = vrot.lane.b32.xlu0 %v3585, 32
    %v3658 = vpop.permute.xlu0 %3657
    %3659 = vrot.lane.b32.xlu0 %v3656, 32
    %v3660 = vpop.permute.xlu0 %3659
    %v3665 = vrot.slane %v3614, 7
    %3666 = vrot.lane.b32.xlu0 %v3613, 32
    %v3667 = vpop.permute.xlu0 %3666
    %3668 = vrot.lane.b32.xlu0 %v3665, 32
    %v3669 = vpop.permute.xlu0 %3668
    %v3674 = vrot.slane %v3653, 7
    %v3679 = vrot.slane %v3641, 7
    %3680 = vrot.lane.b32.xlu0 %v3640, 64
    %v3681 = vpop.permute.xlu0 %3680
    %3682 = vrot.lane.b32.xlu0 %v3679, 64
    %v3683 = vpop.permute.xlu0 %3682
    %v3686 = vsel %vm78, %v3658, %v3667
    %v3687 = vsel %vm78, %v3660, %v3669
    %v3688 = vsel %vm384, %v3686, %v3652
    %v3689 = vsel %vm384, %v3687, %v3674
    %v3690 = vsel %vm387, %v3688, %v3681
    %v3691 = vsel %vm387, %v3689, %v3683
    %v3694 = vcombine.high %v3690, %v3690
    %v3696 = vunpack.c.l.s4 1966171168
    %v3697 = vunpack.c.0.s8 %v3696
    %v3698 = vlaneseq
    %v3699 = vshrl.u32 %v3698, 7
    %v3700 = vsub.s32 %v3697, %v3699
    %v3701 = vrot.slane %v3694, %v3700
    %v3702 = vcombine.high %v3701, %v3701
    %v3704 = vunpack.c.l.s4 1966171168
    %v3705 = vunpack.c.0.s8 %v3704
    %v3706 = vlaneseq
    %v3707 = vshrl.u32 %v3706, 7
    %v3708 = vsub.s32 %v3705, %v3707
    %v3709 = vrot.slane %v3702, %v3708
    %v3710 = vcombine.high %v3709, %v3709
    %v3712 = vunpack.c.l.s4 1966171168
    %v3713 = vunpack.c.0.s8 %v3712
    %v3714 = vlaneseq
    %v3715 = vshrl.u32 %v3714, 7
    %v3716 = vsub.s32 %v3713, %v3715
    %v3717 = vrot.slane %v3691, %v3716
    %v3719 = vunpack.c.l.s4 1966171168
    %v3720 = vunpack.c.0.s8 %v3719
    %v3721 = vlaneseq
    %v3722 = vshrl.u32 %v3721, 7
    %v3723 = vsub.s32 %v3720, %v3722
    %v3724 = vrot.slane %v3717, %v3723
    %3727 = vst [vmem:[#allocation2 + $0x7] sm:$0x1] %v3710
    %3728 = vst [vmem:[#allocation2 + $0xf] sm:$0x1] %v3724
    %v3729 = vld [vmem:[#allocation2] sm:$0xff]
    %v3730 = vld [vmem:[#allocation2 + $0x8] sm:$0xff]
    %3731 = vmatprep.subr.mxu0 0.0
    %3732 = vmatpush1.msra.mxu0 %v3729
    %3733 = vmatprep.subr.mxu0 0.0
    %3734 = vmatpush1.msra.mxu0 0.0
    %3735 = vmatprep.subr.mxu0 0.0
    %3736 = vmatpush1.msra.mxu0 0.0
    %3737 = vmatprep.subr.mxu0 0.0
    %3738 = vmatpush1.msra.mxu0 0.0
    %3739 = vmatprep.subr.mxu0 0.0
    %3740 = vmatpush1.msra.mxu0 0.0
    %3741 = vmatprep.subr.mxu0 0.0
    %3742 = vmatpush1.msra.mxu0 0.0
    %3743 = vmatprep.subr.mxu0 0.0
    %3744 = vmatpush1.msra.mxu0 0.0
    %3745 = vmatprep.subr.mxu0 0.0
    %3746 = vmatpush1.msra.mxu0 0.0
    %3747 = vmatprep.subr.mxu0 0.0
    %3748 = vmatpush1.msra.mxu0 0.0
    %3749 = vmatprep.subr.mxu0 0.0
    %3750 = vmatpush1.msra.mxu0 0.0
    %3751 = vmatprep.subr.mxu0 0.0
    %3752 = vmatpush1.msra.mxu0 0.0
    %3753 = vmatprep.subr.mxu0 0.0
    %3754 = vmatpush1.msra.mxu0 0.0
    %3755 = vmatprep.subr.mxu0 0.0
    %3756 = vmatpush1.msra.mxu0 0.0
    %3757 = vmatprep.subr.mxu0 0.0
    %3758 = vmatpush1.msra.mxu0 0.0
    %3759 = vmatprep.subr.mxu0 0.0
    %3760 = vmatpush1.msra.mxu0 0.0
    %3761 = vmatprep.subr.mxu0 0.0
    %3762 = vmatpush1.msra.mxu0 0.0
    %3763 = vmatprep.subr.mxu0 0.0
    %3764 = vmatpush1.msra.mxu0 0.0
    %3765 = vmatprep.subr.mxu0 0.0
    %3766 = vmatpush1.msra.mxu0 0.0
    %3767 = vmatprep.subr.mxu0 0.0
    %3768 = vmatpush1.msra.mxu0 0.0
    %3769 = vmatprep.subr.mxu0 0.0
    %3770 = vmatpush1.msra.mxu0 0.0
    %3771 = vmatprep.subr.mxu0 0.0
    %3772 = vmatpush1.msra.mxu0 0.0
    %3773 = vmatprep.subr.mxu0 0.0
    %3774 = vmatpush1.msra.mxu0 0.0
    %3775 = vmatprep.subr.mxu0 0.0
    %3776 = vmatpush1.msra.mxu0 0.0
    %3777 = vmatprep.subr.mxu0 0.0
    %3778 = vmatpush1.msra.mxu0 0.0
    %3779 = vmatprep.subr.mxu0 0.0
    %3780 = vmatpush1.msra.mxu0 0.0
    %3781 = vmatprep.subr.mxu0 0.0
    %3782 = vmatpush1.msra.mxu0 0.0
    %3783 = vmatprep.subr.mxu0 0.0
    %3784 = vmatpush1.msra.mxu0 0.0
    %3785 = vmatprep.subr.mxu0 0.0
    %3786 = vmatpush1.msra.mxu0 0.0
    %3787 = vmatprep.subr.mxu0 0.0
    %3788 = vmatpush1.msra.mxu0 0.0
    %3789 = vmatprep.subr.mxu0 0.0
    %3790 = vmatpush1.msra.mxu0 0.0
    %3791 = vmatprep.subr.mxu0 0.0
    %3792 = vmatpush1.msra.mxu0 0.0
    %3793 = vmatprep.subr.mxu0 0.0
    %3794 = vmatpush1.msra.mxu0 0.0
    %3795 = vmatprep.mubr.f32.mxu0 0.0
    %3796 = vmatmul.mubr.f32.gmra.mrb[0].mxu0 %v397
    %v3797 = vpop.f32.mrb[0].mxu0
    %v3798 = vadd.f32 0.0, %v3797
    %v3799 = vpop.f32.mrb[0].mxu0
    %3800 = vdwg.mxu0
    %3801 = vmatprep.subr.mxu0 0.0
    %3802 = vmatpush1.msra.mxu0 %v3730
    %3803 = vmatprep.subr.mxu0 0.0
    %3804 = vmatpush1.msra.mxu0 0.0
    %3805 = vmatprep.subr.mxu0 0.0
    %3806 = vmatpush1.msra.mxu0 0.0
    %3807 = vmatprep.subr.mxu0 0.0
    %3808 = vmatpush1.msra.mxu0 0.0
    %3809 = vmatprep.subr.mxu0 0.0
    %3810 = vmatpush1.msra.mxu0 0.0
    %3811 = vmatprep.subr.mxu0 0.0
    %3812 = vmatpush1.msra.mxu0 0.0
    %3813 = vmatprep.subr.mxu0 0.0
    %3814 = vmatpush1.msra.mxu0 0.0
    %3815 = vmatprep.subr.mxu0 0.0
    %3816 = vmatpush1.msra.mxu0 0.0
    %3817 = vmatprep.subr.mxu0 0.0
    %3818 = vmatpush1.msra.mxu0 0.0
    %3819 = vmatprep.subr.mxu0 0.0
    %3820 = vmatpush1.msra.mxu0 0.0
    %3821 = vmatprep.subr.mxu0 0.0
    %3822 = vmatpush1.msra.mxu0 0.0
    %3823 = vmatprep.subr.mxu0 0.0
    %3824 = vmatpush1.msra.mxu0 0.0
    %3825 = vmatprep.subr.mxu0 0.0
    %3826 = vmatpush1.msra.mxu0 0.0
    %3827 = vmatprep.subr.mxu0 0.0
    %3828 = vmatpush1.msra.mxu0 0.0
    %3829 = vmatprep.subr.mxu0 0.0
    %3830 = vmatpush1.msra.mxu0 0.0
    %3831 = vmatprep.subr.mxu0 0.0
    %3832 = vmatpush1.msra.mxu0 0.0
    %3833 = vmatprep.subr.mxu0 0.0
    %3834 = vmatpush1.msra.mxu0 0.0
    %3835 = vmatprep.subr.mxu0 0.0
    %3836 = vmatpush1.msra.mxu0 0.0
    %3837 = vmatprep.subr.mxu0 0.0
    %3838 = vmatpush1.msra.mxu0 0.0
    %3839 = vmatprep.subr.mxu0 0.0
    %3840 = vmatpush1.msra.mxu0 0.0
    %3841 = vmatprep.subr.mxu0 0.0
    %3842 = vmatpush1.msra.mxu0 0.0
    %3843 = vmatprep.subr.mxu0 0.0
    %3844 = vmatpush1.msra.mxu0 0.0
    %3845 = vmatprep.subr.mxu0 0.0
    %3846 = vmatpush1.msra.mxu0 0.0
    %3847 = vmatprep.subr.mxu0 0.0
    %3848 = vmatpush1.msra.mxu0 0.0
    %3849 = vmatprep.subr.mxu0 0.0
    %3850 = vmatpush1.msra.mxu0 0.0
    %3851 = vmatprep.subr.mxu0 0.0
    %3852 = vmatpush1.msra.mxu0 0.0
    %3853 = vmatprep.subr.mxu0 0.0
    %3854 = vmatpush1.msra.mxu0 0.0
    %3855 = vmatprep.subr.mxu0 0.0
    %3856 = vmatpush1.msra.mxu0 0.0
    %3857 = vmatprep.subr.mxu0 0.0
    %3858 = vmatpush1.msra.mxu0 0.0
    %3859 = vmatprep.subr.mxu0 0.0
    %3860 = vmatpush1.msra.mxu0 0.0
    %3861 = vmatprep.subr.mxu0 0.0
    %3862 = vmatpush1.msra.mxu0 0.0
    %3863 = vmatprep.subr.mxu0 0.0
    %3864 = vmatpush1.msra.mxu0 0.0
    %3865 = vmatprep.mubr.f32.mxu0 0.0
    %3866 = vmatmul.mubr.f32.gmra.mrb[0].mxu0 %v397
    %v3867 = vpop.f32.mrb[0].mxu0
    %v3868 = vadd.f32 0.0, %v3867
    %v3869 = vpop.f32.mrb[0].mxu0
    %3870 = vdwg.mxu0
    %vm3871 = vcmask 130048
    %v3872 = vsel %vm3871, %v3729, %v3798
    %v3873 = vsel %vm3871, %v3730, %v3868
    %3876 = vrot.lane.b32.xlu0 %v3729, 96
    %v3877 = vpop.permute.xlu0 %3876
    %3878 = vrot.lane.b32.xlu0 %v3730, 96
    %v3879 = vpop.permute.xlu0 %3878
    %3884 = vrot.lane.b32.xlu0 %v3798, 96
    %v3885 = vpop.permute.xlu0 %3884
    %3886 = vrot.lane.b32.xlu0 %v3868, 96
    %v3887 = vpop.permute.xlu0 %3886
    %v3890 = vsel %vm3871, %v3877, %v3885
    %v3891 = vsel %vm3871, %v3879, %v3887
    %3892 = vrot.lane.b32.xlu0 %v3729, 64
    %v3893 = vpop.permute.xlu0 %3892
    %3894 = vrot.lane.b32.xlu0 %v3730, 64
    %v3895 = vpop.permute.xlu0 %3894
    %3898 = vrot.lane.b32.xlu0 %v3798, 64
    %v3899 = vpop.permute.xlu0 %3898
    %3900 = vrot.lane.b32.xlu0 %v3868, 64
    %v3901 = vpop.permute.xlu0 %3900
    %v3904 = vsel %vm3871, %v3893, %v3899
    %v3905 = vsel %vm3871, %v3895, %v3901
    %v3906 = vsel %vm78, %v3729, 0.0
    %v3907 = vrot.slane %v3906, 4
    %v3908 = vadd.f32 %v3906, %v3907
    %v3909 = vrot.slane %v3908, 2
    %v3910 = vadd.f32 %v3908, %v3909
    %v3911 = vrot.slane %v3910, 1
    %v3912 = vadd.f32 %v3910, %v3911
    %v3913 = vsel %vm78, %v3730, 0.0
    %v3914 = vrot.slane %v3913, 4
    %v3915 = vadd.f32 %v3913, %v3914
    %v3916 = vrot.slane %v3915, 2
    %v3917 = vadd.f32 %v3915, %v3916
    %v3918 = vrot.slane %v3917, 1
    %v3919 = vadd.f32 %v3917, %v3918
    %v3920 = vmul.f32 %v3912, 0.125
    %v3921 = vmul.f32 %v3919, 0.125
    %vm3922 = vcmask 523520
    %v3923 = vsel %vm3922, %v3729, 0.0
    %v3924 = vrot.slane %v3923, 4
    %v3925 = vadd.f32 %v3923, %v3924
    %v3926 = vrot.slane %v3925, 2
    %v3927 = vadd.f32 %v3925, %v3926
    %v3928 = vrot.slane %v3927, 1
    %v3929 = vadd.f32 %v3927, %v3928
    %v3930 = vsel %vm3922, %v3730, 0.0
    %v3931 = vrot.slane %v3930, 4
    %v3932 = vadd.f32 %v3930, %v3931
    %v3933 = vrot.slane %v3932, 2
    %v3934 = vadd.f32 %v3932, %v3933
    %v3935 = vrot.slane %v3934, 1
    %v3936 = vadd.f32 %v3934, %v3935
    %v3937 = vmul.f32 %v3929, 0.125
    %v3938 = vmul.f32 %v3936, 0.125
    %v3940 = vsel %vm78, %v3872, 0
    %v3943 = vsel %vm78, %v3890, 0
    %3945 = vmatprep.subr.mxu0 0.0
    %3946 = vmatpush1.xpose.msra.mxu0 %v3943
    %3947 = vmatprep.subr.mxu0 0.0
    %3948 = vmatpush1.xpose.msra.mxu0 0.0
    %3949 = vmatprep.subr.mxu0 0.0
    %3950 = vmatpush1.xpose.msra.mxu0 0.0
    %3951 = vmatprep.subr.mxu0 0.0
    %3952 = vmatpush1.xpose.msra.mxu0 0.0
    %3953 = vmatprep.subr.mxu0 0.0
    %3954 = vmatpush1.xpose.msra.mxu0 0.0
    %3955 = vmatprep.subr.mxu0 0.0
    %3956 = vmatpush1.xpose.msra.mxu0 0.0
    %3957 = vmatprep.subr.mxu0 0.0
    %3958 = vmatpush1.xpose.msra.mxu0 0.0
    %3959 = vmatprep.subr.mxu0 0.0
    %3960 = vmatpush1.xpose.msra.mxu0 0.0
    %3961 = vmatprep.subr.mxu0 0.0
    %3962 = vmatpush1.xpose.msra.mxu0 0.0
    %3963 = vmatprep.subr.mxu0 0.0
    %3964 = vmatpush1.xpose.msra.mxu0 0.0
    %3965 = vmatprep.subr.mxu0 0.0
    %3966 = vmatpush1.xpose.msra.mxu0 0.0
    %3967 = vmatprep.subr.mxu0 0.0
    %3968 = vmatpush1.xpose.msra.mxu0 0.0
    %3969 = vmatprep.subr.mxu0 0.0
    %3970 = vmatpush1.xpose.msra.mxu0 0.0
    %3971 = vmatprep.subr.mxu0 0.0
    %3972 = vmatpush1.xpose.msra.mxu0 0.0
    %3973 = vmatprep.subr.mxu0 0.0
    %3974 = vmatpush1.xpose.msra.mxu0 0.0
    %3975 = vmatprep.subr.mxu0 0.0
    %3976 = vmatpush1.xpose.msra.mxu0 0.0
    %3977 = vmatprep.subr.mxu0 0.0
    %3978 = vmatpush1.xpose.msra.mxu0 0.0
    %3979 = vmatprep.subr.mxu0 0.0
    %3980 = vmatpush1.xpose.msra.mxu0 0.0
    %3981 = vmatprep.subr.mxu0 0.0
    %3982 = vmatpush1.xpose.msra.mxu0 0.0
    %3983 = vmatprep.subr.mxu0 0.0
    %3984 = vmatpush1.xpose.msra.mxu0 0.0
    %3985 = vmatprep.subr.mxu0 0.0
    %3986 = vmatpush1.xpose.msra.mxu0 0.0
    %3987 = vmatprep.subr.mxu0 0.0
    %3988 = vmatpush1.xpose.msra.mxu0 0.0
    %3989 = vmatprep.subr.mxu0 0.0
    %3990 = vmatpush1.xpose.msra.mxu0 0.0
    %3991 = vmatprep.subr.mxu0 0.0
    %3992 = vmatpush1.xpose.msra.mxu0 0.0
    %3993 = vmatprep.subr.mxu0 0.0
    %3994 = vmatpush1.xpose.msra.mxu0 0.0
    %3995 = vmatprep.subr.mxu0 0.0
    %3996 = vmatpush1.xpose.msra.mxu0 0.0
    %3997 = vmatprep.subr.mxu0 0.0
    %3998 = vmatpush1.xpose.msra.mxu0 0.0
    %3999 = vmatprep.subr.mxu0 0.0
    %4000 = vmatpush1.xpose.msra.mxu0 0.0
    %4001 = vmatprep.subr.mxu0 0.0
    %4002 = vmatpush1.xpose.msra.mxu0 0.0
    %4003 = vmatprep.subr.mxu0 0.0
    %4004 = vmatpush1.xpose.msra.mxu0 0.0
    %4005 = vmatprep.subr.mxu0 0.0
    %4006 = vmatpush1.xpose.msra.mxu0 0.0
    %4007 = vmatprep.subr.mxu0 0.0
    %4008 = vmatpush1.xpose.msra.mxu0 0.0
    %4009 = vmatprep.mubr.f32.mxu0 0.0
    %4010 = vmatmul.mubr.f32.gmra.mrb[0].mxu0 %v3940
    %v4011 = vpop.f32.mrb[0].mxu0
    %v4012 = vadd.f32 0.0, %v4011
    %v4013 = vpop.f32.mrb[0].mxu0
    %4014 = vdwg.mxu0
    %v4016 = vsel %vm78, %v3873, 0
    %v4019 = vsel %vm78, %v3891, 0
    %4021 = vmatprep.subr.mxu0 0.0
    %4022 = vmatpush1.xpose.msra.mxu0 %v4019
    %4023 = vmatprep.subr.mxu0 0.0
    %4024 = vmatpush1.xpose.msra.mxu0 0.0
    %4025 = vmatprep.subr.mxu0 0.0
    %4026 = vmatpush1.xpose.msra.mxu0 0.0
    %4027 = vmatprep.subr.mxu0 0.0
    %4028 = vmatpush1.xpose.msra.mxu0 0.0
    %4029 = vmatprep.subr.mxu0 0.0
    %4030 = vmatpush1.xpose.msra.mxu0 0.0
    %4031 = vmatprep.subr.mxu0 0.0
    %4032 = vmatpush1.xpose.msra.mxu0 0.0
    %4033 = vmatprep.subr.mxu0 0.0
    %4034 = vmatpush1.xpose.msra.mxu0 0.0
    %4035 = vmatprep.subr.mxu0 0.0
    %4036 = vmatpush1.xpose.msra.mxu0 0.0
    %4037 = vmatprep.subr.mxu0 0.0
    %4038 = vmatpush1.xpose.msra.mxu0 0.0
    %4039 = vmatprep.subr.mxu0 0.0
    %4040 = vmatpush1.xpose.msra.mxu0 0.0
    %4041 = vmatprep.subr.mxu0 0.0
    %4042 = vmatpush1.xpose.msra.mxu0 0.0
    %4043 = vmatprep.subr.mxu0 0.0
    %4044 = vmatpush1.xpose.msra.mxu0 0.0
    %4045 = vmatprep.subr.mxu0 0.0
    %4046 = vmatpush1.xpose.msra.mxu0 0.0
    %4047 = vmatprep.subr.mxu0 0.0
    %4048 = vmatpush1.xpose.msra.mxu0 0.0
    %4049 = vmatprep.subr.mxu0 0.0
    %4050 = vmatpush1.xpose.msra.mxu0 0.0
    %4051 = vmatprep.subr.mxu0 0.0
    %4052 = vmatpush1.xpose.msra.mxu0 0.0
    %4053 = vmatprep.subr.mxu0 0.0
    %4054 = vmatpush1.xpose.msra.mxu0 0.0
    %4055 = vmatprep.subr.mxu0 0.0
    %4056 = vmatpush1.xpose.msra.mxu0 0.0
    %4057 = vmatprep.subr.mxu0 0.0
    %4058 = vmatpush1.xpose.msra.mxu0 0.0
    %4059 = vmatprep.subr.mxu0 0.0
    %4060 = vmatpush1.xpose.msra.mxu0 0.0
    %4061 = vmatprep.subr.mxu0 0.0
    %4062 = vmatpush1.xpose.msra.mxu0 0.0
    %4063 = vmatprep.subr.mxu0 0.0
    %4064 = vmatpush1.xpose.msra.mxu0 0.0
    %4065 = vmatprep.subr.mxu0 0.0
    %4066 = vmatpush1.xpose.msra.mxu0 0.0
    %4067 = vmatprep.subr.mxu0 0.0
    %4068 = vmatpush1.xpose.msra.mxu0 0.0
    %4069 = vmatprep.subr.mxu0 0.0
    %4070 = vmatpush1.xpose.msra.mxu0 0.0
    %4071 = vmatprep.subr.mxu0 0.0
    %4072 = vmatpush1.xpose.msra.mxu0 0.0
    %4073 = vmatprep.subr.mxu0 0.0
    %4074 = vmatpush1.xpose.msra.mxu0 0.0
    %4075 = vmatprep.subr.mxu0 0.0
    %4076 = vmatpush1.xpose.msra.mxu0 0.0
    %4077 = vmatprep.subr.mxu0 0.0
    %4078 = vmatpush1.xpose.msra.mxu0 0.0
    %4079 = vmatprep.subr.mxu0 0.0
    %4080 = vmatpush1.xpose.msra.mxu0 0.0
    %4081 = vmatprep.subr.mxu0 0.0
    %4082 = vmatpush1.xpose.msra.mxu0 0.0
    %4083 = vmatprep.subr.mxu0 0.0
    %4084 = vmatpush1.xpose.msra.mxu0 0.0
    %4085 = vmatprep.mubr.f32.mxu0 0.0
    %4086 = vmatmul.mubr.f32.gmra.mrb[0].mxu0 %v4016
    %v4087 = vpop.f32.mrb[0].mxu0
    %v4088 = vadd.f32 0.0, %v4087
    %v4089 = vpop.f32.mrb[0].mxu0
    %4090 = vdwg.mxu0
    %v4091 = vsel %vm395, %v4012, -inf
    %4092 = vmax.xlane.f32.xlu0 %v4091
    %v4093 = vpop.xlane.xlu0 %4092
    %v4094 = vsel %vm395, %v4088, -inf
    %4095 = vmax.xlane.f32.xlu0 %v4094
    %v4096 = vpop.xlane.xlu0 %4095
    %v4097 = vsub.f32 %v4012, %v4093
    %v4098 = vsub.f32 %v4088, %v4096
    %v4099 = vmul.f32 %v4097, 1.442695
    %v4100 = vpow.pop %v4099
    %v4101 = vmul.f32 %v4098, 1.442695
    %v4102 = vpow.pop %v4101
    %v4103 = vsel %vm395, %v4100, 0.0
    %4104 = vadd.xlane.f32.xlu0 %v4103
    %v4105 = vpop.xlane.xlu0 %4104
    %v4106 = vsel %vm395, %v4102, 0.0
    %4107 = vadd.xlane.f32.xlu0 %v4106
    %v4108 = vpop.xlane.xlu0 %4107
    %v4109 = vrcp.pop %v4105
    %v4110 = vmul.f32 %v4100, %v4109
    %v4111 = vrcp.pop %v4108
    %v4112 = vmul.f32 %v4102, %v4111
    %v4113 = vrot.slane %v4091, 4
    %v4114 = vmax.f32 %v4091, %v4113
    %v4115 = vrot.slane %v4114, 2
    %v4116 = vmax.f32 %v4114, %v4115
    %v4117 = vrot.slane %v4116, 1
    %v4118 = vmax.f32 %v4116, %v4117
    %v4119 = vrot.slane %v4094, 4
    %v4120 = vmax.f32 %v4094, %v4119
    %v4121 = vrot.slane %v4120, 2
    %v4122 = vmax.f32 %v4120, %v4121
    %v4123 = vrot.slane %v4122, 1
    %v4124 = vmax.f32 %v4122, %v4123
    %v4125 = vsub.f32 %v4012, %v4118
    %v4126 = vsub.f32 %v4088, %v4124
    %v4127 = vmul.f32 %v4125, 1.442695
    %v4128 = vpow.pop %v4127
    %v4129 = vmul.f32 %v4126, 1.442695
    %v4130 = vpow.pop %v4129
    %v4131 = vsel %vm395, %v4128, 0.0
    %v4132 = vrot.slane %v4131, 4
    %v4133 = vadd.f32 %v4131, %v4132
    %v4134 = vrot.slane %v4133, 2
    %v4135 = vadd.f32 %v4133, %v4134
    %v4136 = vrot.slane %v4135, 1
    %v4137 = vadd.f32 %v4135, %v4136
    %v4138 = vsel %vm395, %v4130, 0.0
    %v4139 = vrot.slane %v4138, 4
    %v4140 = vadd.f32 %v4138, %v4139
    %v4141 = vrot.slane %v4140, 2
    %v4142 = vadd.f32 %v4140, %v4141
    %v4143 = vrot.slane %v4142, 1
    %v4144 = vadd.f32 %v4142, %v4143
    %v4145 = vrcp.pop %v4137
    %v4146 = vmul.f32 %v4128, %v4145
    %v4147 = vrcp.pop %v4144
    %v4148 = vmul.f32 %v4130, %v4147
    %v4149 = vsel %vm395, %v4146, 0.0
    %4150 = vadd.xlane.f32.xlu0 %v4149
    %v4151 = vpop.xlane.xlu0 %4150
    %v4152 = vsel %vm395, %v4148, 0.0
    %4153 = vadd.xlane.f32.xlu0 %v4152
    %v4154 = vpop.xlane.xlu0 %4153
    %v4155 = vrcp.pop 8.0
    %v4156 = vmul.f32 %v4151, %v4155
    %v4157 = vmul.f32 %v4154, %v4155
    %v4158 = vmul.f32 %v4110, %v4156
    %v4159 = vmul.f32 %v4112, %v4157
    %v4160 = vsel %vm395, %v4158, 0.0
    %v4161 = vrot.slane %v4160, 4
    %v4162 = vadd.f32 %v4160, %v4161
    %v4163 = vrot.slane %v4162, 2
    %v4164 = vadd.f32 %v4162, %v4163
    %v4165 = vrot.slane %v4164, 1
    %v4166 = vadd.f32 %v4164, %v4165
    %v4167 = vsel %vm395, %v4159, 0.0
    %v4168 = vrot.slane %v4167, 4
    %v4169 = vadd.f32 %v4167, %v4168
    %v4170 = vrot.slane %v4169, 2
    %v4171 = vadd.f32 %v4169, %v4170
    %v4172 = vrot.slane %v4171, 1
    %v4173 = vadd.f32 %v4171, %v4172
    %4175 = vbcast.lane.b32.xlu0 %v4166, 256
    %v4176 = vpop.permute.xlu0 %4175
    %4178 = vbcast.lane.b32.xlu0 %v4173, 256
    %v4179 = vpop.permute.xlu0 %4178
    %v4180 = vmul.f32 %v4176, %v3890
    %v4181 = vmul.f32 %v4179, %v3891
    %v4182 = vsel %vm78, %v4180, 0.0
    %v4183 = vrot.slane %v4182, 4
    %v4184 = vadd.f32 %v4182, %v4183
    %v4185 = vrot.slane %v4184, 2
    %v4186 = vadd.f32 %v4184, %v4185
    %v4187 = vrot.slane %v4186, 1
    %v4188 = vadd.f32 %v4186, %v4187
    %v4189 = vsel %vm78, %v4181, 0.0
    %v4190 = vrot.slane %v4189, 4
    %v4191 = vadd.f32 %v4189, %v4190
    %v4192 = vrot.slane %v4191, 2
    %v4193 = vadd.f32 %v4191, %v4192
    %v4194 = vrot.slane %v4193, 1
    %v4195 = vadd.f32 %v4193, %v4194
    %v4196 = vld [vmem:[%s13] sm:$0xff]
    %v4197 = vld [vmem:[%s13 + $0x8] sm:$0xff]
    %v4198 = vld [vmem:[%s13 + $0x10] sm:$0xff]
    %v4199 = vld [vmem:[%s13 + $0x18] sm:$0xff]
    %v4200 = vld [vmem:[%s14] sm:$0x1]
    %v4202 = vlaneseq
    %v4203 = vshrl.u32 %v4202, 7
    %v4204 = vsub.s32 0, %v4203
    %v4205 = vrot.slane %v4200, %v4204
    %v4208 = vsel %vm78, %v3904, 0
    %v4211 = vsel %vm78, %v3905, 0
    %4213 = vmatprep.subr.mxu0 0.0
    %4214 = vmatpush1.msra.mxu0 %v4196
    %4215 = vmatprep.subr.mxu0 0.0
    %4216 = vmatpush1.msra.mxu0 %v4197
    %4217 = vmatprep.subr.mxu0 0.0
    %4218 = vmatpush1.msra.mxu0 %v4198
    %4219 = vmatprep.subr.mxu0 0.0
    %4220 = vmatpush1.msra.mxu0 %v4199
    %4221 = vmatprep.subr.mxu0 0.0
    %4222 = vmatpush1.msra.mxu0 0.0
    %4223 = vmatprep.subr.mxu0 0.0
    %4224 = vmatpush1.msra.mxu0 0.0
    %4225 = vmatprep.subr.mxu0 0.0
    %4226 = vmatpush1.msra.mxu0 0.0
    %4227 = vmatprep.subr.mxu0 0.0
    %4228 = vmatpush1.msra.mxu0 0.0
    %4229 = vmatprep.subr.mxu0 0.0
    %4230 = vmatpush1.msra.mxu0 0.0
    %4231 = vmatprep.subr.mxu0 0.0
    %4232 = vmatpush1.msra.mxu0 0.0
    %4233 = vmatprep.subr.mxu0 0.0
    %4234 = vmatpush1.msra.mxu0 0.0
    %4235 = vmatprep.subr.mxu0 0.0
    %4236 = vmatpush1.msra.mxu0 0.0
    %4237 = vmatprep.subr.mxu0 0.0
    %4238 = vmatpush1.msra.mxu0 0.0
    %4239 = vmatprep.subr.mxu0 0.0
    %4240 = vmatpush1.msra.mxu0 0.0
    %4241 = vmatprep.subr.mxu0 0.0
    %4242 = vmatpush1.msra.mxu0 0.0
    %4243 = vmatprep.subr.mxu0 0.0
    %4244 = vmatpush1.msra.mxu0 0.0
    %4245 = vmatprep.subr.mxu0 0.0
    %4246 = vmatpush1.msra.mxu0 0.0
    %4247 = vmatprep.subr.mxu0 0.0
    %4248 = vmatpush1.msra.mxu0 0.0
    %4249 = vmatprep.subr.mxu0 0.0
    %4250 = vmatpush1.msra.mxu0 0.0
    %4251 = vmatprep.subr.mxu0 0.0
    %4252 = vmatpush1.msra.mxu0 0.0
    %4253 = vmatprep.subr.mxu0 0.0
    %4254 = vmatpush1.msra.mxu0 0.0
    %4255 = vmatprep.subr.mxu0 0.0
    %4256 = vmatpush1.msra.mxu0 0.0
    %4257 = vmatprep.subr.mxu0 0.0
    %4258 = vmatpush1.msra.mxu0 0.0
    %4259 = vmatprep.subr.mxu0 0.0
    %4260 = vmatpush1.msra.mxu0 0.0
    %4261 = vmatprep.subr.mxu0 0.0
    %4262 = vmatpush1.msra.mxu0 0.0
    %4263 = vmatprep.subr.mxu0 0.0
    %4264 = vmatpush1.msra.mxu0 0.0
    %4265 = vmatprep.subr.mxu0 0.0
    %4266 = vmatpush1.msra.mxu0 0.0
    %4267 = vmatprep.subr.mxu0 0.0
    %4268 = vmatpush1.msra.mxu0 0.0
    %4269 = vmatprep.subr.mxu0 0.0
    %4270 = vmatpush1.msra.mxu0 0.0
    %4271 = vmatprep.subr.mxu0 0.0
    %4272 = vmatpush1.msra.mxu0 0.0
    %4273 = vmatprep.subr.mxu0 0.0
    %4274 = vmatpush1.msra.mxu0 0.0
    %4275 = vmatprep.subr.mxu0 0.0
    %4276 = vmatpush1.msra.mxu0 0.0
    %4277 = vmatprep.mubr.f32.mxu0 0.0
    %4278 = vmatmul.mubr.f32.gmra.mrb[0].mxu0 %v4208
    %v4279 = vpop.f32.mrb[0].mxu0
    %v4280 = vadd.f32 %v4205, %v4279
    %v4281 = vpop.f32.mrb[0].mxu0
    %4282 = vmatprep.mubr.f32.mxu0 0.0
    %4283 = vmatmul.mubr.f32.gmra.mrb[0].mxu0 %v4211
    %v4284 = vpop.f32.mrb[0].mxu0
    %v4285 = vadd.f32 %v4205, %v4284
    %v4286 = vpop.f32.mrb[0].mxu0
    %4287 = vdwg.mxu0
    %4289 = vrot.lane.b32.xlu0 %v4280, 96
    %v4290 = vpop.permute.xlu0 %4289
    %v4291 = vsel %vm78, %v4280, 0
    %v4293 = vsel %vm78, %v4290, 0
    %4295 = vmatprep.subr.mxu0 0.0
    %4296 = vmatpush1.xpose.msra.mxu0 %v4293
    %4297 = vmatprep.subr.mxu0 0.0
    %4298 = vmatpush1.xpose.msra.mxu0 0.0
    %4299 = vmatprep.subr.mxu0 0.0
    %4300 = vmatpush1.xpose.msra.mxu0 0.0
    %4301 = vmatprep.subr.mxu0 0.0
    %4302 = vmatpush1.xpose.msra.mxu0 0.0
    %4303 = vmatprep.subr.mxu0 0.0
    %4304 = vmatpush1.xpose.msra.mxu0 0.0
    %4305 = vmatprep.subr.mxu0 0.0
    %4306 = vmatpush1.xpose.msra.mxu0 0.0
    %4307 = vmatprep.subr.mxu0 0.0
    %4308 = vmatpush1.xpose.msra.mxu0 0.0
    %4309 = vmatprep.subr.mxu0 0.0
    %4310 = vmatpush1.xpose.msra.mxu0 0.0
    %4311 = vmatprep.subr.mxu0 0.0
    %4312 = vmatpush1.xpose.msra.mxu0 0.0
    %4313 = vmatprep.subr.mxu0 0.0
    %4314 = vmatpush1.xpose.msra.mxu0 0.0
    %4315 = vmatprep.subr.mxu0 0.0
    %4316 = vmatpush1.xpose.msra.mxu0 0.0
    %4317 = vmatprep.subr.mxu0 0.0
    %4318 = vmatpush1.xpose.msra.mxu0 0.0
    %4319 = vmatprep.subr.mxu0 0.0
    %4320 = vmatpush1.xpose.msra.mxu0 0.0
    %4321 = vmatprep.subr.mxu0 0.0
    %4322 = vmatpush1.xpose.msra.mxu0 0.0
    %4323 = vmatprep.subr.mxu0 0.0
    %4324 = vmatpush1.xpose.msra.mxu0 0.0
    %4325 = vmatprep.subr.mxu0 0.0
    %4326 = vmatpush1.xpose.msra.mxu0 0.0
    %4327 = vmatprep.subr.mxu0 0.0
    %4328 = vmatpush1.xpose.msra.mxu0 0.0
    %4329 = vmatprep.subr.mxu0 0.0
    %4330 = vmatpush1.xpose.msra.mxu0 0.0
    %4331 = vmatprep.subr.mxu0 0.0
    %4332 = vmatpush1.xpose.msra.mxu0 0.0
    %4333 = vmatprep.subr.mxu0 0.0
    %4334 = vmatpush1.xpose.msra.mxu0 0.0
    %4335 = vmatprep.subr.mxu0 0.0
    %4336 = vmatpush1.xpose.msra.mxu0 0.0
    %4337 = vmatprep.subr.mxu0 0.0
    %4338 = vmatpush1.xpose.msra.mxu0 0.0
    %4339 = vmatprep.subr.mxu0 0.0
    %4340 = vmatpush1.xpose.msra.mxu0 0.0
    %4341 = vmatprep.subr.mxu0 0.0
    %4342 = vmatpush1.xpose.msra.mxu0 0.0
    %4343 = vmatprep.subr.mxu0 0.0
    %4344 = vmatpush1.xpose.msra.mxu0 0.0
    %4345 = vmatprep.subr.mxu0 0.0
    %4346 = vmatpush1.xpose.msra.mxu0 0.0
    %4347 = vmatprep.subr.mxu0 0.0
    %4348 = vmatpush1.xpose.msra.mxu0 0.0
    %4349 = vmatprep.subr.mxu0 0.0
    %4350 = vmatpush1.xpose.msra.mxu0 0.0
    %4351 = vmatprep.subr.mxu0 0.0
    %4352 = vmatpush1.xpose.msra.mxu0 0.0
    %4353 = vmatprep.subr.mxu0 0.0
    %4354 = vmatpush1.xpose.msra.mxu0 0.0
    %4355 = vmatprep.subr.mxu0 0.0
    %4356 = vmatpush1.xpose.msra.mxu0 0.0
    %4357 = vmatprep.subr.mxu0 0.0
    %4358 = vmatpush1.xpose.msra.mxu0 0.0
    %4359 = vmatprep.mubr.f32.mxu0 0.0
    %4360 = vmatmul.mubr.f32.gmra.mrb[0].mxu0 %v4291
    %v4361 = vpop.f32.mrb[0].mxu0
    %v4362 = vadd.f32 0.0, %v4361
    %v4363 = vpop.f32.mrb[0].mxu0
    %4364 = vdwg.mxu0
    %4366 = vrot.lane.b32.xlu0 %v4285, 96
    %v4367 = vpop.permute.xlu0 %4366
    %v4368 = vsel %vm78, %v4285, 0
    %v4370 = vsel %vm78, %v4367, 0
    %4372 = vmatprep.subr.mxu0 0.0
    %4373 = vmatpush1.xpose.msra.mxu0 %v4370
    %4374 = vmatprep.subr.mxu0 0.0
    %4375 = vmatpush1.xpose.msra.mxu0 0.0
    %4376 = vmatprep.subr.mxu0 0.0
    %4377 = vmatpush1.xpose.msra.mxu0 0.0
    %4378 = vmatprep.subr.mxu0 0.0
    %4379 = vmatpush1.xpose.msra.mxu0 0.0
    %4380 = vmatprep.subr.mxu0 0.0
    %4381 = vmatpush1.xpose.msra.mxu0 0.0
    %4382 = vmatprep.subr.mxu0 0.0
    %4383 = vmatpush1.xpose.msra.mxu0 0.0
    %4384 = vmatprep.subr.mxu0 0.0
    %4385 = vmatpush1.xpose.msra.mxu0 0.0
    %4386 = vmatprep.subr.mxu0 0.0
    %4387 = vmatpush1.xpose.msra.mxu0 0.0
    %4388 = vmatprep.subr.mxu0 0.0
    %4389 = vmatpush1.xpose.msra.mxu0 0.0
    %4390 = vmatprep.subr.mxu0 0.0
    %4391 = vmatpush1.xpose.msra.mxu0 0.0
    %4392 = vmatprep.subr.mxu0 0.0
    %4393 = vmatpush1.xpose.msra.mxu0 0.0
    %4394 = vmatprep.subr.mxu0 0.0
    %4395 = vmatpush1.xpose.msra.mxu0 0.0
    %4396 = vmatprep.subr.mxu0 0.0
    %4397 = vmatpush1.xpose.msra.mxu0 0.0
    %4398 = vmatprep.subr.mxu0 0.0
    %4399 = vmatpush1.xpose.msra.mxu0 0.0
    %4400 = vmatprep.subr.mxu0 0.0
    %4401 = vmatpush1.xpose.msra.mxu0 0.0
    %4402 = vmatprep.subr.mxu0 0.0
    %4403 = vmatpush1.xpose.msra.mxu0 0.0
    %4404 = vmatprep.subr.mxu0 0.0
    %4405 = vmatpush1.xpose.msra.mxu0 0.0
    %4406 = vmatprep.subr.mxu0 0.0
    %4407 = vmatpush1.xpose.msra.mxu0 0.0
    %4408 = vmatprep.subr.mxu0 0.0
    %4409 = vmatpush1.xpose.msra.mxu0 0.0
    %4410 = vmatprep.subr.mxu0 0.0
    %4411 = vmatpush1.xpose.msra.mxu0 0.0
    %4412 = vmatprep.subr.mxu0 0.0
    %4413 = vmatpush1.xpose.msra.mxu0 0.0
    %4414 = vmatprep.subr.mxu0 0.0
    %4415 = vmatpush1.xpose.msra.mxu0 0.0
    %4416 = vmatprep.subr.mxu0 0.0
    %4417 = vmatpush1.xpose.msra.mxu0 0.0
    %4418 = vmatprep.subr.mxu0 0.0
    %4419 = vmatpush1.xpose.msra.mxu0 0.0
    %4420 = vmatprep.subr.mxu0 0.0
    %4421 = vmatpush1.xpose.msra.mxu0 0.0
    %4422 = vmatprep.subr.mxu0 0.0
    %4423 = vmatpush1.xpose.msra.mxu0 0.0
    %4424 = vmatprep.subr.mxu0 0.0
    %4425 = vmatpush1.xpose.msra.mxu0 0.0
    %4426 = vmatprep.subr.mxu0 0.0
    %4427 = vmatpush1.xpose.msra.mxu0 0.0
    %4428 = vmatprep.subr.mxu0 0.0
    %4429 = vmatpush1.xpose.msra.mxu0 0.0
    %4430 = vmatprep.subr.mxu0 0.0
    %4431 = vmatpush1.xpose.msra.mxu0 0.0
    %4432 = vmatprep.subr.mxu0 0.0
    %4433 = vmatpush1.xpose.msra.mxu0 0.0
    %4434 = vmatprep.subr.mxu0 0.0
    %4435 = vmatpush1.xpose.msra.mxu0 0.0
    %4436 = vmatprep.mubr.f32.mxu0 0.0
    %4437 = vmatmul.mubr.f32.gmra.mrb[0].mxu0 %v4368
    %v4438 = vpop.f32.mrb[0].mxu0
    %v4439 = vadd.f32 0.0, %v4438
    %v4440 = vpop.f32.mrb[0].mxu0
    %4441 = vdwg.mxu0
    %v4442 = vmul.f32 %v4362, 0.17677669
    %v4443 = vmul.f32 %v4439, 0.17677669
    %v4444 = vsel %vm395, %v4442, -inf
    %4445 = vmax.xlane.f32.xlu0 %v4444
    %v4446 = vpop.xlane.xlu0 %4445
    %v4447 = vsel %vm395, %v4443, -inf
    %4448 = vmax.xlane.f32.xlu0 %v4447
    %v4449 = vpop.xlane.xlu0 %4448
    %v4450 = vsub.f32 %v4442, %v4446
    %v4451 = vsub.f32 %v4443, %v4449
    %v4452 = vmul.f32 %v4450, 1.442695
    %v4453 = vpow.pop %v4452
    %v4454 = vmul.f32 %v4451, 1.442695
    %v4455 = vpow.pop %v4454
    %v4456 = vsel %vm395, %v4453, 0.0
    %4457 = vadd.xlane.f32.xlu0 %v4456
    %v4458 = vpop.xlane.xlu0 %4457
    %v4459 = vsel %vm395, %v4455, 0.0
    %4460 = vadd.xlane.f32.xlu0 %v4459
    %v4461 = vpop.xlane.xlu0 %4460
    %v4462 = vrcp.pop %v4458
    %v4463 = vmul.f32 %v4453, %v4462
    %v4464 = vrcp.pop %v4461
    %v4465 = vmul.f32 %v4455, %v4464
    %4466 = vrot.lane.b32.xlu0 %v4280, 64
    %v4467 = vpop.permute.xlu0 %4466
    %v4470 = vsel %vm395, %v4463, 0
    %4472 = vmatprep.subr.mxu0 0.0
    %4473 = vmatpush1.msra.mxu0 %v4467
    %4474 = vmatprep.subr.mxu0 0.0
    %4475 = vmatpush1.msra.mxu0 0.0
    %4476 = vmatprep.subr.mxu0 0.0
    %4477 = vmatpush1.msra.mxu0 0.0
    %4478 = vmatprep.subr.mxu0 0.0
    %4479 = vmatpush1.msra.mxu0 0.0
    %4480 = vmatprep.subr.mxu0 0.0
    %4481 = vmatpush1.msra.mxu0 0.0
    %4482 = vmatprep.subr.mxu0 0.0
    %4483 = vmatpush1.msra.mxu0 0.0
    %4484 = vmatprep.subr.mxu0 0.0
    %4485 = vmatpush1.msra.mxu0 0.0
    %4486 = vmatprep.subr.mxu0 0.0
    %4487 = vmatpush1.msra.mxu0 0.0
    %4488 = vmatprep.subr.mxu0 0.0
    %4489 = vmatpush1.msra.mxu0 0.0
    %4490 = vmatprep.subr.mxu0 0.0
    %4491 = vmatpush1.msra.mxu0 0.0
    %4492 = vmatprep.subr.mxu0 0.0
    %4493 = vmatpush1.msra.mxu0 0.0
    %4494 = vmatprep.subr.mxu0 0.0
    %4495 = vmatpush1.msra.mxu0 0.0
    %4496 = vmatprep.subr.mxu0 0.0
    %4497 = vmatpush1.msra.mxu0 0.0
    %4498 = vmatprep.subr.mxu0 0.0
    %4499 = vmatpush1.msra.mxu0 0.0
    %4500 = vmatprep.subr.mxu0 0.0
    %4501 = vmatpush1.msra.mxu0 0.0
    %4502 = vmatprep.subr.mxu0 0.0
    %4503 = vmatpush1.msra.mxu0 0.0
    %4504 = vmatprep.subr.mxu0 0.0
    %4505 = vmatpush1.msra.mxu0 0.0
    %4506 = vmatprep.subr.mxu0 0.0
    %4507 = vmatpush1.msra.mxu0 0.0
    %4508 = vmatprep.subr.mxu0 0.0
    %4509 = vmatpush1.msra.mxu0 0.0
    %4510 = vmatprep.subr.mxu0 0.0
    %4511 = vmatpush1.msra.mxu0 0.0
    %4512 = vmatprep.subr.mxu0 0.0
    %4513 = vmatpush1.msra.mxu0 0.0
    %4514 = vmatprep.subr.mxu0 0.0
    %4515 = vmatpush1.msra.mxu0 0.0
    %4516 = vmatprep.subr.mxu0 0.0
    %4517 = vmatpush1.msra.mxu0 0.0
    %4518 = vmatprep.subr.mxu0 0.0
    %4519 = vmatpush1.msra.mxu0 0.0
    %4520 = vmatprep.subr.mxu0 0.0
    %4521 = vmatpush1.msra.mxu0 0.0
    %4522 = vmatprep.subr.mxu0 0.0
    %4523 = vmatpush1.msra.mxu0 0.0
    %4524 = vmatprep.subr.mxu0 0.0
    %4525 = vmatpush1.msra.mxu0 0.0
    %4526 = vmatprep.subr.mxu0 0.0
    %4527 = vmatpush1.msra.mxu0 0.0
    %4528 = vmatprep.subr.mxu0 0.0
    %4529 = vmatpush1.msra.mxu0 0.0
    %4530 = vmatprep.subr.mxu0 0.0
    %4531 = vmatpush1.msra.mxu0 0.0
    %4532 = vmatprep.subr.mxu0 0.0
    %4533 = vmatpush1.msra.mxu0 0.0
    %4534 = vmatprep.subr.mxu0 0.0
    %4535 = vmatpush1.msra.mxu0 0.0
    %4536 = vmatprep.mubr.f32.mxu0 0.0
    %4537 = vmatmul.mubr.f32.gmra.mrb[0].mxu0 %v4470
    %v4538 = vpop.f32.mrb[0].mxu0
    %v4539 = vadd.f32 0.0, %v4538
    %v4540 = vpop.f32.mrb[0].mxu0
    %4541 = vdwg.mxu0
    %4542 = vrot.lane.b32.xlu0 %v4285, 64
    %v4543 = vpop.permute.xlu0 %4542
    %v4546 = vsel %vm395, %v4465, 0
    %4548 = vmatprep.subr.mxu0 0.0
    %4549 = vmatpush1.msra.mxu0 %v4543
    %4550 = vmatprep.subr.mxu0 0.0
    %4551 = vmatpush1.msra.mxu0 0.0
    %4552 = vmatprep.subr.mxu0 0.0
    %4553 = vmatpush1.msra.mxu0 0.0
    %4554 = vmatprep.subr.mxu0 0.0
    %4555 = vmatpush1.msra.mxu0 0.0
    %4556 = vmatprep.subr.mxu0 0.0
    %4557 = vmatpush1.msra.mxu0 0.0
    %4558 = vmatprep.subr.mxu0 0.0
    %4559 = vmatpush1.msra.mxu0 0.0
    %4560 = vmatprep.subr.mxu0 0.0
    %4561 = vmatpush1.msra.mxu0 0.0
    %4562 = vmatprep.subr.mxu0 0.0
    %4563 = vmatpush1.msra.mxu0 0.0
    %4564 = vmatprep.subr.mxu0 0.0
    %4565 = vmatpush1.msra.mxu0 0.0
    %4566 = vmatprep.subr.mxu0 0.0
    %4567 = vmatpush1.msra.mxu0 0.0
    %4568 = vmatprep.subr.mxu0 0.0
    %4569 = vmatpush1.msra.mxu0 0.0
    %4570 = vmatprep.subr.mxu0 0.0
    %4571 = vmatpush1.msra.mxu0 0.0
    %4572 = vmatprep.subr.mxu0 0.0
    %4573 = vmatpush1.msra.mxu0 0.0
    %4574 = vmatprep.subr.mxu0 0.0
    %4575 = vmatpush1.msra.mxu0 0.0
    %4576 = vmatprep.subr.mxu0 0.0
    %4577 = vmatpush1.msra.mxu0 0.0
    %4578 = vmatprep.subr.mxu0 0.0
    %4579 = vmatpush1.msra.mxu0 0.0
    %4580 = vmatprep.subr.mxu0 0.0
    %4581 = vmatpush1.msra.mxu0 0.0
    %4582 = vmatprep.subr.mxu0 0.0
    %4583 = vmatpush1.msra.mxu0 0.0
    %4584 = vmatprep.subr.mxu0 0.0
    %4585 = vmatpush1.msra.mxu0 0.0
    %4586 = vmatprep.subr.mxu0 0.0
    %4587 = vmatpush1.msra.mxu0 0.0
    %4588 = vmatprep.subr.mxu0 0.0
    %4589 = vmatpush1.msra.mxu0 0.0
    %4590 = vmatprep.subr.mxu0 0.0
    %4591 = vmatpush1.msra.mxu0 0.0
    %4592 = vmatprep.subr.mxu0 0.0
    %4593 = vmatpush1.msra.mxu0 0.0
    %4594 = vmatprep.subr.mxu0 0.0
    %4595 = vmatpush1.msra.mxu0 0.0
    %4596 = vmatprep.subr.mxu0 0.0
    %4597 = vmatpush1.msra.mxu0 0.0
    %4598 = vmatprep.subr.mxu0 0.0
    %4599 = vmatpush1.msra.mxu0 0.0
    %4600 = vmatprep.subr.mxu0 0.0
    %4601 = vmatpush1.msra.mxu0 0.0
    %4602 = vmatprep.subr.mxu0 0.0
    %4603 = vmatpush1.msra.mxu0 0.0
    %4604 = vmatprep.subr.mxu0 0.0
    %4605 = vmatpush1.msra.mxu0 0.0
    %4606 = vmatprep.subr.mxu0 0.0
    %4607 = vmatpush1.msra.mxu0 0.0
    %4608 = vmatprep.subr.mxu0 0.0
    %4609 = vmatpush1.msra.mxu0 0.0
    %4610 = vmatprep.subr.mxu0 0.0
    %4611 = vmatpush1.msra.mxu0 0.0
    %4612 = vmatprep.mubr.f32.mxu0 0.0
    %4613 = vmatmul.mubr.f32.gmra.mrb[0].mxu0 %v4546
    %v4614 = vpop.f32.mrb[0].mxu0
    %v4615 = vadd.f32 0.0, %v4614
    %v4616 = vpop.f32.mrb[0].mxu0
    %4617 = vdwg.mxu0
    %v4618 = vld [vmem:[%s15] sm:$0xff]
    %v4619 = vld [vmem:[%s15 + $0x8] sm:$0xff]
    %v4620 = vld [vmem:[%s15 + $0x10] sm:$0xff]
    %v4621 = vld [vmem:[%s15 + $0x18] sm:$0xff]
    %v4622 = vld [vmem:[%s16] sm:$0x1]
    %v4624 = vlaneseq
    %v4625 = vshrl.u32 %v4624, 7
    %v4626 = vsub.s32 0, %v4625
    %v4627 = vrot.slane %v4622, %v4626
    %v4630 = vsel %vm78, %v4539, 0
    %v4633 = vsel %vm78, %v4615, 0
    %4635 = vmatprep.subr.mxu0 0.0
    %4636 = vmatpush1.msra.mxu0 %v4618
    %4637 = vmatprep.subr.mxu0 0.0
    %4638 = vmatpush1.msra.mxu0 %v4619
    %4639 = vmatprep.subr.mxu0 0.0
    %4640 = vmatpush1.msra.mxu0 %v4620
    %4641 = vmatprep.subr.mxu0 0.0
    %4642 = vmatpush1.msra.mxu0 %v4621
    %4643 = vmatprep.subr.mxu0 0.0
    %4644 = vmatpush1.msra.mxu0 0.0
    %4645 = vmatprep.subr.mxu0 0.0
    %4646 = vmatpush1.msra.mxu0 0.0
    %4647 = vmatprep.subr.mxu0 0.0
    %4648 = vmatpush1.msra.mxu0 0.0
    %4649 = vmatprep.subr.mxu0 0.0
    %4650 = vmatpush1.msra.mxu0 0.0
    %4651 = vmatprep.subr.mxu0 0.0
    %4652 = vmatpush1.msra.mxu0 0.0
    %4653 = vmatprep.subr.mxu0 0.0
    %4654 = vmatpush1.msra.mxu0 0.0
    %4655 = vmatprep.subr.mxu0 0.0
    %4656 = vmatpush1.msra.mxu0 0.0
    %4657 = vmatprep.subr.mxu0 0.0
    %4658 = vmatpush1.msra.mxu0 0.0
    %4659 = vmatprep.subr.mxu0 0.0
    %4660 = vmatpush1.msra.mxu0 0.0
    %4661 = vmatprep.subr.mxu0 0.0
    %4662 = vmatpush1.msra.mxu0 0.0
    %4663 = vmatprep.subr.mxu0 0.0
    %4664 = vmatpush1.msra.mxu0 0.0
    %4665 = vmatprep.subr.mxu0 0.0
    %4666 = vmatpush1.msra.mxu0 0.0
    %4667 = vmatprep.subr.mxu0 0.0
    %4668 = vmatpush1.msra.mxu0 0.0
    %4669 = vmatprep.subr.mxu0 0.0
    %4670 = vmatpush1.msra.mxu0 0.0
    %4671 = vmatprep.subr.mxu0 0.0
    %4672 = vmatpush1.msra.mxu0 0.0
    %4673 = vmatprep.subr.mxu0 0.0
    %4674 = vmatpush1.msra.mxu0 0.0
    %4675 = vmatprep.subr.mxu0 0.0
    %4676 = vmatpush1.msra.mxu0 0.0
    %4677 = vmatprep.subr.mxu0 0.0
    %4678 = vmatpush1.msra.mxu0 0.0
    %4679 = vmatprep.subr.mxu0 0.0
    %4680 = vmatpush1.msra.mxu0 0.0
    %4681 = vmatprep.subr.mxu0 0.0
    %4682 = vmatpush1.msra.mxu0 0.0
    %4683 = vmatprep.subr.mxu0 0.0
    %4684 = vmatpush1.msra.mxu0 0.0
    %4685 = vmatprep.subr.mxu0 0.0
    %4686 = vmatpush1.msra.mxu0 0.0
    %4687 = vmatprep.subr.mxu0 0.0
    %4688 = vmatpush1.msra.mxu0 0.0
    %4689 = vmatprep.subr.mxu0 0.0
    %4690 = vmatpush1.msra.mxu0 0.0
    %4691 = vmatprep.subr.mxu0 0.0
    %4692 = vmatpush1.msra.mxu0 0.0
    %4693 = vmatprep.subr.mxu0 0.0
    %4694 = vmatpush1.msra.mxu0 0.0
    %4695 = vmatprep.subr.mxu0 0.0
    %4696 = vmatpush1.msra.mxu0 0.0
    %4697 = vmatprep.subr.mxu0 0.0
    %4698 = vmatpush1.msra.mxu0 0.0
    %4699 = vmatprep.mubr.f32.mxu0 0.0
    %4700 = vmatmul.mubr.f32.gmra.mrb[0].mxu0 %v4630
    %v4701 = vpop.f32.mrb[0].mxu0
    %v4702 = vadd.f32 %v4627, %v4701
    %v4703 = vpop.f32.mrb[0].mxu0
    %4704 = vmatprep.mubr.f32.mxu0 0.0
    %4705 = vmatmul.mubr.f32.gmra.mrb[0].mxu0 %v4633
    %v4706 = vpop.f32.mrb[0].mxu0
    %v4707 = vadd.f32 %v4627, %v4706
    %v4708 = vpop.f32.mrb[0].mxu0
    %4709 = vdwg.mxu0
    %v4710 = vsel %vm78, %v4702, 0.0
    %v4711 = vrot.slane %v4710, 4
    %v4712 = vadd.f32 %v4710, %v4711
    %v4713 = vrot.slane %v4712, 2
    %v4714 = vadd.f32 %v4712, %v4713
    %v4715 = vrot.slane %v4714, 1
    %v4716 = vadd.f32 %v4714, %v4715
    %v4717 = vsel %vm78, %v4707, 0.0
    %v4718 = vrot.slane %v4717, 4
    %v4719 = vadd.f32 %v4717, %v4718
    %v4720 = vrot.slane %v4719, 2
    %v4721 = vadd.f32 %v4719, %v4720
    %v4722 = vrot.slane %v4721, 1
    %v4723 = vadd.f32 %v4721, %v4722
    %v4724 = vmul.f32 %v4716, 0.125
    %v4725 = vmul.f32 %v4723, 0.125
    %v4728 = vsel %vm950, %v4195, %v4188
    %v4732 = vsel %vm950, %v4725, %v4724
    %4733 = vrot.lane.b32.xlu0 %v4732, 32
    %v4734 = vpop.permute.xlu0 %4733
    %v4738 = vsel %vm950, %v3921, %v3920
    %4739 = vrot.lane.b32.xlu0 %v4738, 64
    %v4740 = vpop.permute.xlu0 %4739
    %v4744 = vsel %vm950, %v3938, %v3937
    %4745 = vrot.lane.b32.xlu0 %v4744, 64
    %v4746 = vpop.permute.xlu0 %4745
    %v4748 = vsel %vm78, %v4728, %v4734
    %v4749 = vsel %vm384, %v4748, %v4740
    %v4750 = vsel %vm387, %v4749, %v4746
    %v4751 = vmax.f32 %v4750, 0.0
    %v4752 = vld [vmem:[%s17] sm:$0xff]
    %v4753 = vld [vmem:[%s17 + $0x8] sm:$0xff]
    %v4754 = vld [vmem:[%s17 + $0x10] sm:$0xff]
    %v4755 = vld [vmem:[%s17 + $0x18] sm:$0xff]
    %v4756 = vld [vmem:[%s17 + $0x20] sm:$0xff]
    %v4757 = vld [vmem:[%s17 + $0x28] sm:$0xff]
    %v4758 = vld [vmem:[%s17 + $0x30] sm:$0xff]
    %v4759 = vld [vmem:[%s17 + $0x38] sm:$0xff]
    %v4760 = vld [vmem:[%s17 + $0x40] sm:$0xff]
    %v4761 = vld [vmem:[%s17 + $0x48] sm:$0xff]
    %v4762 = vld [vmem:[%s17 + $0x50] sm:$0xff]
    %v4763 = vld [vmem:[%s17 + $0x58] sm:$0xff]
    %v4764 = vld [vmem:[%s17 + $0x60] sm:$0xff]
    %v4765 = vld [vmem:[%s17 + $0x68] sm:$0xff]
    %v4766 = vld [vmem:[%s17 + $0x70] sm:$0xff]
    %v4767 = vld [vmem:[%s17 + $0x78] sm:$0xff]
    %v4768 = vld [vmem:[%s18] sm:$0x1]
    %v4770 = vlaneseq
    %v4771 = vshrl.u32 %v4770, 7
    %v4772 = vsub.s32 0, %v4771
    %v4773 = vrot.slane %v4768, %v4772
    %4775 = vmatprep.subr.mxu0 0.0
    %4776 = vmatpush1.msra.mxu0 %v4752
    %4777 = vmatprep.subr.mxu0 0.0
    %4778 = vmatpush1.msra.mxu0 %v4753
    %4779 = vmatprep.subr.mxu0 0.0
    %4780 = vmatpush1.msra.mxu0 %v4754
    %4781 = vmatprep.subr.mxu0 0.0
    %4782 = vmatpush1.msra.mxu0 %v4755
    %4783 = vmatprep.subr.mxu0 0.0
    %4784 = vmatpush1.msra.mxu0 %v4756
    %4785 = vmatprep.subr.mxu0 0.0
    %4786 = vmatpush1.msra.mxu0 %v4757
    %4787 = vmatprep.subr.mxu0 0.0
    %4788 = vmatpush1.msra.mxu0 %v4758
    %4789 = vmatprep.subr.mxu0 0.0
    %4790 = vmatpush1.msra.mxu0 %v4759
    %4791 = vmatprep.subr.mxu0 0.0
    %4792 = vmatpush1.msra.mxu0 %v4760
    %4793 = vmatprep.subr.mxu0 0.0
    %4794 = vmatpush1.msra.mxu0 %v4761
    %4795 = vmatprep.subr.mxu0 0.0
    %4796 = vmatpush1.msra.mxu0 %v4762
    %4797 = vmatprep.subr.mxu0 0.0
    %4798 = vmatpush1.msra.mxu0 %v4763
    %4799 = vmatprep.subr.mxu0 0.0
    %4800 = vmatpush1.msra.mxu0 %v4764
    %4801 = vmatprep.subr.mxu0 0.0
    %4802 = vmatpush1.msra.mxu0 %v4765
    %4803 = vmatprep.subr.mxu0 0.0
    %4804 = vmatpush1.msra.mxu0 %v4766
    %4805 = vmatprep.subr.mxu0 0.0
    %4806 = vmatpush1.msra.mxu0 %v4767
    %4807 = vmatprep.subr.mxu0 0.0
    %4808 = vmatpush1.msra.mxu0 0.0
    %4809 = vmatprep.subr.mxu0 0.0
    %4810 = vmatpush1.msra.mxu0 0.0
    %4811 = vmatprep.subr.mxu0 0.0
    %4812 = vmatpush1.msra.mxu0 0.0
    %4813 = vmatprep.subr.mxu0 0.0
    %4814 = vmatpush1.msra.mxu0 0.0
    %4815 = vmatprep.subr.mxu0 0.0
    %4816 = vmatpush1.msra.mxu0 0.0
    %4817 = vmatprep.subr.mxu0 0.0
    %4818 = vmatpush1.msra.mxu0 0.0
    %4819 = vmatprep.subr.mxu0 0.0
    %4820 = vmatpush1.msra.mxu0 0.0
    %4821 = vmatprep.subr.mxu0 0.0
    %4822 = vmatpush1.msra.mxu0 0.0
    %4823 = vmatprep.subr.mxu0 0.0
    %4824 = vmatpush1.msra.mxu0 0.0
    %4825 = vmatprep.subr.mxu0 0.0
    %4826 = vmatpush1.msra.mxu0 0.0
    %4827 = vmatprep.subr.mxu0 0.0
    %4828 = vmatpush1.msra.mxu0 0.0
    %4829 = vmatprep.subr.mxu0 0.0
    %4830 = vmatpush1.msra.mxu0 0.0
    %4831 = vmatprep.subr.mxu0 0.0
    %4832 = vmatpush1.msra.mxu0 0.0
    %4833 = vmatprep.subr.mxu0 0.0
    %4834 = vmatpush1.msra.mxu0 0.0
    %4835 = vmatprep.subr.mxu0 0.0
    %4836 = vmatpush1.msra.mxu0 0.0
    %4837 = vmatprep.subr.mxu0 0.0
    %4838 = vmatpush1.msra.mxu0 0.0
    %4839 = vmatprep.mubr.f32.mxu0 0.0
    %4840 = vmatmul.mubr.f32.gmra.mrb[0].mxu0 %v4751
    %v4841 = vpop.f32.mrb[0].mxu0
    %v4842 = vadd.f32 %v4773, %v4841
    %v4843 = vpop.f32.mrb[0].mxu0
    %4844 = vdwg.mxu0
    %v4845 = vxor.u32 %v4842, 2147483648
    %v4846 = vmul.f32 %v4845, 1.442695
    %v4847 = vpow.pop %v4846
    %v4848 = vadd.f32 %v4847, 1.0
    %v4849 = vrcp.pop %v4848
    %v4850 = vmul.f32 1.0, %v4849
    %vm4851 = vcmask 17408
    %4852 = vst.msk [vmem:[#allocation3] sm:$0x3] %vm4851, %v4850
    // Predicated region
    $region78: #{tpu_custom_call.1} parent=1 // pred_check
      _
    $region79: #{tpu_custom_call.1} parent=1 // pred_check_branch
      %4854 = sbr.rel (0) target = $region81
    $region80: #{tpu_custom_call.1} parent=1 // pred_region
      %s4856 = ssub.s32 32, 32
      %4857 = vsyncadd [#allocation4], %s4856
      %s4859 = sshll.u32 [#allocation3], 4
      %s4860 = int_to_ptr.vmem [resolvable:$true] %s4859
      %4862 = dma.vmem_to_hbm [thread:$0]  %s4860, 32, %s19, [#allocation4]
    $region81: #{tpu_custom_call.1} parent=1 // pred_fallthru
      _
    // Predicated region
    $region82: #{tpu_custom_call.1} parent=1 // pred_check
      _
    $region83: #{tpu_custom_call.1} parent=1 // pred_check_branch
      %4864 = sbr.rel (0) target = $region85
    $region84: #{tpu_custom_call.1} parent=1 // pred_region
      %4865 = dma.done [#allocation4], 32
    $region85: #{tpu_custom_call.1} parent=1 // pred_fallthru
      _
    %4866 = vsyncpa [#allocation4], 1

</llo_original>
